<compile_context>
chip_gen: v7x
topology: tpu7x:2x2x1
jax: 0.10.0
libtpu: 0.0.40
codegen_flags: <defaults>
</compile_context>

<pallas_src>
import functools

import jax
import jax.numpy as jnp
from jax.experimental import pallas as pl
from jax.experimental.pallas import tpu as pltpu

LANE = 128


def _round_up(n, m):
    return ((n + m - 1) // m) * m


def _pick_tile(n, cap=256):
    """L-tile size: full extent if small, else a multiple-of-16 divisor <= cap."""
    if n <= cap:
        return n
    t = cap - cap % 16
    while t >= 16:
        if n % t == 0:
            return t
        t -= 16
    # TODO(synk): ragged / prime L would need masked tiles; fall back to full L.
    return n


# ------------------------------- Pallas kernels ------------------------------

def _conv_s1_kernel(*refs, K, tlo, relu, with_res, maxpool, l_valid):
    """Stride-1 conv (taps unrolled on MXU) + BN (+residual) (+ReLU) (+3-maxpool)."""
    xw_ref, w_ref, scale_ref, shift_ref = refs[:4]
    res_ref = refs[4] if with_res else None
    o_ref = refs[-1]
    ext = tlo + 2 if maxpool else tlo           # +2 rows = maxpool halo
    cout = o_ref.shape[-1]
    acc = jnp.zeros((ext, cout), jnp.float32)
    for k in range(K):                          # unrolled taps -> K MXU pushes
        xs = xw_ref[0, 0, pl.ds(k, ext), :]
        acc = acc + jnp.dot(xs, w_ref[k], preferred_element_type=jnp.float32)
    y = acc * scale_ref[...] + shift_ref[...]   # folded BatchNorm (f32 epilogue)
    if with_res:
        y = y + res_ref[0].astype(jnp.float32)
    if relu:
        y = jnp.maximum(y, 0.0)
    if maxpool:
        # Rows outside [0, L) contribute 0, equivalent to -inf pool padding
        # because all in-range post-ReLU values are >= 0.
        i = pl.program_id(1)
        row = i * tlo - 1 + jax.lax.broadcasted_iota(jnp.int32, (ext, 1), 0)
        y = jnp.where((row >= 0) & (row < l_valid), y, 0.0)
        y = jnp.maximum(jnp.maximum(y[0:tlo, :], y[1:tlo + 1, :]), y[2:tlo + 2, :])
    o_ref[0] = y.astype(o_ref.dtype)


def _conv_s2_down_kernel(xw_ref, w_ref, scale_ref, shift_ref, wd_ref, bd_ref,
                         o_ref, id_ref, *, K, tlo):
    """Stride-2 k=3 conv + BN + ReLU, with the 1x1 stride-2 downscale conv fused
    (it reuses the tap-1 slice of the same de-strided window)."""
    cout = o_ref.shape[-1]
    acc = jnp.zeros((tlo, cout), jnp.float32)
    for k in range(K):
        xs = xw_ref[0, 0, pl.ds(k * tlo, tlo), :]
        acc = acc + jnp.dot(xs, w_ref[k], preferred_element_type=jnp.float32)
    y = jnp.maximum(acc * scale_ref[...] + shift_ref[...], 0.0)
    o_ref[0] = y.astype(o_ref.dtype)
    xc = xw_ref[0, 0, pl.ds(tlo, tlo), :]       # tap 1 == x[2j]
    ident = jnp.dot(xc, wd_ref[...], preferred_element_type=jnp.float32) + bd_ref[...]
    id_ref[0] = ident.astype(id_ref.dtype)


def _avgpool_kernel(x_ref, o_ref, *, inv_l):
    """AdaptiveAvgPool1d(1): tiled running mean over the L grid axis."""
    @pl.when(pl.program_id(1) == 0)
    def _():
        o_ref[...] = jnp.zeros_like(o_ref)
    s = jnp.sum(x_ref[0].astype(jnp.float32), axis=0, keepdims=True) * inv_l
    o_ref[0] = o_ref[0] + s


# ---------------------- window (tile + halo) builders (XLA) ------------------

def _windows_s1(x, front_pad, w_len, tlo, n_tiles):
    """(B,L,C) -> (B,n_tiles,w_len,C); window i row t = zero-padded x[i*tlo + t - front_pad]."""
    B, L, C = x.shape
    need = (n_tiles - 1) * tlo + w_len
    back = max(need - (L + front_pad), 0)
    xp = jnp.pad(x, ((0, 0), (front_pad, back), (0, 0)))
    idx = (jnp.arange(n_tiles) * tlo)[:, None] + jnp.arange(w_len)[None, :]
    return xp[:, idx, :]


def _windows_s2_taps(x, K, pad, tlo, n_tiles):
    """Stride-2 windows, tap-major: (B,n_tiles,K*tlo,C); row k*tlo+t = x[2*(i*tlo+t)-pad+k]."""
    B, L, C = x.shape
    Lout = n_tiles * tlo
    need = 2 * (Lout - 1) + K
    back = max(need - (L + pad), 0)
    xp = jnp.pad(x, ((0, 0), (pad, back), (0, 0)))
    u = (2 * (jnp.arange(n_tiles)[:, None, None] * tlo + jnp.arange(tlo)[None, None, :])
         + jnp.arange(K)[None, :, None])        # (n_tiles, K, tlo)
    return xp[:, u, :].reshape(B, n_tiles, K * tlo, C)


# ------------------------------ kernel wrappers -------------------------------

def conv_s1_bn_act(x, w, scale, shift, *, K, pad, relu=True, residual=None,
                   fuse_maxpool=False):
    x = x.astype(jnp.bfloat16)
    B, L, Cin = x.shape
    Cout = w.shape[-1]
    Lout = L                                     # 'same' conv, stride 1
    tlo = _pick_tile(Lout)
    n_tiles = Lout // tlo
    ext = 2 if fuse_maxpool else 0
    front = pad + (1 if fuse_maxpool else 0)
    w_len = tlo + ext + K - 1
    xw = _windows_s1(x, front, w_len, tlo, n_tiles)

    inputs = [xw, w, scale.reshape(1, Cout).astype(jnp.float32),
              shift.reshape(1, Cout).astype(jnp.float32)]
    in_specs = [
        pl.BlockSpec((1, 1, w_len, Cin), lambda b, i: (b, i, 0, 0)),
        pl.BlockSpec((K, Cin, Cout), lambda b, i: (0, 0, 0)),
        pl.BlockSpec((1, Cout), lambda b, i: (0, 0)),
        pl.BlockSpec((1, Cout), lambda b, i: (0, 0)),
    ]
    if residual is not None:
        inputs.append(residual.astype(jnp.bfloat16))
        in_specs.append(pl.BlockSpec((1, tlo, Cout), lambda b, i: (b, i, 0)))

    kernel = functools.partial(_conv_s1_kernel, K=K, tlo=tlo, relu=relu,
                               with_res=residual is not None,
                               maxpool=fuse_maxpool, l_valid=Lout)
    return pl.pallas_call(
        kernel,
        grid=(B, n_tiles),
        in_specs=in_specs,
        out_specs=pl.BlockSpec((1, tlo, Cout), lambda b, i: (b, i, 0)),
        out_shape=jax.ShapeDtypeStruct((B, Lout, Cout), jnp.bfloat16),
        compiler_params=pltpu.CompilerParams(
            dimension_semantics=("parallel", "parallel")),
        cost_estimate=pl.CostEstimate(
            flops=int(2 * B * Lout * K * Cin * Cout),
            transcendentals=0,
            bytes_accessed=int(xw.size * 2 + w.size * 2 + B * Lout * Cout * 2)),
    )(*inputs)


def conv_s2_down(x, w, scale, shift, wd, bd):
    """Block entry: conv(k=3, stride=2, pad=1)+BN+ReLU fused with the 1x1 stride-2
    downscale conv (bias, no BN).  Returns (out, identity)."""
    x = x.astype(jnp.bfloat16)
    B, L, Cin = x.shape
    K, pad = 3, 1
    Cout = w.shape[-1]
    Lout = (L + 2 * pad - K) // 2 + 1
    tlo = _pick_tile(Lout)
    n_tiles = Lout // tlo
    xw = _windows_s2_taps(x, K, pad, tlo, n_tiles)

    kernel = functools.partial(_conv_s2_down_kernel, K=K, tlo=tlo)
    out, ident = pl.pallas_call(
        kernel,
        grid=(B, n_tiles),
        in_specs=[
            pl.BlockSpec((1, 1, K * tlo, Cin), lambda b, i: (b, i, 0, 0)),
            pl.BlockSpec((K, Cin, Cout), lambda b, i: (0, 0, 0)),
            pl.BlockSpec((1, Cout), lambda b, i: (0, 0)),
            pl.BlockSpec((1, Cout), lambda b, i: (0, 0)),
            pl.BlockSpec((Cin, Cout), lambda b, i: (0, 0)),
            pl.BlockSpec((1, Cout), lambda b, i: (0, 0)),
        ],
        out_specs=(pl.BlockSpec((1, tlo, Cout), lambda b, i: (b, i, 0)),
                   pl.BlockSpec((1, tlo, Cout), lambda b, i: (b, i, 0))),
        out_shape=(jax.ShapeDtypeStruct((B, Lout, Cout), jnp.bfloat16),
                   jax.ShapeDtypeStruct((B, Lout, Cout), jnp.bfloat16)),
        compiler_params=pltpu.CompilerParams(
            dimension_semantics=("parallel", "parallel")),
        cost_estimate=pl.CostEstimate(
            flops=int(2 * B * Lout * (K + 1) * Cin * Cout),
            transcendentals=0,
            bytes_accessed=int(xw.size * 2 + (w.size + wd.size) * 2
                               + 2 * B * Lout * Cout * 2)),
    )(xw, w, scale.reshape(1, Cout).astype(jnp.float32),
      shift.reshape(1, Cout).astype(jnp.float32),
      wd, bd.reshape(1, Cout).astype(jnp.float32))
    return out, ident


def avgpool_to_1(x):
    B, L, C = x.shape
    tl = _pick_tile(L)
    n_tiles = L // tl
    kernel = functools.partial(_avgpool_kernel, inv_l=1.0 / L)
    out = pl.pallas_call(
        kernel,
        grid=(B, n_tiles),
        in_specs=[pl.BlockSpec((1, tl, C), lambda b, i: (b, i, 0))],
        out_specs=pl.BlockSpec((1, 8, C), lambda b, i: (b, 0, 0)),
        out_shape=jax.ShapeDtypeStruct((B, 8, C), jnp.float32),
        compiler_params=pltpu.CompilerParams(
            dimension_semantics=("parallel", "arbitrary")),
    )(x.astype(jnp.bfloat16))
    return out[:, 0, :]


# ------------------------------ model definition ------------------------------

def _bn_fold(gamma, beta, running_mean, running_var, eps=1e-5):
    scale = gamma / jnp.sqrt(running_var + eps)
    shift = beta - running_mean * scale
    return scale, shift


def init_params(key, vocab_size, emb_dim, num_layer, channels, ini_channel):
    """True (unpadded, f32) parameters; conv weights laid out as (K, Cin, Cout)."""
    keys = iter(jax.random.split(key, 256))
    p = {}
    embed = 0.1 * jax.random.normal(next(keys), (vocab_size, emb_dim), jnp.float32)
    p["embed"] = embed.at[0].set(0.0)            # padding_idx=0
    p["conv1_w"] = 0.1 * jax.random.normal(next(keys), (5, emb_dim, ini_channel),
                                           jnp.float32)
    g = 1.0 + 0.05 * jax.random.normal(next(keys), (ini_channel,), jnp.float32)
    b = 0.05 * jax.random.normal(next(keys), (ini_channel,), jnp.float32)
    p["bn1_scale"], p["bn1_shift"] = _bn_fold(g, b, jnp.zeros(ini_channel),
                                              jnp.ones(ini_channel))
    blocks = []
    curr = ini_channel
    for channel in channels:
        for layer_idx in range(num_layer):
            down = layer_idx == 0
            in_ch = curr if down else channel
            blk = {}
            blk["w1"] = 0.1 * jax.random.normal(next(keys), (3, in_ch, channel),
                                                jnp.float32)
            g1 = 1.0 + 0.05 * jax.random.normal(next(keys), (channel,), jnp.float32)
            b1 = 0.05 * jax.random.normal(next(keys), (channel,), jnp.float32)
            blk["scale1"], blk["shift1"] = _bn_fold(g1, b1, jnp.zeros(channel),
                                                    jnp.ones(channel))
            blk["w2"] = 0.1 * jax.random.normal(next(keys), (3, channel, channel),
                                                jnp.float32)
            g2 = 1.0 + 0.05 * jax.random.normal(next(keys), (channel,), jnp.float32)
            b2 = 0.05 * jax.random.normal(next(keys), (channel,), jnp.float32)
            blk["scale2"], blk["shift2"] = _bn_fold(g2, b2, jnp.zeros(channel),
                                                    jnp.ones(channel))
            if down:
                blk["down_w"] = 0.1 * jax.random.normal(next(keys), (in_ch, channel),
                                                        jnp.float32)
                blk["down_b"] = 0.05 * jax.random.normal(next(keys), (channel,),
                                                         jnp.float32)
            else:
                blk["down_w"], blk["down_b"] = None, None
            blocks.append(blk)
        curr = channel
    p["blocks"] = blocks
    return p


def pad_params(p):
    """Zero-pad every channel axis to a multiple of 128 (lane-dense kernels) and
    cast matmul weights to bf16.  Padded channels stay exactly 0 end-to-end
    (scale/shift/bias padded with zeros)."""
    def padc(a, axes, dtype=None):
        pads = [(0, 0)] * a.ndim
        for ax in axes:
            pads[ax] = (0, _round_up(a.shape[ax], LANE) - a.shape[ax])
        a = jnp.pad(a, pads)
        return a.astype(dtype) if dtype is not None else a

    q = {"embed": padc(p["embed"], [1]),
         "conv1_w": padc(p["conv1_w"], [1, 2], jnp.bfloat16),
         "bn1_scale": padc(p["bn1_scale"], [0]),
         "bn1_shift": padc(p["bn1_shift"], [0]),
         "blocks": []}
    for blk in p["blocks"]:
        nb = {"w1": padc(blk["w1"], [1, 2], jnp.bfloat16),
              "scale1": padc(blk["scale1"], [0]),
              "shift1": padc(blk["shift1"], [0]),
              "w2": padc(blk["w2"], [1, 2], jnp.bfloat16),
              "scale2": padc(blk["scale2"], [0]),
              "shift2": padc(blk["shift2"], [0])}
        if blk["down_w"] is not None:
            nb["down_w"] = padc(blk["down_w"], [0, 1], jnp.bfloat16)
            nb["down_b"] = padc(blk["down_b"], [0])
        else:
            nb["down_w"], nb["down_b"] = None, None
        q["blocks"].append(nb)
    return q


def block_forward(x, blk):
    if blk["down_w"] is not None:
        out1, identity = conv_s2_down(x, blk["w1"], blk["scale1"], blk["shift1"],
                                      blk["down_w"], blk["down_b"])
    else:
        identity = x
        out1 = conv_s1_bn_act(x, blk["w1"], blk["scale1"], blk["shift1"],
                              K=3, pad=1, relu=True)
    # Dropout: identity in eval mode.
    return conv_s1_bn_act(out1, blk["w2"], blk["scale2"], blk["shift2"],
                          K=3, pad=1, relu=True, residual=identity)


def cnn_1d_forward(params, tokens, *, out_channels):
    x = params["embed"][tokens]                  # (B, L, Ep) gather (XLA glue)
    # conv1(k=5,'same') + BN + ReLU + MaxPool1d(3,1,1) fused in one kernel.
    x = conv_s1_bn_act(x, params["conv1_w"], params["bn1_scale"],
                       params["bn1_shift"], K=5, pad=2, relu=True,
                       fuse_maxpool=True)
    for blk in params["blocks"]:
        x = block_forward(x, blk)
    pooled = avgpool_to_1(x)                     # (B, Cp) f32
    return pooled[:, :out_channels]


# ----------------------------- pure-JAX reference -----------------------------

def _ref_conv1d(x, w, stride, pad):
    B, L, _ = x.shape
    K = w.shape[0]
    xp = jnp.pad(x, ((0, 0), (pad, pad), (0, 0)))
    Lout = (L + 2 * pad - K) // stride + 1
    out = jnp.zeros((B, Lout, w.shape[-1]), jnp.float32)
    for k in range(K):
        out = out + xp[:, k:k + stride * Lout:stride, :] @ w[k]
    return out


def _ref_maxpool3(x):
    neg = jnp.full_like(x[:, :1, :], -jnp.inf)
    xp = jnp.concatenate([neg, x, neg], axis=1)
    return jnp.maximum(jnp.maximum(xp[:, :-2, :], xp[:, 1:-1, :]), xp[:, 2:, :])


def ref_forward(p, tokens):
    x = p["embed"][tokens]
    y = _ref_conv1d(x, p["conv1_w"], 1, 2) * p["bn1_scale"] + p["bn1_shift"]
    y = _ref_maxpool3(jnp.maximum(y, 0.0))
    for blk in p["blocks"]:
        if blk["down_w"] is not None:
            ident = _ref_conv1d(y, blk["down_w"][None], 2, 0) + blk["down_b"]
            stride = 2
        else:
            ident, stride = y, 1
        o = jnp.maximum(_ref_conv1d(y, blk["w1"], stride, 1) * blk["scale1"]
                        + blk["shift1"], 0.0)
        y = jnp.maximum(_ref_conv1d(o, blk["w2"], 1, 1) * blk["scale2"]
                        + blk["shift2"] + ident, 0.0)
    return y.mean(axis=1)


# ------------------------------------ main ------------------------------------

if __name__ == "__main__":
    vocab_size, emb_dim = 16, 8
    num_layer, channels, ini_channel = 2, [16, 32], 8
    B, L = 2, 16

    key = jax.random.PRNGKey(0)
    k_param, k_tok = jax.random.split(key)
    params = init_params(k_param, vocab_size, emb_dim, num_layer, channels,
                         ini_channel)
    params_padded = pad_params(params)
    tokens = jax.random.randint(k_tok, (B, L), 0, vocab_size, dtype=jnp.int32)

    fwd = jax.jit(functools.partial(cnn_1d_forward, out_channels=channels[-1]))
    out = jax.block_until_ready(fwd(params_padded, tokens))

    assert out.shape == (B, channels[-1]), out.shape
    assert bool(jnp.all(jnp.isfinite(out)))

    ref = ref_forward(params, tokens)
    max_err = float(jnp.max(jnp.abs(out.astype(jnp.float32) - ref)))
    assert max_err < 5e-2, f"mismatch vs reference: max abs err {max_err}"
    print("KERNEL_OK")
</pallas_src>

<mosaic_0001>
module attributes {stable_mosaic.version = 11 : i64} {
  func.func @_conv_s1_kernel(%arg0: i32, %arg1: i32, %arg2: memref<1x1x22x128xbf16, #tpu.memory_space<vmem>>, %arg3: memref<5x128x128xbf16, #tpu.memory_space<vmem>>, %arg4: memref<1x128xf32, #tpu.memory_space<vmem>>, %arg5: memref<1x128xf32, #tpu.memory_space<vmem>>, %arg6: memref<1x16x128xbf16, #tpu.memory_space<vmem>>) attributes {dimension_semantics = [#tpu.dimension_semantics<parallel>, #tpu.dimension_semantics<parallel>], iteration_bounds = array<i64: 2, 1>, scalar_prefetch = 0 : i64, scratch_operands = 0 : i64, tpu.core_type = #tpu.core_type<tc>, window_params = [{transform_indices = @transform_0, window_bounds = array<i64: 1, 1, 22, 128>}, {pipeline_mode = #tpu.pipeline_mode<synchronous>, transform_indices = @transform_1, window_bounds = array<i64: 5, 128, 128>}, {pipeline_mode = #tpu.pipeline_mode<synchronous>, transform_indices = @transform_2, window_bounds = array<i64: 1, 128>}, {pipeline_mode = #tpu.pipeline_mode<synchronous>, transform_indices = @transform_3, window_bounds = array<i64: 1, 128>}, {transform_indices = @transform_4, window_bounds = array<i64: 1, 16, 128>}]} {
    %cst = arith.constant 0.000000e+00 : f32
    %0 = vector.broadcast %cst : f32 to vector<18x128xf32>
    %c0 = arith.constant 0 : index
    %c0_0 = arith.constant 0 : index
    %c0_1 = arith.constant 0 : index
    %c0_2 = arith.constant 0 : index
    %1 = vector.load %arg2[%c0, %c0_0, %c0_1, %c0_2] : memref<1x1x22x128xbf16, #tpu.memory_space<vmem>>, vector<1x1x18x128xbf16>
    %2 = vector.shape_cast %1 : vector<1x1x18x128xbf16> to vector<18x128xbf16>
    %c0_3 = arith.constant 0 : index
    %c0_4 = arith.constant 0 : index
    %c0_5 = arith.constant 0 : index
    %3 = vector.load %arg3[%c0_3, %c0_4, %c0_5] : memref<5x128x128xbf16, #tpu.memory_space<vmem>>, vector<1x128x128xbf16>
    %4 = vector.shape_cast %3 : vector<1x128x128xbf16> to vector<128x128xbf16>
    %cst_6 = arith.constant dense<0.000000e+00> : vector<18x128xf32>
    %5 = tpu.matmul %2, %4, %cst_6 {dimension_numbers = #tpu.dot_dimension_numbers<[1], [0], [0], [1], [0, 0, 1, 1], [], []>} : vector<18x128xbf16>, vector<128x128xbf16>, vector<18x128xf32> -> vector<18x128xf32>
    %6 = arith.addf %0, %5 : vector<18x128xf32>
    %c0_7 = arith.constant 0 : index
    %c0_8 = arith.constant 0 : index
    %c1 = arith.constant 1 : index
    %c0_9 = arith.constant 0 : index
    %7 = vector.load %arg2[%c0_7, %c0_8, %c1, %c0_9] : memref<1x1x22x128xbf16, #tpu.memory_space<vmem>>, vector<1x1x18x128xbf16>
    %8 = vector.shape_cast %7 : vector<1x1x18x128xbf16> to vector<18x128xbf16>
    %c1_10 = arith.constant 1 : index
    %c0_11 = arith.constant 0 : index
    %c0_12 = arith.constant 0 : index
    %9 = vector.load %arg3[%c1_10, %c0_11, %c0_12] : memref<5x128x128xbf16, #tpu.memory_space<vmem>>, vector<1x128x128xbf16>
    %10 = vector.shape_cast %9 : vector<1x128x128xbf16> to vector<128x128xbf16>
    %cst_13 = arith.constant dense<0.000000e+00> : vector<18x128xf32>
    %11 = tpu.matmul %8, %10, %cst_13 {dimension_numbers = #tpu.dot_dimension_numbers<[1], [0], [0], [1], [0, 0, 1, 1], [], []>} : vector<18x128xbf16>, vector<128x128xbf16>, vector<18x128xf32> -> vector<18x128xf32>
    %12 = arith.addf %6, %11 : vector<18x128xf32>
    %c0_14 = arith.constant 0 : index
    %c0_15 = arith.constant 0 : index
    %c2 = arith.constant 2 : index
    %c0_16 = arith.constant 0 : index
    %13 = vector.load %arg2[%c0_14, %c0_15, %c2, %c0_16] : memref<1x1x22x128xbf16, #tpu.memory_space<vmem>>, vector<1x1x18x128xbf16>
    %14 = vector.shape_cast %13 : vector<1x1x18x128xbf16> to vector<18x128xbf16>
    %c2_17 = arith.constant 2 : index
    %c0_18 = arith.constant 0 : index
    %c0_19 = arith.constant 0 : index
    %15 = vector.load %arg3[%c2_17, %c0_18, %c0_19] : memref<5x128x128xbf16, #tpu.memory_space<vmem>>, vector<1x128x128xbf16>
    %16 = vector.shape_cast %15 : vector<1x128x128xbf16> to vector<128x128xbf16>
    %cst_20 = arith.constant dense<0.000000e+00> : vector<18x128xf32>
    %17 = tpu.matmul %14, %16, %cst_20 {dimension_numbers = #tpu.dot_dimension_numbers<[1], [0], [0], [1], [0, 0, 1, 1], [], []>} : vector<18x128xbf16>, vector<128x128xbf16>, vector<18x128xf32> -> vector<18x128xf32>
    %18 = arith.addf %12, %17 : vector<18x128xf32>
    %c0_21 = arith.constant 0 : index
    %c0_22 = arith.constant 0 : index
    %c3 = arith.constant 3 : index
    %c0_23 = arith.constant 0 : index
    %19 = vector.load %arg2[%c0_21, %c0_22, %c3, %c0_23] : memref<1x1x22x128xbf16, #tpu.memory_space<vmem>>, vector<1x1x18x128xbf16>
    %20 = vector.shape_cast %19 : vector<1x1x18x128xbf16> to vector<18x128xbf16>
    %c3_24 = arith.constant 3 : index
    %c0_25 = arith.constant 0 : index
    %c0_26 = arith.constant 0 : index
    %21 = vector.load %arg3[%c3_24, %c0_25, %c0_26] : memref<5x128x128xbf16, #tpu.memory_space<vmem>>, vector<1x128x128xbf16>
    %22 = vector.shape_cast %21 : vector<1x128x128xbf16> to vector<128x128xbf16>
    %cst_27 = arith.constant dense<0.000000e+00> : vector<18x128xf32>
    %23 = tpu.matmul %20, %22, %cst_27 {dimension_numbers = #tpu.dot_dimension_numbers<[1], [0], [0], [1], [0, 0, 1, 1], [], []>} : vector<18x128xbf16>, vector<128x128xbf16>, vector<18x128xf32> -> vector<18x128xf32>
    %24 = arith.addf %18, %23 : vector<18x128xf32>
    %c0_28 = arith.constant 0 : index
    %c0_29 = arith.constant 0 : index
    %c4 = arith.constant 4 : index
    %c0_30 = arith.constant 0 : index
    %25 = vector.load %arg2[%c0_28, %c0_29, %c4, %c0_30] : memref<1x1x22x128xbf16, #tpu.memory_space<vmem>>, vector<1x1x18x128xbf16>
    %26 = vector.shape_cast %25 : vector<1x1x18x128xbf16> to vector<18x128xbf16>
    %c4_31 = arith.constant 4 : index
    %c0_32 = arith.constant 0 : index
    %c0_33 = arith.constant 0 : index
    %27 = vector.load %arg3[%c4_31, %c0_32, %c0_33] : memref<5x128x128xbf16, #tpu.memory_space<vmem>>, vector<1x128x128xbf16>
    %28 = vector.shape_cast %27 : vector<1x128x128xbf16> to vector<128x128xbf16>
    %cst_34 = arith.constant dense<0.000000e+00> : vector<18x128xf32>
    %29 = tpu.matmul %26, %28, %cst_34 {dimension_numbers = #tpu.dot_dimension_numbers<[1], [0], [0], [1], [0, 0, 1, 1], [], []>} : vector<18x128xbf16>, vector<128x128xbf16>, vector<18x128xf32> -> vector<18x128xf32>
    %30 = arith.addf %24, %29 : vector<18x128xf32>
    %c0_35 = arith.constant 0 : index
    %c0_36 = arith.constant 0 : index
    %31 = vector.load %arg4[%c0_35, %c0_36] : memref<1x128xf32, #tpu.memory_space<vmem>>, vector<1x128xf32>
    %32 = vector.broadcast %31 : vector<1x128xf32> to vector<18x128xf32>
    %33 = arith.mulf %30, %32 : vector<18x128xf32>
    %c0_37 = arith.constant 0 : index
    %c0_38 = arith.constant 0 : index
    %34 = vector.load %arg5[%c0_37, %c0_38] : memref<1x128xf32, #tpu.memory_space<vmem>>, vector<1x128xf32>
    %35 = vector.broadcast %34 : vector<1x128xf32> to vector<18x128xf32>
    %36 = arith.addf %33, %35 : vector<18x128xf32>
    %cst_39 = arith.constant 0.000000e+00 : f32
    %37 = vector.broadcast %cst_39 : f32 to vector<18x128xf32>
    %38 = arith.maximumf %36, %37 : vector<18x128xf32>
    %c16_i32 = arith.constant 16 : i32
    %39 = arith.muli %arg1, %c16_i32 : i32
    %c1_i32 = arith.constant 1 : i32
    %40 = arith.subi %39, %c1_i32 : i32
    %41 = tpu.iota {dimensions = array<i32: 0>} : vector<18x1xi32>
    %42 = vector.broadcast %40 : i32 to vector<18x1xi32>
    %43 = arith.addi %42, %41 : vector<18x1xi32>
    %c0_i32 = arith.constant 0 : i32
    %44 = vector.broadcast %c0_i32 : i32 to vector<18x1xi32>
    %45 = arith.cmpi sge, %43, %44 : vector<18x1xi32>
    %c16_i32_40 = arith.constant 16 : i32
    %46 = vector.broadcast %c16_i32_40 : i32 to vector<18x1xi32>
    %47 = arith.cmpi slt, %43, %46 : vector<18x1xi32>
    %48 = arith.andi %45, %47 : vector<18x1xi1>
    %cst_41 = arith.constant 0.000000e+00 : f32
    %49 = vector.shape_cast %48 : vector<18x1xi1> to vector<18x1xi1>
    %50 = vector.broadcast %49 : vector<18x1xi1> to vector<18x128xi1>
    %51 = vector.broadcast %cst_41 : f32 to vector<18x128xf32>
    %52 = arith.select %50, %38, %51 : vector<18x128xi1>, vector<18x128xf32>
    %53 = vector.extract_strided_slice %52 {offsets = [0, 0], sizes = [16, 128], strides = [1, 1]} : vector<18x128xf32> to vector<16x128xf32>
    %54 = vector.extract_strided_slice %52 {offsets = [1, 0], sizes = [16, 128], strides = [1, 1]} : vector<18x128xf32> to vector<16x128xf32>
    %55 = arith.maximumf %53, %54 : vector<16x128xf32>
    %56 = vector.extract_strided_slice %52 {offsets = [2, 0], sizes = [16, 128], strides = [1, 1]} : vector<18x128xf32> to vector<16x128xf32>
    %57 = arith.maximumf %55, %56 : vector<16x128xf32>
    %58 = arith.truncf %57 : vector<16x128xf32> to vector<16x128xbf16>
    %c0_42 = arith.constant 0 : index
    %c0_43 = arith.constant 0 : index
    %c0_44 = arith.constant 0 : index
    %59 = vector.load %arg6[%c0_42, %c0_43, %c0_44] : memref<1x16x128xbf16, #tpu.memory_space<vmem>>, vector<1x16x128xbf16>
    %60 = vector.shape_cast %59 : vector<1x16x128xbf16> to vector<16x128xbf16>
    %61 = vector.shape_cast %58 : vector<16x128xbf16> to vector<1x16x128xbf16>
    tpu.vector_store %arg6[%c0_42, %c0_43, %c0_44], %61 {strides = array<i32>} : memref<1x16x128xbf16, #tpu.memory_space<vmem>>, vector<1x16x128xbf16>,
    return
  }
  func.func @transform_0(%arg0: i32, %arg1: i32) -> (i32, i32, i32, i32) {
    %c0_i32 = arith.constant 0 : i32
    %c0_i32_0 = arith.constant 0 : i32
    %c0_i32_1 = arith.constant 0 : i32
    return %arg0, %arg1, %c0_i32, %c0_i32_0 : i32, i32, i32, i32
  }
  func.func @transform_1(%arg0: i32, %arg1: i32) -> (i32, i32, i32) {
    %c0_i32 = arith.constant 0 : i32
    %c0_i32_0 = arith.constant 0 : i32
    %c0_i32_1 = arith.constant 0 : i32
    %c0_i32_2 = arith.constant 0 : i32
    return %c0_i32, %c0_i32_0, %c0_i32_1 : i32, i32, i32
  }
  func.func @transform_2(%arg0: i32, %arg1: i32) -> (i32, i32) {
    %c0_i32 = arith.constant 0 : i32
    %c0_i32_0 = arith.constant 0 : i32
    %c0_i32_1 = arith.constant 0 : i32
    return %c0_i32, %c0_i32_0 : i32, i32
  }
  func.func @transform_3(%arg0: i32, %arg1: i32) -> (i32, i32) {
    %c0_i32 = arith.constant 0 : i32
    %c0_i32_0 = arith.constant 0 : i32
    %c0_i32_1 = arith.constant 0 : i32
    return %c0_i32, %c0_i32_0 : i32, i32
  }
  func.func @transform_4(%arg0: i32, %arg1: i32) -> (i32, i32, i32) {
    %c0_i32 = arith.constant 0 : i32
    %c0_i32_0 = arith.constant 0 : i32
    return %arg0, %arg1, %c0_i32 : i32, i32, i32
  }
}

module attributes {stable_mosaic.version = 11 : i64} {
  func.func @_conv_s2_down_kernel(%arg0: i32, %arg1: i32, %arg2: memref<1x1x24x128xbf16, #tpu.memory_space<vmem>>, %arg3: memref<3x128x128xbf16, #tpu.memory_space<vmem>>, %arg4: memref<1x128xf32, #tpu.memory_space<vmem>>, %arg5: memref<1x128xf32, #tpu.memory_space<vmem>>, %arg6: memref<128x128xbf16, #tpu.memory_space<vmem>>, %arg7: memref<1x128xf32, #tpu.memory_space<vmem>>, %arg8: memref<1x8x128xbf16, #tpu.memory_space<vmem>>, %arg9: memref<1x8x128xbf16, #tpu.memory_space<vmem>>) attributes {dimension_semantics = [#tpu.dimension_semantics<parallel>, #tpu.dimension_semantics<parallel>], iteration_bounds = array<i64: 2, 1>, scalar_prefetch = 0 : i64, scratch_operands = 0 : i64, tpu.core_type = #tpu.core_type<tc>, window_params = [{transform_indices = @transform_0, window_bounds = array<i64: 1, 1, 24, 128>}, {pipeline_mode = #tpu.pipeline_mode<synchronous>, transform_indices = @transform_1, window_bounds = array<i64: 3, 128, 128>}, {pipeline_mode = #tpu.pipeline_mode<synchronous>, transform_indices = @transform_2, window_bounds = array<i64: 1, 128>}, {pipeline_mode = #tpu.pipeline_mode<synchronous>, transform_indices = @transform_3, window_bounds = array<i64: 1, 128>}, {pipeline_mode = #tpu.pipeline_mode<synchronous>, transform_indices = @transform_4, window_bounds = array<i64: 128, 128>}, {pipeline_mode = #tpu.pipeline_mode<synchronous>, transform_indices = @transform_5, window_bounds = array<i64: 1, 128>}, {transform_indices = @transform_6, window_bounds = array<i64: 1, 8, 128>}, {transform_indices = @transform_7, window_bounds = array<i64: 1, 8, 128>}]} {
    %cst = arith.constant 0.000000e+00 : f32
    %0 = vector.broadcast %cst : f32 to vector<8x128xf32>
    %c0 = arith.constant 0 : index
    %c0_0 = arith.constant 0 : index
    %c0_1 = arith.constant 0 : index
    %c0_2 = arith.constant 0 : index
    %1 = vector.load %arg2[%c0, %c0_0, %c0_1, %c0_2] : memref<1x1x24x128xbf16, #tpu.memory_space<vmem>>, vector<1x1x8x128xbf16>
    %2 = vector.shape_cast %1 : vector<1x1x8x128xbf16> to vector<8x128xbf16>
    %c0_3 = arith.constant 0 : index
    %c0_4 = arith.constant 0 : index
    %c0_5 = arith.constant 0 : index
    %3 = vector.load %arg3[%c0_3, %c0_4, %c0_5] : memref<3x128x128xbf16, #tpu.memory_space<vmem>>, vector<1x128x128xbf16>
    %4 = vector.shape_cast %3 : vector<1x128x128xbf16> to vector<128x128xbf16>
    %cst_6 = arith.constant dense<0.000000e+00> : vector<8x128xf32>
    %5 = tpu.matmul %2, %4, %cst_6 {dimension_numbers = #tpu.dot_dimension_numbers<[1], [0], [0], [1], [0, 0, 1, 1], [], []>} : vector<8x128xbf16>, vector<128x128xbf16>, vector<8x128xf32> -> vector<8x128xf32>
    %6 = arith.addf %0, %5 : vector<8x128xf32>
    %c0_7 = arith.constant 0 : index
    %c0_8 = arith.constant 0 : index
    %c8 = arith.constant 8 : index
    %c0_9 = arith.constant 0 : index
    %7 = vector.load %arg2[%c0_7, %c0_8, %c8, %c0_9] : memref<1x1x24x128xbf16, #tpu.memory_space<vmem>>, vector<1x1x8x128xbf16>
    %8 = vector.shape_cast %7 : vector<1x1x8x128xbf16> to vector<8x128xbf16>
    %c1 = arith.constant 1 : index
    %c0_10 = arith.constant 0 : index
    %c0_11 = arith.constant 0 : index
    %9 = vector.load %arg3[%c1, %c0_10, %c0_11] : memref<3x128x128xbf16, #tpu.memory_space<vmem>>, vector<1x128x128xbf16>
    %10 = vector.shape_cast %9 : vector<1x128x128xbf16> to vector<128x128xbf16>
    %cst_12 = arith.constant dense<0.000000e+00> : vector<8x128xf32>
    %11 = tpu.matmul %8, %10, %cst_12 {dimension_numbers = #tpu.dot_dimension_numbers<[1], [0], [0], [1], [0, 0, 1, 1], [], []>} : vector<8x128xbf16>, vector<128x128xbf16>, vector<8x128xf32> -> vector<8x128xf32>
    %12 = arith.addf %6, %11 : vector<8x128xf32>
    %c0_13 = arith.constant 0 : index
    %c0_14 = arith.constant 0 : index
    %c16 = arith.constant 16 : index
    %c0_15 = arith.constant 0 : index
    %13 = vector.load %arg2[%c0_13, %c0_14, %c16, %c0_15] : memref<1x1x24x128xbf16, #tpu.memory_space<vmem>>, vector<1x1x8x128xbf16>
    %14 = vector.shape_cast %13 : vector<1x1x8x128xbf16> to vector<8x128xbf16>
    %c2 = arith.constant 2 : index
    %c0_16 = arith.constant 0 : index
    %c0_17 = arith.constant 0 : index
    %15 = vector.load %arg3[%c2, %c0_16, %c0_17] : memref<3x128x128xbf16, #tpu.memory_space<vmem>>, vector<1x128x128xbf16>
    %16 = vector.shape_cast %15 : vector<1x128x128xbf16> to vector<128x128xbf16>
    %cst_18 = arith.constant dense<0.000000e+00> : vector<8x128xf32>
    %17 = tpu.matmul %14, %16, %cst_18 {dimension_numbers = #tpu.dot_dimension_numbers<[1], [0], [0], [1], [0, 0, 1, 1], [], []>} : vector<8x128xbf16>, vector<128x128xbf16>, vector<8x128xf32> -> vector<8x128xf32>
    %18 = arith.addf %12, %17 : vector<8x128xf32>
    %c0_19 = arith.constant 0 : index
    %c0_20 = arith.constant 0 : index
    %19 = vector.load %arg4[%c0_19, %c0_20] : memref<1x128xf32, #tpu.memory_space<vmem>>, vector<1x128xf32>
    %20 = vector.broadcast %19 : vector<1x128xf32> to vector<8x128xf32>
    %21 = arith.mulf %18, %20 : vector<8x128xf32>
    %c0_21 = arith.constant 0 : index
    %c0_22 = arith.constant 0 : index
    %22 = vector.load %arg5[%c0_21, %c0_22] : memref<1x128xf32, #tpu.memory_space<vmem>>, vector<1x128xf32>
    %23 = vector.broadcast %22 : vector<1x128xf32> to vector<8x128xf32>
    %24 = arith.addf %21, %23 : vector<8x128xf32>
    %cst_23 = arith.constant 0.000000e+00 : f32
    %25 = vector.broadcast %cst_23 : f32 to vector<8x128xf32>
    %26 = arith.maximumf %24, %25 : vector<8x128xf32>
    %27 = arith.truncf %26 : vector<8x128xf32> to vector<8x128xbf16>
    %c0_24 = arith.constant 0 : index
    %c0_25 = arith.constant 0 : index
    %c0_26 = arith.constant 0 : index
    %28 = vector.load %arg8[%c0_24, %c0_25, %c0_26] : memref<1x8x128xbf16, #tpu.memory_space<vmem>>, vector<1x8x128xbf16>
    %29 = vector.shape_cast %28 : vector<1x8x128xbf16> to vector<8x128xbf16>
    %30 = vector.shape_cast %27 : vector<8x128xbf16> to vector<1x8x128xbf16>
    tpu.vector_store %arg8[%c0_24, %c0_25, %c0_26], %30 {strides = array<i32>} : memref<1x8x128xbf16, #tpu.memory_space<vmem>>, vector<1x8x128xbf16>,
    %c0_27 = arith.constant 0 : index
    %c0_28 = arith.constant 0 : index
    %c8_29 = arith.constant 8 : index
    %c0_30 = arith.constant 0 : index
    %31 = vector.load %arg2[%c0_27, %c0_28, %c8_29, %c0_30] : memref<1x1x24x128xbf16, #tpu.memory_space<vmem>>, vector<1x1x8x128xbf16>
    %32 = vector.shape_cast %31 : vector<1x1x8x128xbf16> to vector<8x128xbf16>
    %c0_31 = arith.constant 0 : index
    %c0_32 = arith.constant 0 : index
    %33 = vector.load %arg6[%c0_31, %c0_32] : memref<128x128xbf16, #tpu.memory_space<vmem>>, vector<128x128xbf16>
    %cst_33 = arith.constant dense<0.000000e+00> : vector<8x128xf32>
    %34 = tpu.matmul %32, %33, %cst_33 {dimension_numbers = #tpu.dot_dimension_numbers<[1], [0], [0], [1], [0, 0, 1, 1], [], []>} : vector<8x128xbf16>, vector<128x128xbf16>, vector<8x128xf32> -> vector<8x128xf32>
    %c0_34 = arith.constant 0 : index
    %c0_35 = arith.constant 0 : index
    %35 = vector.load %arg7[%c0_34, %c0_35] : memref<1x128xf32, #tpu.memory_space<vmem>>, vector<1x128xf32>
    %36 = vector.broadcast %35 : vector<1x128xf32> to vector<8x128xf32>
    %37 = arith.addf %34, %36 : vector<8x128xf32>
    %38 = arith.truncf %37 : vector<8x128xf32> to vector<8x128xbf16>
    %c0_36 = arith.constant 0 : index
    %c0_37 = arith.constant 0 : index
    %c0_38 = arith.constant 0 : index
    %39 = vector.load %arg9[%c0_36, %c0_37, %c0_38] : memref<1x8x128xbf16, #tpu.memory_space<vmem>>, vector<1x8x128xbf16>
    %40 = vector.shape_cast %39 : vector<1x8x128xbf16> to vector<8x128xbf16>
    %41 = vector.shape_cast %38 : vector<8x128xbf16> to vector<1x8x128xbf16>
    tpu.vector_store %arg9[%c0_36, %c0_37, %c0_38], %41 {strides = array<i32>} : memref<1x8x128xbf16, #tpu.memory_space<vmem>>, vector<1x8x128xbf16>,
    return
  }
  func.func @transform_0(%arg0: i32, %arg1: i32) -> (i32, i32, i32, i32) {
    %c0_i32 = arith.constant 0 : i32
    %c0_i32_0 = arith.constant 0 : i32
    %c0_i32_1 = arith.constant 0 : i32
    return %arg0, %arg1, %c0_i32, %c0_i32_0 : i32, i32, i32, i32
  }
  func.func @transform_1(%arg0: i32, %arg1: i32) -> (i32, i32, i32) {
    %c0_i32 = arith.constant 0 : i32
    %c0_i32_0 = arith.constant 0 : i32
    %c0_i32_1 = arith.constant 0 : i32
    %c0_i32_2 = arith.constant 0 : i32
    return %c0_i32, %c0_i32_0, %c0_i32_1 : i32, i32, i32
  }
  func.func @transform_2(%arg0: i32, %arg1: i32) -> (i32, i32) {
    %c0_i32 = arith.constant 0 : i32
    %c0_i32_0 = arith.constant 0 : i32
    %c0_i32_1 = arith.constant 0 : i32
    return %c0_i32, %c0_i32_0 : i32, i32
  }
  func.func @transform_3(%arg0: i32, %arg1: i32) -> (i32, i32) {
    %c0_i32 = arith.constant 0 : i32
    %c0_i32_0 = arith.constant 0 : i32
    %c0_i32_1 = arith.constant 0 : i32
    return %c0_i32, %c0_i32_0 : i32, i32
  }
  func.func @transform_4(%arg0: i32, %arg1: i32) -> (i32, i32) {
    %c0_i32 = arith.constant 0 : i32
    %c0_i32_0 = arith.constant 0 : i32
    %c0_i32_1 = arith.constant 0 : i32
    return %c0_i32, %c0_i32_0 : i32, i32
  }
  func.func @transform_5(%arg0: i32, %arg1: i32) -> (i32, i32) {
    %c0_i32 = arith.constant 0 : i32
    %c0_i32_0 = arith.constant 0 : i32
    %c0_i32_1 = arith.constant 0 : i32
    return %c0_i32, %c0_i32_0 : i32, i32
  }
  func.func @transform_6(%arg0: i32, %arg1: i32) -> (i32, i32, i32) {
    %c0_i32 = arith.constant 0 : i32
    %c0_i32_0 = arith.constant 0 : i32
    return %arg0, %arg1, %c0_i32 : i32, i32, i32
  }
  func.func @transform_7(%arg0: i32, %arg1: i32) -> (i32, i32, i32) {
    %c0_i32 = arith.constant 0 : i32
    %c0_i32_0 = arith.constant 0 : i32
    return %arg0, %arg1, %c0_i32 : i32, i32, i32
  }
}

module attributes {stable_mosaic.version = 11 : i64} {
  func.func @_conv_s1_kernel(%arg0: i32, %arg1: i32, %arg2: memref<1x1x10x128xbf16, #tpu.memory_space<vmem>>, %arg3: memref<3x128x128xbf16, #tpu.memory_space<vmem>>, %arg4: memref<1x128xf32, #tpu.memory_space<vmem>>, %arg5: memref<1x128xf32, #tpu.memory_space<vmem>>, %arg6: memref<1x8x128xbf16, #tpu.memory_space<vmem>>, %arg7: memref<1x8x128xbf16, #tpu.memory_space<vmem>>) attributes {dimension_semantics = [#tpu.dimension_semantics<parallel>, #tpu.dimension_semantics<parallel>], iteration_bounds = array<i64: 2, 1>, scalar_prefetch = 0 : i64, scratch_operands = 0 : i64, tpu.core_type = #tpu.core_type<tc>, window_params = [{transform_indices = @transform_0, window_bounds = array<i64: 1, 1, 10, 128>}, {pipeline_mode = #tpu.pipeline_mode<synchronous>, transform_indices = @transform_1, window_bounds = array<i64: 3, 128, 128>}, {pipeline_mode = #tpu.pipeline_mode<synchronous>, transform_indices = @transform_2, window_bounds = array<i64: 1, 128>}, {pipeline_mode = #tpu.pipeline_mode<synchronous>, transform_indices = @transform_3, window_bounds = array<i64: 1, 128>}, {transform_indices = @transform_4, window_bounds = array<i64: 1, 8, 128>}, {transform_indices = @transform_5, window_bounds = array<i64: 1, 8, 128>}]} {
    %cst = arith.constant 0.000000e+00 : f32
    %0 = vector.broadcast %cst : f32 to vector<8x128xf32>
    %c0 = arith.constant 0 : index
    %c0_0 = arith.constant 0 : index
    %c0_1 = arith.constant 0 : index
    %c0_2 = arith.constant 0 : index
    %1 = vector.load %arg2[%c0, %c0_0, %c0_1, %c0_2] : memref<1x1x10x128xbf16, #tpu.memory_space<vmem>>, vector<1x1x8x128xbf16>
    %2 = vector.shape_cast %1 : vector<1x1x8x128xbf16> to vector<8x128xbf16>
    %c0_3 = arith.constant 0 : index
    %c0_4 = arith.constant 0 : index
    %c0_5 = arith.constant 0 : index
    %3 = vector.load %arg3[%c0_3, %c0_4, %c0_5] : memref<3x128x128xbf16, #tpu.memory_space<vmem>>, vector<1x128x128xbf16>
    %4 = vector.shape_cast %3 : vector<1x128x128xbf16> to vector<128x128xbf16>
    %cst_6 = arith.constant dense<0.000000e+00> : vector<8x128xf32>
    %5 = tpu.matmul %2, %4, %cst_6 {dimension_numbers = #tpu.dot_dimension_numbers<[1], [0], [0], [1], [0, 0, 1, 1], [], []>} : vector<8x128xbf16>, vector<128x128xbf16>, vector<8x128xf32> -> vector<8x128xf32>
    %6 = arith.addf %0, %5 : vector<8x128xf32>
    %c0_7 = arith.constant 0 : index
    %c0_8 = arith.constant 0 : index
    %c1 = arith.constant 1 : index
    %c0_9 = arith.constant 0 : index
    %7 = vector.load %arg2[%c0_7, %c0_8, %c1, %c0_9] : memref<1x1x10x128xbf16, #tpu.memory_space<vmem>>, vector<1x1x8x128xbf16>
    %8 = vector.shape_cast %7 : vector<1x1x8x128xbf16> to vector<8x128xbf16>
    %c1_10 = arith.constant 1 : index
    %c0_11 = arith.constant 0 : index
    %c0_12 = arith.constant 0 : index
    %9 = vector.load %arg3[%c1_10, %c0_11, %c0_12] : memref<3x128x128xbf16, #tpu.memory_space<vmem>>, vector<1x128x128xbf16>
    %10 = vector.shape_cast %9 : vector<1x128x128xbf16> to vector<128x128xbf16>
    %cst_13 = arith.constant dense<0.000000e+00> : vector<8x128xf32>
    %11 = tpu.matmul %8, %10, %cst_13 {dimension_numbers = #tpu.dot_dimension_numbers<[1], [0], [0], [1], [0, 0, 1, 1], [], []>} : vector<8x128xbf16>, vector<128x128xbf16>, vector<8x128xf32> -> vector<8x128xf32>
    %12 = arith.addf %6, %11 : vector<8x128xf32>
    %c0_14 = arith.constant 0 : index
    %c0_15 = arith.constant 0 : index
    %c2 = arith.constant 2 : index
    %c0_16 = arith.constant 0 : index
    %13 = vector.load %arg2[%c0_14, %c0_15, %c2, %c0_16] : memref<1x1x10x128xbf16, #tpu.memory_space<vmem>>, vector<1x1x8x128xbf16>
    %14 = vector.shape_cast %13 : vector<1x1x8x128xbf16> to vector<8x128xbf16>
    %c2_17 = arith.constant 2 : index
    %c0_18 = arith.constant 0 : index
    %c0_19 = arith.constant 0 : index
    %15 = vector.load %arg3[%c2_17, %c0_18, %c0_19] : memref<3x128x128xbf16, #tpu.memory_space<vmem>>, vector<1x128x128xbf16>
    %16 = vector.shape_cast %15 : vector<1x128x128xbf16> to vector<128x128xbf16>
    %cst_20 = arith.constant dense<0.000000e+00> : vector<8x128xf32>
    %17 = tpu.matmul %14, %16, %cst_20 {dimension_numbers = #tpu.dot_dimension_numbers<[1], [0], [0], [1], [0, 0, 1, 1], [], []>} : vector<8x128xbf16>, vector<128x128xbf16>, vector<8x128xf32> -> vector<8x128xf32>
    %18 = arith.addf %12, %17 : vector<8x128xf32>
    %c0_21 = arith.constant 0 : index
    %c0_22 = arith.constant 0 : index
    %19 = vector.load %arg4[%c0_21, %c0_22] : memref<1x128xf32, #tpu.memory_space<vmem>>, vector<1x128xf32>
    %20 = vector.broadcast %19 : vector<1x128xf32> to vector<8x128xf32>
    %21 = arith.mulf %18, %20 : vector<8x128xf32>
    %c0_23 = arith.constant 0 : index
    %c0_24 = arith.constant 0 : index
    %22 = vector.load %arg5[%c0_23, %c0_24] : memref<1x128xf32, #tpu.memory_space<vmem>>, vector<1x128xf32>
    %23 = vector.broadcast %22 : vector<1x128xf32> to vector<8x128xf32>
    %24 = arith.addf %21, %23 : vector<8x128xf32>
    %c0_25 = arith.constant 0 : index
    %c0_26 = arith.constant 0 : index
    %c0_27 = arith.constant 0 : index
    %25 = vector.load %arg6[%c0_25, %c0_26, %c0_27] : memref<1x8x128xbf16, #tpu.memory_space<vmem>>, vector<1x8x128xbf16>
    %26 = vector.shape_cast %25 : vector<1x8x128xbf16> to vector<8x128xbf16>
    %27 = arith.extf %26 : vector<8x128xbf16> to vector<8x128xf32>
    %28 = arith.addf %24, %27 : vector<8x128xf32>
    %cst_28 = arith.constant 0.000000e+00 : f32
    %29 = vector.broadcast %cst_28 : f32 to vector<8x128xf32>
    %30 = arith.maximumf %28, %29 : vector<8x128xf32>
    %31 = arith.truncf %30 : vector<8x128xf32> to vector<8x128xbf16>
    %c0_29 = arith.constant 0 : index
    %c0_30 = arith.constant 0 : index
    %c0_31 = arith.constant 0 : index
    %32 = vector.load %arg7[%c0_29, %c0_30, %c0_31] : memref<1x8x128xbf16, #tpu.memory_space<vmem>>, vector<1x8x128xbf16>
    %33 = vector.shape_cast %32 : vector<1x8x128xbf16> to vector<8x128xbf16>
    %34 = vector.shape_cast %31 : vector<8x128xbf16> to vector<1x8x128xbf16>
    tpu.vector_store %arg7[%c0_29, %c0_30, %c0_31], %34 {strides = array<i32>} : memref<1x8x128xbf16, #tpu.memory_space<vmem>>, vector<1x8x128xbf16>,
    return
  }
  func.func @transform_0(%arg0: i32, %arg1: i32) -> (i32, i32, i32, i32) {
    %c0_i32 = arith.constant 0 : i32
    %c0_i32_0 = arith.constant 0 : i32
    %c0_i32_1 = arith.constant 0 : i32
    return %arg0, %arg1, %c0_i32, %c0_i32_0 : i32, i32, i32, i32
  }
  func.func @transform_1(%arg0: i32, %arg1: i32) -> (i32, i32, i32) {
    %c0_i32 = arith.constant 0 : i32
    %c0_i32_0 = arith.constant 0 : i32
    %c0_i32_1 = arith.constant 0 : i32
    %c0_i32_2 = arith.constant 0 : i32
    return %c0_i32, %c0_i32_0, %c0_i32_1 : i32, i32, i32
  }
  func.func @transform_2(%arg0: i32, %arg1: i32) -> (i32, i32) {
    %c0_i32 = arith.constant 0 : i32
    %c0_i32_0 = arith.constant 0 : i32
    %c0_i32_1 = arith.constant 0 : i32
    return %c0_i32, %c0_i32_0 : i32, i32
  }
  func.func @transform_3(%arg0: i32, %arg1: i32) -> (i32, i32) {
    %c0_i32 = arith.constant 0 : i32
    %c0_i32_0 = arith.constant 0 : i32
    %c0_i32_1 = arith.constant 0 : i32
    return %c0_i32, %c0_i32_0 : i32, i32
  }
  func.func @transform_4(%arg0: i32, %arg1: i32) -> (i32, i32, i32) {
    %c0_i32 = arith.constant 0 : i32
    %c0_i32_0 = arith.constant 0 : i32
    return %arg0, %arg1, %c0_i32 : i32, i32, i32
  }
  func.func @transform_5(%arg0: i32, %arg1: i32) -> (i32, i32, i32) {
    %c0_i32 = arith.constant 0 : i32
    %c0_i32_0 = arith.constant 0 : i32
    return %arg0, %arg1, %c0_i32 : i32, i32, i32
  }
}

module attributes {stable_mosaic.version = 11 : i64} {
  func.func @_conv_s1_kernel(%arg0: i32, %arg1: i32, %arg2: memref<1x1x10x128xbf16, #tpu.memory_space<vmem>>, %arg3: memref<3x128x128xbf16, #tpu.memory_space<vmem>>, %arg4: memref<1x128xf32, #tpu.memory_space<vmem>>, %arg5: memref<1x128xf32, #tpu.memory_space<vmem>>, %arg6: memref<1x8x128xbf16, #tpu.memory_space<vmem>>) attributes {dimension_semantics = [#tpu.dimension_semantics<parallel>, #tpu.dimension_semantics<parallel>], iteration_bounds = array<i64: 2, 1>, scalar_prefetch = 0 : i64, scratch_operands = 0 : i64, tpu.core_type = #tpu.core_type<tc>, window_params = [{transform_indices = @transform_0, window_bounds = array<i64: 1, 1, 10, 128>}, {pipeline_mode = #tpu.pipeline_mode<synchronous>, transform_indices = @transform_1, window_bounds = array<i64: 3, 128, 128>}, {pipeline_mode = #tpu.pipeline_mode<synchronous>, transform_indices = @transform_2, window_bounds = array<i64: 1, 128>}, {pipeline_mode = #tpu.pipeline_mode<synchronous>, transform_indices = @transform_3, window_bounds = array<i64: 1, 128>}, {transform_indices = @transform_4, window_bounds = array<i64: 1, 8, 128>}]} {
    %cst = arith.constant 0.000000e+00 : f32
    %0 = vector.broadcast %cst : f32 to vector<8x128xf32>
    %c0 = arith.constant 0 : index
    %c0_0 = arith.constant 0 : index
    %c0_1 = arith.constant 0 : index
    %c0_2 = arith.constant 0 : index
    %1 = vector.load %arg2[%c0, %c0_0, %c0_1, %c0_2] : memref<1x1x10x128xbf16, #tpu.memory_space<vmem>>, vector<1x1x8x128xbf16>
    %2 = vector.shape_cast %1 : vector<1x1x8x128xbf16> to vector<8x128xbf16>
    %c0_3 = arith.constant 0 : index
    %c0_4 = arith.constant 0 : index
    %c0_5 = arith.constant 0 : index
    %3 = vector.load %arg3[%c0_3, %c0_4, %c0_5] : memref<3x128x128xbf16, #tpu.memory_space<vmem>>, vector<1x128x128xbf16>
    %4 = vector.shape_cast %3 : vector<1x128x128xbf16> to vector<128x128xbf16>
    %cst_6 = arith.constant dense<0.000000e+00> : vector<8x128xf32>
    %5 = tpu.matmul %2, %4, %cst_6 {dimension_numbers = #tpu.dot_dimension_numbers<[1], [0], [0], [1], [0, 0, 1, 1], [], []>} : vector<8x128xbf16>, vector<128x128xbf16>, vector<8x128xf32> -> vector<8x128xf32>
    %6 = arith.addf %0, %5 : vector<8x128xf32>
    %c0_7 = arith.constant 0 : index
    %c0_8 = arith.constant 0 : index
    %c1 = arith.constant 1 : index
    %c0_9 = arith.constant 0 : index
    %7 = vector.load %arg2[%c0_7, %c0_8, %c1, %c0_9] : memref<1x1x10x128xbf16, #tpu.memory_space<vmem>>, vector<1x1x8x128xbf16>
    %8 = vector.shape_cast %7 : vector<1x1x8x128xbf16> to vector<8x128xbf16>
    %c1_10 = arith.constant 1 : index
    %c0_11 = arith.constant 0 : index
    %c0_12 = arith.constant 0 : index
    %9 = vector.load %arg3[%c1_10, %c0_11, %c0_12] : memref<3x128x128xbf16, #tpu.memory_space<vmem>>, vector<1x128x128xbf16>
    %10 = vector.shape_cast %9 : vector<1x128x128xbf16> to vector<128x128xbf16>
    %cst_13 = arith.constant dense<0.000000e+00> : vector<8x128xf32>
    %11 = tpu.matmul %8, %10, %cst_13 {dimension_numbers = #tpu.dot_dimension_numbers<[1], [0], [0], [1], [0, 0, 1, 1], [], []>} : vector<8x128xbf16>, vector<128x128xbf16>, vector<8x128xf32> -> vector<8x128xf32>
    %12 = arith.addf %6, %11 : vector<8x128xf32>
    %c0_14 = arith.constant 0 : index
    %c0_15 = arith.constant 0 : index
    %c2 = arith.constant 2 : index
    %c0_16 = arith.constant 0 : index
    %13 = vector.load %arg2[%c0_14, %c0_15, %c2, %c0_16] : memref<1x1x10x128xbf16, #tpu.memory_space<vmem>>, vector<1x1x8x128xbf16>
    %14 = vector.shape_cast %13 : vector<1x1x8x128xbf16> to vector<8x128xbf16>
    %c2_17 = arith.constant 2 : index
    %c0_18 = arith.constant 0 : index
    %c0_19 = arith.constant 0 : index
    %15 = vector.load %arg3[%c2_17, %c0_18, %c0_19] : memref<3x128x128xbf16, #tpu.memory_space<vmem>>, vector<1x128x128xbf16>
    %16 = vector.shape_cast %15 : vector<1x128x128xbf16> to vector<128x128xbf16>
    %cst_20 = arith.constant dense<0.000000e+00> : vector<8x128xf32>
    %17 = tpu.matmul %14, %16, %cst_20 {dimension_numbers = #tpu.dot_dimension_numbers<[1], [0], [0], [1], [0, 0, 1, 1], [], []>} : vector<8x128xbf16>, vector<128x128xbf16>, vector<8x128xf32> -> vector<8x128xf32>
    %18 = arith.addf %12, %17 : vector<8x128xf32>
    %c0_21 = arith.constant 0 : index
    %c0_22 = arith.constant 0 : index
    %19 = vector.load %arg4[%c0_21, %c0_22] : memref<1x128xf32, #tpu.memory_space<vmem>>, vector<1x128xf32>
    %20 = vector.broadcast %19 : vector<1x128xf32> to vector<8x128xf32>
    %21 = arith.mulf %18, %20 : vector<8x128xf32>
    %c0_23 = arith.constant 0 : index
    %c0_24 = arith.constant 0 : index
    %22 = vector.load %arg5[%c0_23, %c0_24] : memref<1x128xf32, #tpu.memory_space<vmem>>, vector<1x128xf32>
    %23 = vector.broadcast %22 : vector<1x128xf32> to vector<8x128xf32>
    %24 = arith.addf %21, %23 : vector<8x128xf32>
    %cst_25 = arith.constant 0.000000e+00 : f32
    %25 = vector.broadcast %cst_25 : f32 to vector<8x128xf32>
    %26 = arith.maximumf %24, %25 : vector<8x128xf32>
    %27 = arith.truncf %26 : vector<8x128xf32> to vector<8x128xbf16>
    %c0_26 = arith.constant 0 : index
    %c0_27 = arith.constant 0 : index
    %c0_28 = arith.constant 0 : index
    %28 = vector.load %arg6[%c0_26, %c0_27, %c0_28] : memref<1x8x128xbf16, #tpu.memory_space<vmem>>, vector<1x8x128xbf16>
    %29 = vector.shape_cast %28 : vector<1x8x128xbf16> to vector<8x128xbf16>
    %30 = vector.shape_cast %27 : vector<8x128xbf16> to vector<1x8x128xbf16>
    tpu.vector_store %arg6[%c0_26, %c0_27, %c0_28], %30 {strides = array<i32>} : memref<1x8x128xbf16, #tpu.memory_space<vmem>>, vector<1x8x128xbf16>,
    return
  }
  func.func @transform_0(%arg0: i32, %arg1: i32) -> (i32, i32, i32, i32) {
    %c0_i32 = arith.constant 0 : i32
    %c0_i32_0 = arith.constant 0 : i32
    %c0_i32_1 = arith.constant 0 : i32
    return %arg0, %arg1, %c0_i32, %c0_i32_0 : i32, i32, i32, i32
  }
  func.func @transform_1(%arg0: i32, %arg1: i32) -> (i32, i32, i32) {
    %c0_i32 = arith.constant 0 : i32
    %c0_i32_0 = arith.constant 0 : i32
    %c0_i32_1 = arith.constant 0 : i32
    %c0_i32_2 = arith.constant 0 : i32
    return %c0_i32, %c0_i32_0, %c0_i32_1 : i32, i32, i32
  }
  func.func @transform_2(%arg0: i32, %arg1: i32) -> (i32, i32) {
    %c0_i32 = arith.constant 0 : i32
    %c0_i32_0 = arith.constant 0 : i32
    %c0_i32_1 = arith.constant 0 : i32
    return %c0_i32, %c0_i32_0 : i32, i32
  }
  func.func @transform_3(%arg0: i32, %arg1: i32) -> (i32, i32) {
    %c0_i32 = arith.constant 0 : i32
    %c0_i32_0 = arith.constant 0 : i32
    %c0_i32_1 = arith.constant 0 : i32
    return %c0_i32, %c0_i32_0 : i32, i32
  }
  func.func @transform_4(%arg0: i32, %arg1: i32) -> (i32, i32, i32) {
    %c0_i32 = arith.constant 0 : i32
    %c0_i32_0 = arith.constant 0 : i32
    return %arg0, %arg1, %c0_i32 : i32, i32, i32
  }
}

module attributes {stable_mosaic.version = 11 : i64} {
  func.func @_conv_s2_down_kernel(%arg0: i32, %arg1: i32, %arg2: memref<1x1x12x128xbf16, #tpu.memory_space<vmem>>, %arg3: memref<3x128x128xbf16, #tpu.memory_space<vmem>>, %arg4: memref<1x128xf32, #tpu.memory_space<vmem>>, %arg5: memref<1x128xf32, #tpu.memory_space<vmem>>, %arg6: memref<128x128xbf16, #tpu.memory_space<vmem>>, %arg7: memref<1x128xf32, #tpu.memory_space<vmem>>, %arg8: memref<1x4x128xbf16, #tpu.memory_space<vmem>>, %arg9: memref<1x4x128xbf16, #tpu.memory_space<vmem>>) attributes {dimension_semantics = [#tpu.dimension_semantics<parallel>, #tpu.dimension_semantics<parallel>], iteration_bounds = array<i64: 2, 1>, scalar_prefetch = 0 : i64, scratch_operands = 0 : i64, tpu.core_type = #tpu.core_type<tc>, window_params = [{transform_indices = @transform_0, window_bounds = array<i64: 1, 1, 12, 128>}, {pipeline_mode = #tpu.pipeline_mode<synchronous>, transform_indices = @transform_1, window_bounds = array<i64: 3, 128, 128>}, {pipeline_mode = #tpu.pipeline_mode<synchronous>, transform_indices = @transform_2, window_bounds = array<i64: 1, 128>}, {pipeline_mode = #tpu.pipeline_mode<synchronous>, transform_indices = @transform_3, window_bounds = array<i64: 1, 128>}, {pipeline_mode = #tpu.pipeline_mode<synchronous>, transform_indices = @transform_4, window_bounds = array<i64: 128, 128>}, {pipeline_mode = #tpu.pipeline_mode<synchronous>, transform_indices = @transform_5, window_bounds = array<i64: 1, 128>}, {transform_indices = @transform_6, window_bounds = array<i64: 1, 4, 128>}, {transform_indices = @transform_7, window_bounds = array<i64: 1, 4, 128>}]} {
    %cst = arith.constant 0.000000e+00 : f32
    %0 = vector.broadcast %cst : f32 to vector<4x128xf32>
    %c0 = arith.constant 0 : index
    %c0_0 = arith.constant 0 : index
    %c0_1 = arith.constant 0 : index
    %c0_2 = arith.constant 0 : index
    %1 = vector.load %arg2[%c0, %c0_0, %c0_1, %c0_2] : memref<1x1x12x128xbf16, #tpu.memory_space<vmem>>, vector<1x1x4x128xbf16>
    %2 = vector.shape_cast %1 : vector<1x1x4x128xbf16> to vector<4x128xbf16>
    %c0_3 = arith.constant 0 : index
    %c0_4 = arith.constant 0 : index
    %c0_5 = arith.constant 0 : index
    %3 = vector.load %arg3[%c0_3, %c0_4, %c0_5] : memref<3x128x128xbf16, #tpu.memory_space<vmem>>, vector<1x128x128xbf16>
    %4 = vector.shape_cast %3 : vector<1x128x128xbf16> to vector<128x128xbf16>
    %cst_6 = arith.constant dense<0.000000e+00> : vector<4x128xf32>
    %5 = tpu.matmul %2, %4, %cst_6 {dimension_numbers = #tpu.dot_dimension_numbers<[1], [0], [0], [1], [0, 0, 1, 1], [], []>} : vector<4x128xbf16>, vector<128x128xbf16>, vector<4x128xf32> -> vector<4x128xf32>
    %6 = arith.addf %0, %5 : vector<4x128xf32>
    %c0_7 = arith.constant 0 : index
    %c0_8 = arith.constant 0 : index
    %c4 = arith.constant 4 : index
    %c0_9 = arith.constant 0 : index
    %7 = vector.load %arg2[%c0_7, %c0_8, %c4, %c0_9] : memref<1x1x12x128xbf16, #tpu.memory_space<vmem>>, vector<1x1x4x128xbf16>
    %8 = vector.shape_cast %7 : vector<1x1x4x128xbf16> to vector<4x128xbf16>
    %c1 = arith.constant 1 : index
    %c0_10 = arith.constant 0 : index
    %c0_11 = arith.constant 0 : index
    %9 = vector.load %arg3[%c1, %c0_10, %c0_11] : memref<3x128x128xbf16, #tpu.memory_space<vmem>>, vector<1x128x128xbf16>
    %10 = vector.shape_cast %9 : vector<1x128x128xbf16> to vector<128x128xbf16>
    %cst_12 = arith.constant dense<0.000000e+00> : vector<4x128xf32>
    %11 = tpu.matmul %8, %10, %cst_12 {dimension_numbers = #tpu.dot_dimension_numbers<[1], [0], [0], [1], [0, 0, 1, 1], [], []>} : vector<4x128xbf16>, vector<128x128xbf16>, vector<4x128xf32> -> vector<4x128xf32>
    %12 = arith.addf %6, %11 : vector<4x128xf32>
    %c0_13 = arith.constant 0 : index
    %c0_14 = arith.constant 0 : index
    %c8 = arith.constant 8 : index
    %c0_15 = arith.constant 0 : index
    %13 = vector.load %arg2[%c0_13, %c0_14, %c8, %c0_15] : memref<1x1x12x128xbf16, #tpu.memory_space<vmem>>, vector<1x1x4x128xbf16>
    %14 = vector.shape_cast %13 : vector<1x1x4x128xbf16> to vector<4x128xbf16>
    %c2 = arith.constant 2 : index
    %c0_16 = arith.constant 0 : index
    %c0_17 = arith.constant 0 : index
    %15 = vector.load %arg3[%c2, %c0_16, %c0_17] : memref<3x128x128xbf16, #tpu.memory_space<vmem>>, vector<1x128x128xbf16>
    %16 = vector.shape_cast %15 : vector<1x128x128xbf16> to vector<128x128xbf16>
    %cst_18 = arith.constant dense<0.000000e+00> : vector<4x128xf32>
    %17 = tpu.matmul %14, %16, %cst_18 {dimension_numbers = #tpu.dot_dimension_numbers<[1], [0], [0], [1], [0, 0, 1, 1], [], []>} : vector<4x128xbf16>, vector<128x128xbf16>, vector<4x128xf32> -> vector<4x128xf32>
    %18 = arith.addf %12, %17 : vector<4x128xf32>
    %c0_19 = arith.constant 0 : index
    %c0_20 = arith.constant 0 : index
    %19 = vector.load %arg4[%c0_19, %c0_20] : memref<1x128xf32, #tpu.memory_space<vmem>>, vector<1x128xf32>
    %20 = vector.broadcast %19 : vector<1x128xf32> to vector<4x128xf32>
    %21 = arith.mulf %18, %20 : vector<4x128xf32>
    %c0_21 = arith.constant 0 : index
    %c0_22 = arith.constant 0 : index
    %22 = vector.load %arg5[%c0_21, %c0_22] : memref<1x128xf32, #tpu.memory_space<vmem>>, vector<1x128xf32>
    %23 = vector.broadcast %22 : vector<1x128xf32> to vector<4x128xf32>
    %24 = arith.addf %21, %23 : vector<4x128xf32>
    %cst_23 = arith.constant 0.000000e+00 : f32
    %25 = vector.broadcast %cst_23 : f32 to vector<4x128xf32>
    %26 = arith.maximumf %24, %25 : vector<4x128xf32>
    %27 = arith.truncf %26 : vector<4x128xf32> to vector<4x128xbf16>
    %c0_24 = arith.constant 0 : index
    %c0_25 = arith.constant 0 : index
    %c0_26 = arith.constant 0 : index
    %28 = vector.load %arg8[%c0_24, %c0_25, %c0_26] : memref<1x4x128xbf16, #tpu.memory_space<vmem>>, vector<1x4x128xbf16>
    %29 = vector.shape_cast %28 : vector<1x4x128xbf16> to vector<4x128xbf16>
    %30 = vector.shape_cast %27 : vector<4x128xbf16> to vector<1x4x128xbf16>
    tpu.vector_store %arg8[%c0_24, %c0_25, %c0_26], %30 {strides = array<i32>} : memref<1x4x128xbf16, #tpu.memory_space<vmem>>, vector<1x4x128xbf16>,
    %c0_27 = arith.constant 0 : index
    %c0_28 = arith.constant 0 : index
    %c4_29 = arith.constant 4 : index
    %c0_30 = arith.constant 0 : index
    %31 = vector.load %arg2[%c0_27, %c0_28, %c4_29, %c0_30] : memref<1x1x12x128xbf16, #tpu.memory_space<vmem>>, vector<1x1x4x128xbf16>
    %32 = vector.shape_cast %31 : vector<1x1x4x128xbf16> to vector<4x128xbf16>
    %c0_31 = arith.constant 0 : index
    %c0_32 = arith.constant 0 : index
    %33 = vector.load %arg6[%c0_31, %c0_32] : memref<128x128xbf16, #tpu.memory_space<vmem>>, vector<128x128xbf16>
    %cst_33 = arith.constant dense<0.000000e+00> : vector<4x128xf32>
    %34 = tpu.matmul %32, %33, %cst_33 {dimension_numbers = #tpu.dot_dimension_numbers<[1], [0], [0], [1], [0, 0, 1, 1], [], []>} : vector<4x128xbf16>, vector<128x128xbf16>, vector<4x128xf32> -> vector<4x128xf32>
    %c0_34 = arith.constant 0 : index
    %c0_35 = arith.constant 0 : index
    %35 = vector.load %arg7[%c0_34, %c0_35] : memref<1x128xf32, #tpu.memory_space<vmem>>, vector<1x128xf32>
    %36 = vector.broadcast %35 : vector<1x128xf32> to vector<4x128xf32>
    %37 = arith.addf %34, %36 : vector<4x128xf32>
    %38 = arith.truncf %37 : vector<4x128xf32> to vector<4x128xbf16>
    %c0_36 = arith.constant 0 : index
    %c0_37 = arith.constant 0 : index
    %c0_38 = arith.constant 0 : index
    %39 = vector.load %arg9[%c0_36, %c0_37, %c0_38] : memref<1x4x128xbf16, #tpu.memory_space<vmem>>, vector<1x4x128xbf16>
    %40 = vector.shape_cast %39 : vector<1x4x128xbf16> to vector<4x128xbf16>
    %41 = vector.shape_cast %38 : vector<4x128xbf16> to vector<1x4x128xbf16>
    tpu.vector_store %arg9[%c0_36, %c0_37, %c0_38], %41 {strides = array<i32>} : memref<1x4x128xbf16, #tpu.memory_space<vmem>>, vector<1x4x128xbf16>,
    return
  }
  func.func @transform_0(%arg0: i32, %arg1: i32) -> (i32, i32, i32, i32) {
    %c0_i32 = arith.constant 0 : i32
    %c0_i32_0 = arith.constant 0 : i32
    %c0_i32_1 = arith.constant 0 : i32
    return %arg0, %arg1, %c0_i32, %c0_i32_0 : i32, i32, i32, i32
  }
  func.func @transform_1(%arg0: i32, %arg1: i32) -> (i32, i32, i32) {
    %c0_i32 = arith.constant 0 : i32
    %c0_i32_0 = arith.constant 0 : i32
    %c0_i32_1 = arith.constant 0 : i32
    %c0_i32_2 = arith.constant 0 : i32
    return %c0_i32, %c0_i32_0, %c0_i32_1 : i32, i32, i32
  }
  func.func @transform_2(%arg0: i32, %arg1: i32) -> (i32, i32) {
    %c0_i32 = arith.constant 0 : i32
    %c0_i32_0 = arith.constant 0 : i32
    %c0_i32_1 = arith.constant 0 : i32
    return %c0_i32, %c0_i32_0 : i32, i32
  }
  func.func @transform_3(%arg0: i32, %arg1: i32) -> (i32, i32) {
    %c0_i32 = arith.constant 0 : i32
    %c0_i32_0 = arith.constant 0 : i32
    %c0_i32_1 = arith.constant 0 : i32
    return %c0_i32, %c0_i32_0 : i32, i32
  }
  func.func @transform_4(%arg0: i32, %arg1: i32) -> (i32, i32) {
    %c0_i32 = arith.constant 0 : i32
    %c0_i32_0 = arith.constant 0 : i32
    %c0_i32_1 = arith.constant 0 : i32
    return %c0_i32, %c0_i32_0 : i32, i32
  }
  func.func @transform_5(%arg0: i32, %arg1: i32) -> (i32, i32) {
    %c0_i32 = arith.constant 0 : i32
    %c0_i32_0 = arith.constant 0 : i32
    %c0_i32_1 = arith.constant 0 : i32
    return %c0_i32, %c0_i32_0 : i32, i32
  }
  func.func @transform_6(%arg0: i32, %arg1: i32) -> (i32, i32, i32) {
    %c0_i32 = arith.constant 0 : i32
    %c0_i32_0 = arith.constant 0 : i32
    return %arg0, %arg1, %c0_i32 : i32, i32, i32
  }
  func.func @transform_7(%arg0: i32, %arg1: i32) -> (i32, i32, i32) {
    %c0_i32 = arith.constant 0 : i32
    %c0_i32_0 = arith.constant 0 : i32
    return %arg0, %arg1, %c0_i32 : i32, i32, i32
  }
}

module attributes {stable_mosaic.version = 11 : i64} {
  func.func @_conv_s1_kernel(%arg0: i32, %arg1: i32, %arg2: memref<1x1x6x128xbf16, #tpu.memory_space<vmem>>, %arg3: memref<3x128x128xbf16, #tpu.memory_space<vmem>>, %arg4: memref<1x128xf32, #tpu.memory_space<vmem>>, %arg5: memref<1x128xf32, #tpu.memory_space<vmem>>, %arg6: memref<1x4x128xbf16, #tpu.memory_space<vmem>>) attributes {dimension_semantics = [#tpu.dimension_semantics<parallel>, #tpu.dimension_semantics<parallel>], iteration_bounds = array<i64: 2, 1>, scalar_prefetch = 0 : i64, scratch_operands = 0 : i64, tpu.core_type = #tpu.core_type<tc>, window_params = [{transform_indices = @transform_0, window_bounds = array<i64: 1, 1, 6, 128>}, {pipeline_mode = #tpu.pipeline_mode<synchronous>, transform_indices = @transform_1, window_bounds = array<i64: 3, 128, 128>}, {pipeline_mode = #tpu.pipeline_mode<synchronous>, transform_indices = @transform_2, window_bounds = array<i64: 1, 128>}, {pipeline_mode = #tpu.pipeline_mode<synchronous>, transform_indices = @transform_3, window_bounds = array<i64: 1, 128>}, {transform_indices = @transform_4, window_bounds = array<i64: 1, 4, 128>}]} {
    %cst = arith.constant 0.000000e+00 : f32
    %0 = vector.broadcast %cst : f32 to vector<4x128xf32>
    %c0 = arith.constant 0 : index
    %c0_0 = arith.constant 0 : index
    %c0_1 = arith.constant 0 : index
    %c0_2 = arith.constant 0 : index
    %1 = vector.load %arg2[%c0, %c0_0, %c0_1, %c0_2] : memref<1x1x6x128xbf16, #tpu.memory_space<vmem>>, vector<1x1x4x128xbf16>
    %2 = vector.shape_cast %1 : vector<1x1x4x128xbf16> to vector<4x128xbf16>
    %c0_3 = arith.constant 0 : index
    %c0_4 = arith.constant 0 : index
    %c0_5 = arith.constant 0 : index
    %3 = vector.load %arg3[%c0_3, %c0_4, %c0_5] : memref<3x128x128xbf16, #tpu.memory_space<vmem>>, vector<1x128x128xbf16>
    %4 = vector.shape_cast %3 : vector<1x128x128xbf16> to vector<128x128xbf16>
    %cst_6 = arith.constant dense<0.000000e+00> : vector<4x128xf32>
    %5 = tpu.matmul %2, %4, %cst_6 {dimension_numbers = #tpu.dot_dimension_numbers<[1], [0], [0], [1], [0, 0, 1, 1], [], []>} : vector<4x128xbf16>, vector<128x128xbf16>, vector<4x128xf32> -> vector<4x128xf32>
    %6 = arith.addf %0, %5 : vector<4x128xf32>
    %c0_7 = arith.constant 0 : index
    %c0_8 = arith.constant 0 : index
    %c1 = arith.constant 1 : index
    %c0_9 = arith.constant 0 : index
    %7 = vector.load %arg2[%c0_7, %c0_8, %c1, %c0_9] : memref<1x1x6x128xbf16, #tpu.memory_space<vmem>>, vector<1x1x4x128xbf16>
    %8 = vector.shape_cast %7 : vector<1x1x4x128xbf16> to vector<4x128xbf16>
    %c1_10 = arith.constant 1 : index
    %c0_11 = arith.constant 0 : index
    %c0_12 = arith.constant 0 : index
    %9 = vector.load %arg3[%c1_10, %c0_11, %c0_12] : memref<3x128x128xbf16, #tpu.memory_space<vmem>>, vector<1x128x128xbf16>
    %10 = vector.shape_cast %9 : vector<1x128x128xbf16> to vector<128x128xbf16>
    %cst_13 = arith.constant dense<0.000000e+00> : vector<4x128xf32>
    %11 = tpu.matmul %8, %10, %cst_13 {dimension_numbers = #tpu.dot_dimension_numbers<[1], [0], [0], [1], [0, 0, 1, 1], [], []>} : vector<4x128xbf16>, vector<128x128xbf16>, vector<4x128xf32> -> vector<4x128xf32>
    %12 = arith.addf %6, %11 : vector<4x128xf32>
    %c0_14 = arith.constant 0 : index
    %c0_15 = arith.constant 0 : index
    %c2 = arith.constant 2 : index
    %c0_16 = arith.constant 0 : index
    %13 = vector.load %arg2[%c0_14, %c0_15, %c2, %c0_16] : memref<1x1x6x128xbf16, #tpu.memory_space<vmem>>, vector<1x1x4x128xbf16>
    %14 = vector.shape_cast %13 : vector<1x1x4x128xbf16> to vector<4x128xbf16>
    %c2_17 = arith.constant 2 : index
    %c0_18 = arith.constant 0 : index
    %c0_19 = arith.constant 0 : index
    %15 = vector.load %arg3[%c2_17, %c0_18, %c0_19] : memref<3x128x128xbf16, #tpu.memory_space<vmem>>, vector<1x128x128xbf16>
    %16 = vector.shape_cast %15 : vector<1x128x128xbf16> to vector<128x128xbf16>
    %cst_20 = arith.constant dense<0.000000e+00> : vector<4x128xf32>
    %17 = tpu.matmul %14, %16, %cst_20 {dimension_numbers = #tpu.dot_dimension_numbers<[1], [0], [0], [1], [0, 0, 1, 1], [], []>} : vector<4x128xbf16>, vector<128x128xbf16>, vector<4x128xf32> -> vector<4x128xf32>
    %18 = arith.addf %12, %17 : vector<4x128xf32>
    %c0_21 = arith.constant 0 : index
    %c0_22 = arith.constant 0 : index
    %19 = vector.load %arg4[%c0_21, %c0_22] : memref<1x128xf32, #tpu.memory_space<vmem>>, vector<1x128xf32>
    %20 = vector.broadcast %19 : vector<1x128xf32> to vector<4x128xf32>
    %21 = arith.mulf %18, %20 : vector<4x128xf32>
    %c0_23 = arith.constant 0 : index
    %c0_24 = arith.constant 0 : index
    %22 = vector.load %arg5[%c0_23, %c0_24] : memref<1x128xf32, #tpu.memory_space<vmem>>, vector<1x128xf32>
    %23 = vector.broadcast %22 : vector<1x128xf32> to vector<4x128xf32>
    %24 = arith.addf %21, %23 : vector<4x128xf32>
    %cst_25 = arith.constant 0.000000e+00 : f32
    %25 = vector.broadcast %cst_25 : f32 to vector<4x128xf32>
    %26 = arith.maximumf %24, %25 : vector<4x128xf32>
    %27 = arith.truncf %26 : vector<4x128xf32> to vector<4x128xbf16>
    %c0_26 = arith.constant 0 : index
    %c0_27 = arith.constant 0 : index
    %c0_28 = arith.constant 0 : index
    %28 = vector.load %arg6[%c0_26, %c0_27, %c0_28] : memref<1x4x128xbf16, #tpu.memory_space<vmem>>, vector<1x4x128xbf16>
    %29 = vector.shape_cast %28 : vector<1x4x128xbf16> to vector<4x128xbf16>
    %30 = vector.shape_cast %27 : vector<4x128xbf16> to vector<1x4x128xbf16>
    tpu.vector_store %arg6[%c0_26, %c0_27, %c0_28], %30 {strides = array<i32>} : memref<1x4x128xbf16, #tpu.memory_space<vmem>>, vector<1x4x128xbf16>,
    return
  }
  func.func @transform_0(%arg0: i32, %arg1: i32) -> (i32, i32, i32, i32) {
    %c0_i32 = arith.constant 0 : i32
    %c0_i32_0 = arith.constant 0 : i32
    %c0_i32_1 = arith.constant 0 : i32
    return %arg0, %arg1, %c0_i32, %c0_i32_0 : i32, i32, i32, i32
  }
  func.func @transform_1(%arg0: i32, %arg1: i32) -> (i32, i32, i32) {
    %c0_i32 = arith.constant 0 : i32
    %c0_i32_0 = arith.constant 0 : i32
    %c0_i32_1 = arith.constant 0 : i32
    %c0_i32_2 = arith.constant 0 : i32
    return %c0_i32, %c0_i32_0, %c0_i32_1 : i32, i32, i32
  }
  func.func @transform_2(%arg0: i32, %arg1: i32) -> (i32, i32) {
    %c0_i32 = arith.constant 0 : i32
    %c0_i32_0 = arith.constant 0 : i32
    %c0_i32_1 = arith.constant 0 : i32
    return %c0_i32, %c0_i32_0 : i32, i32
  }
  func.func @transform_3(%arg0: i32, %arg1: i32) -> (i32, i32) {
    %c0_i32 = arith.constant 0 : i32
    %c0_i32_0 = arith.constant 0 : i32
    %c0_i32_1 = arith.constant 0 : i32
    return %c0_i32, %c0_i32_0 : i32, i32
  }
  func.func @transform_4(%arg0: i32, %arg1: i32) -> (i32, i32, i32) {
    %c0_i32 = arith.constant 0 : i32
    %c0_i32_0 = arith.constant 0 : i32
    return %arg0, %arg1, %c0_i32 : i32, i32, i32
  }
}

module attributes {stable_mosaic.version = 11 : i64} {
  func.func @_avgpool_kernel(%arg0: i32, %arg1: i32, %arg2: memref<1x4x128xbf16, #tpu.memory_space<vmem>>, %arg3: memref<1x8x128xf32, #tpu.memory_space<vmem>>) attributes {dimension_semantics = [#tpu.dimension_semantics<parallel>, #tpu.dimension_semantics<arbitrary>], iteration_bounds = array<i64: 2, 1>, scalar_prefetch = 0 : i64, scratch_operands = 0 : i64, tpu.core_type = #tpu.core_type<tc>, window_params = [{transform_indices = @transform_0, window_bounds = array<i64: 1, 4, 128>}, {transform_indices = @transform_1, window_bounds = array<i64: 1, 8, 128>}]} {
    %c0_i32 = arith.constant 0 : i32
    %0 = arith.cmpi eq, %arg1, %c0_i32 : i32
    %1 = arith.extui %0 : i1 to i32
    %c0_i32_0 = arith.constant 0 : i32
    %2 = arith.cmpi ne, %1, %c0_i32_0 : i32
    scf.if %2 {
      %cst_10 = arith.constant 0.000000e+00 : f32
      %17 = vector.broadcast %cst_10 : f32 to vector<1x8x128xf32>
      %c0_11 = arith.constant 0 : index
      %c0_12 = arith.constant 0 : index
      %c0_13 = arith.constant 0 : index
      %18 = vector.load %arg3[%c0_11, %c0_12, %c0_13] : memref<1x8x128xf32, #tpu.memory_space<vmem>>, vector<1x8x128xf32>
      tpu.vector_store %arg3[%c0_11, %c0_12, %c0_13], %17 {strides = array<i32>} : memref<1x8x128xf32, #tpu.memory_space<vmem>>, vector<1x8x128xf32>,
    } else {
    }
    %c0 = arith.constant 0 : index
    %c0_1 = arith.constant 0 : index
    %c0_2 = arith.constant 0 : index
    %3 = vector.load %arg2[%c0, %c0_1, %c0_2] : memref<1x4x128xbf16, #tpu.memory_space<vmem>>, vector<1x4x128xbf16>
    %4 = vector.shape_cast %3 : vector<1x4x128xbf16> to vector<4x128xbf16>
    %5 = arith.extf %4 : vector<4x128xbf16> to vector<4x128xf32>
    %cst = arith.constant dense<0.000000e+00> : vector<128xf32>
    %6 = vector.multi_reduction <add>, %5, %cst [0] : vector<4x128xf32> to vector<128xf32>
    %7 = vector.shape_cast %6 : vector<128xf32> to vector<1x128xf32>
    %cst_3 = arith.constant 2.500000e-01 : f32
    %8 = vector.broadcast %cst_3 : f32 to vector<1x128xf32>
    %9 = arith.mulf %7, %8 : vector<1x128xf32>
    %c0_4 = arith.constant 0 : index
    %c0_5 = arith.constant 0 : index
    %c0_6 = arith.constant 0 : index
    %10 = vector.load %arg3[%c0_4, %c0_5, %c0_6] : memref<1x8x128xf32, #tpu.memory_space<vmem>>, vector<1x8x128xf32>
    %11 = vector.shape_cast %10 : vector<1x8x128xf32> to vector<8x128xf32>
    %12 = vector.broadcast %9 : vector<1x128xf32> to vector<8x128xf32>
    %13 = arith.addf %11, %12 : vector<8x128xf32>
    %c0_7 = arith.constant 0 : index
    %c0_8 = arith.constant 0 : index
    %c0_9 = arith.constant 0 : index
    %14 = vector.load %arg3[%c0_7, %c0_8, %c0_9] : memref<1x8x128xf32, #tpu.memory_space<vmem>>, vector<1x8x128xf32>
    %15 = vector.shape_cast %14 : vector<1x8x128xf32> to vector<8x128xf32>
    %16 = vector.shape_cast %13 : vector<8x128xf32> to vector<1x8x128xf32>
    tpu.vector_store %arg3[%c0_7, %c0_8, %c0_9], %16 {strides = array<i32>} : memref<1x8x128xf32, #tpu.memory_space<vmem>>, vector<1x8x128xf32>,
    return
  }
  func.func @transform_0(%arg0: i32, %arg1: i32) -> (i32, i32, i32) {
    %c0_i32 = arith.constant 0 : i32
    %c0_i32_0 = arith.constant 0 : i32
    return %arg0, %arg1, %c0_i32 : i32, i32, i32
  }
  func.func @transform_1(%arg0: i32, %arg1: i32) -> (i32, i32, i32) {
    %c0_i32 = arith.constant 0 : i32
    %c0_i32_0 = arith.constant 0 : i32
    %c0_i32_1 = arith.constant 0 : i32
    return %arg0, %c0_i32, %c0_i32_0 : i32, i32, i32
  }
}

module attributes {stable_mosaic.version = 11 : i64} {
  func.func @_conv_s1_kernel(%arg0: i32, %arg1: i32, %arg2: memref<1x1x6x128xbf16, #tpu.memory_space<vmem>>, %arg3: memref<3x128x128xbf16, #tpu.memory_space<vmem>>, %arg4: memref<1x128xf32, #tpu.memory_space<vmem>>, %arg5: memref<1x128xf32, #tpu.memory_space<vmem>>, %arg6: memref<1x4x128xbf16, #tpu.memory_space<vmem>>, %arg7: memref<1x4x128xbf16, #tpu.memory_space<vmem>>) attributes {dimension_semantics = [#tpu.dimension_semantics<parallel>, #tpu.dimension_semantics<parallel>], iteration_bounds = array<i64: 2, 1>, scalar_prefetch = 0 : i64, scratch_operands = 0 : i64, tpu.core_type = #tpu.core_type<tc>, window_params = [{transform_indices = @transform_0, window_bounds = array<i64: 1, 1, 6, 128>}, {pipeline_mode = #tpu.pipeline_mode<synchronous>, transform_indices = @transform_1, window_bounds = array<i64: 3, 128, 128>}, {pipeline_mode = #tpu.pipeline_mode<synchronous>, transform_indices = @transform_2, window_bounds = array<i64: 1, 128>}, {pipeline_mode = #tpu.pipeline_mode<synchronous>, transform_indices = @transform_3, window_bounds = array<i64: 1, 128>}, {transform_indices = @transform_4, window_bounds = array<i64: 1, 4, 128>}, {transform_indices = @transform_5, window_bounds = array<i64: 1, 4, 128>}]} {
    %cst = arith.constant 0.000000e+00 : f32
    %0 = vector.broadcast %cst : f32 to vector<4x128xf32>
    %c0 = arith.constant 0 : index
    %c0_0 = arith.constant 0 : index
    %c0_1 = arith.constant 0 : index
    %c0_2 = arith.constant 0 : index
    %1 = vector.load %arg2[%c0, %c0_0, %c0_1, %c0_2] : memref<1x1x6x128xbf16, #tpu.memory_space<vmem>>, vector<1x1x4x128xbf16>
    %2 = vector.shape_cast %1 : vector<1x1x4x128xbf16> to vector<4x128xbf16>
    %c0_3 = arith.constant 0 : index
    %c0_4 = arith.constant 0 : index
    %c0_5 = arith.constant 0 : index
    %3 = vector.load %arg3[%c0_3, %c0_4, %c0_5] : memref<3x128x128xbf16, #tpu.memory_space<vmem>>, vector<1x128x128xbf16>
    %4 = vector.shape_cast %3 : vector<1x128x128xbf16> to vector<128x128xbf16>
    %cst_6 = arith.constant dense<0.000000e+00> : vector<4x128xf32>
    %5 = tpu.matmul %2, %4, %cst_6 {dimension_numbers = #tpu.dot_dimension_numbers<[1], [0], [0], [1], [0, 0, 1, 1], [], []>} : vector<4x128xbf16>, vector<128x128xbf16>, vector<4x128xf32> -> vector<4x128xf32>
    %6 = arith.addf %0, %5 : vector<4x128xf32>
    %c0_7 = arith.constant 0 : index
    %c0_8 = arith.constant 0 : index
    %c1 = arith.constant 1 : index
    %c0_9 = arith.constant 0 : index
    %7 = vector.load %arg2[%c0_7, %c0_8, %c1, %c0_9] : memref<1x1x6x128xbf16, #tpu.memory_space<vmem>>, vector<1x1x4x128xbf16>
    %8 = vector.shape_cast %7 : vector<1x1x4x128xbf16> to vector<4x128xbf16>
    %c1_10 = arith.constant 1 : index
    %c0_11 = arith.constant 0 : index
    %c0_12 = arith.constant 0 : index
    %9 = vector.load %arg3[%c1_10, %c0_11, %c0_12] : memref<3x128x128xbf16, #tpu.memory_space<vmem>>, vector<1x128x128xbf16>
    %10 = vector.shape_cast %9 : vector<1x128x128xbf16> to vector<128x128xbf16>
    %cst_13 = arith.constant dense<0.000000e+00> : vector<4x128xf32>
    %11 = tpu.matmul %8, %10, %cst_13 {dimension_numbers = #tpu.dot_dimension_numbers<[1], [0], [0], [1], [0, 0, 1, 1], [], []>} : vector<4x128xbf16>, vector<128x128xbf16>, vector<4x128xf32> -> vector<4x128xf32>
    %12 = arith.addf %6, %11 : vector<4x128xf32>
    %c0_14 = arith.constant 0 : index
    %c0_15 = arith.constant 0 : index
    %c2 = arith.constant 2 : index
    %c0_16 = arith.constant 0 : index
    %13 = vector.load %arg2[%c0_14, %c0_15, %c2, %c0_16] : memref<1x1x6x128xbf16, #tpu.memory_space<vmem>>, vector<1x1x4x128xbf16>
    %14 = vector.shape_cast %13 : vector<1x1x4x128xbf16> to vector<4x128xbf16>
    %c2_17 = arith.constant 2 : index
    %c0_18 = arith.constant 0 : index
    %c0_19 = arith.constant 0 : index
    %15 = vector.load %arg3[%c2_17, %c0_18, %c0_19] : memref<3x128x128xbf16, #tpu.memory_space<vmem>>, vector<1x128x128xbf16>
    %16 = vector.shape_cast %15 : vector<1x128x128xbf16> to vector<128x128xbf16>
    %cst_20 = arith.constant dense<0.000000e+00> : vector<4x128xf32>
    %17 = tpu.matmul %14, %16, %cst_20 {dimension_numbers = #tpu.dot_dimension_numbers<[1], [0], [0], [1], [0, 0, 1, 1], [], []>} : vector<4x128xbf16>, vector<128x128xbf16>, vector<4x128xf32> -> vector<4x128xf32>
    %18 = arith.addf %12, %17 : vector<4x128xf32>
    %c0_21 = arith.constant 0 : index
    %c0_22 = arith.constant 0 : index
    %19 = vector.load %arg4[%c0_21, %c0_22] : memref<1x128xf32, #tpu.memory_space<vmem>>, vector<1x128xf32>
    %20 = vector.broadcast %19 : vector<1x128xf32> to vector<4x128xf32>
    %21 = arith.mulf %18, %20 : vector<4x128xf32>
    %c0_23 = arith.constant 0 : index
    %c0_24 = arith.constant 0 : index
    %22 = vector.load %arg5[%c0_23, %c0_24] : memref<1x128xf32, #tpu.memory_space<vmem>>, vector<1x128xf32>
    %23 = vector.broadcast %22 : vector<1x128xf32> to vector<4x128xf32>
    %24 = arith.addf %21, %23 : vector<4x128xf32>
    %c0_25 = arith.constant 0 : index
    %c0_26 = arith.constant 0 : index
    %c0_27 = arith.constant 0 : index
    %25 = vector.load %arg6[%c0_25, %c0_26, %c0_27] : memref<1x4x128xbf16, #tpu.memory_space<vmem>>, vector<1x4x128xbf16>
    %26 = vector.shape_cast %25 : vector<1x4x128xbf16> to vector<4x128xbf16>
    %27 = arith.extf %26 : vector<4x128xbf16> to vector<4x128xf32>
    %28 = arith.addf %24, %27 : vector<4x128xf32>
    %cst_28 = arith.constant 0.000000e+00 : f32
    %29 = vector.broadcast %cst_28 : f32 to vector<4x128xf32>
    %30 = arith.maximumf %28, %29 : vector<4x128xf32>
    %31 = arith.truncf %30 : vector<4x128xf32> to vector<4x128xbf16>
    %c0_29 = arith.constant 0 : index
    %c0_30 = arith.constant 0 : index
    %c0_31 = arith.constant 0 : index
    %32 = vector.load %arg7[%c0_29, %c0_30, %c0_31] : memref<1x4x128xbf16, #tpu.memory_space<vmem>>, vector<1x4x128xbf16>
    %33 = vector.shape_cast %32 : vector<1x4x128xbf16> to vector<4x128xbf16>
    %34 = vector.shape_cast %31 : vector<4x128xbf16> to vector<1x4x128xbf16>
    tpu.vector_store %arg7[%c0_29, %c0_30, %c0_31], %34 {strides = array<i32>} : memref<1x4x128xbf16, #tpu.memory_space<vmem>>, vector<1x4x128xbf16>,
    return
  }
  func.func @transform_0(%arg0: i32, %arg1: i32) -> (i32, i32, i32, i32) {
    %c0_i32 = arith.constant 0 : i32
    %c0_i32_0 = arith.constant 0 : i32
    %c0_i32_1 = arith.constant 0 : i32
    return %arg0, %arg1, %c0_i32, %c0_i32_0 : i32, i32, i32, i32
  }
  func.func @transform_1(%arg0: i32, %arg1: i32) -> (i32, i32, i32) {
    %c0_i32 = arith.constant 0 : i32
    %c0_i32_0 = arith.constant 0 : i32
    %c0_i32_1 = arith.constant 0 : i32
    %c0_i32_2 = arith.constant 0 : i32
    return %c0_i32, %c0_i32_0, %c0_i32_1 : i32, i32, i32
  }
  func.func @transform_2(%arg0: i32, %arg1: i32) -> (i32, i32) {
    %c0_i32 = arith.constant 0 : i32
    %c0_i32_0 = arith.constant 0 : i32
    %c0_i32_1 = arith.constant 0 : i32
    return %c0_i32, %c0_i32_0 : i32, i32
  }
  func.func @transform_3(%arg0: i32, %arg1: i32) -> (i32, i32) {
    %c0_i32 = arith.constant 0 : i32
    %c0_i32_0 = arith.constant 0 : i32
    %c0_i32_1 = arith.constant 0 : i32
    return %c0_i32, %c0_i32_0 : i32, i32
  }
  func.func @transform_4(%arg0: i32, %arg1: i32) -> (i32, i32, i32) {
    %c0_i32 = arith.constant 0 : i32
    %c0_i32_0 = arith.constant 0 : i32
    return %arg0, %arg1, %c0_i32 : i32, i32, i32
  }
  func.func @transform_5(%arg0: i32, %arg1: i32) -> (i32, i32, i32) {
    %c0_i32 = arith.constant 0 : i32
    %c0_i32_0 = arith.constant 0 : i32
    return %arg0, %arg1, %c0_i32 : i32, i32, i32
  }
}

</mosaic_0001>

<llo_original>
// kernel: cnn_1d_forward.11
$region0: #{cnn_1d_forward.11}
  #allocation0 [shape = 'u32[]', space=smem, size = 0x4, offset = 0x4, fixed_abs, tag = 'smem constant byte address 0x4 - core index']
  #allocation1 [shape = 'u32[144,128]{1,0:T(1,128)}', space=vmem, size = 0x12000, scoped, tag = 'internal scratch']
  %s0 = inlined_call_operand.vmem [shape: bf16[2,1,24,128], index: 0, kind: input, shape index: {}]
  %s1 = inlined_call_operand.vmem [shape: bf16[3,128,128], index: 1, kind: input, shape index: {}]
  %s2 = inlined_call_operand.vmem [shape: f32[1,128], index: 2, kind: input, shape index: {}]
  %s3 = inlined_call_operand.vmem [shape: f32[1,128], index: 3, kind: input, shape index: {}]
  %s4 = inlined_call_operand.vmem [shape: bf16[128,128], index: 4, kind: input, shape index: {}]
  %s5 = inlined_call_operand.vmem [shape: f32[1,128], index: 5, kind: input, shape index: {}]
  %s6 = inlined_call_operand.vmem [shape: bf16[2,8,128], index: 6, kind: output, shape index: {0}]
  %s7 = inlined_call_operand.vmem [shape: bf16[2,8,128], index: 7, kind: output, shape index: {1}]
  %8 = xla_tuple %s6, %s7
  %s9 = sld [smem:[#allocation0]]
  $region65: #{cnn_1d_forward.11} parent=0
    _
  %s11 = ssub.s32 1, %s9
  %s12 = scalar_select 0, %s11, %s9
  loop: start=0, step=1, limit=4
  $region2: #{cnn_1d_forward.11} parent=0 // loop_pre_header
    _
  $region3: #{cnn_1d_forward.11} parent=0 // loop_header
    %s14 = sphi 0, %s18
    %p15 = scmp.ge.s32.totalorder %s14, 4
    %s21 = sphi 0, %s33
    %s22 = sphi 0, %s29
    %s23 = sphi 0, %s21
    %s24 = sphi 0, %s22
    %s25 = sphi 0, %s23
    %s26 = sphi 0, %s24
    %s38 = sphi 0, %s40
    %s41 = sphi 0, %s38
    %s42 = sphi 0, %s41
    %s58 = sphi 0, %s42
    %s62 = sphi 0, %s62
    %s64 = sphi 0, %s62
    %s65 = sphi 0, %s64
    %s79 = sphi 0, %s65
    %s83 = sphi 0, %s83
    %s85 = sphi 0, %s83
    %s86 = sphi 0, %s85
    %s100 = sphi 0, %s86
    %s104 = sphi 0, %s104
    %s106 = sphi 0, %s104
    %s107 = sphi 0, %s106
    %s121 = sphi 0, %s107
    %s125 = sphi 0, %s125
    %s127 = sphi 0, %s125
    %s128 = sphi 0, %s127
    %s142 = sphi 0, %s128
    %s146 = sphi 0, %s146
    %s148 = sphi 0, %s146
    %s149 = sphi 0, %s148
    %s163 = sphi 0, %s149
    %s171 = sphi 0, %s173
    %s174 = sphi 0, %s171
    %s175 = sphi 0, %s174
    %s191 = sphi 0, %s175
    %s199 = sphi 0, %s201
    %s202 = sphi 0, %s199
    %s203 = sphi 0, %s202
    %s219 = sphi 0, %s203
  $region4: #{cnn_1d_forward.11} parent=0 // loop_header_branch
    %17 = sbr.rel (%p15) target = $region8
  $region5: #{cnn_1d_forward.11} parent=0 // loop_body
    %s19 = ssub.s32 %s14, 1
    %s20 = ssub.s32 %s14, 2
    %s27 = sadd.s32 1, %s22
    %p28 = scmp.ge.s32.totalorder %s27, 1
    %s29 = scalar_select %p28, 0, %s27
    %s30 = sadd.s32 1, %s21
    %s31 = scalar_select %p28, %s30, %s21
    %p32 = scmp.ge.s32.totalorder %s31, 2
    %s33 = scalar_select %p32, 0, %s31
    %s34 = ssub.s32 %s21, %s33
    %s35 = ssub.s32 %s22, %s29
    %s36 = sor.u32 %s34, %s35
    %p37 = scmp.eq.s32.totalorder %s36, 0
    %s39 = sadd.s32 %s38, 1
    %s40 = scalar_select %p37, %s38, %s39
    %p43 = pneg %p37
    %p44 = scmp.eq.s32.totalorder %s14, 1
    %p45 = por %p43, %p44
    %p46 = scmp.ne.s32.totalorder %s38, %s41
    %p47 = scmp.eq.s32.totalorder %s14, 0
    %p48 = por %p46, %p47
    %p49 = scmp.ne.s32.totalorder %s38, %s41
    %p50 = scmp.eq.s32.totalorder %s19, 1
    %p51 = por %p49, %p50
    %p52 = scmp.ne.s32.totalorder %s41, %s42
    %p53 = scmp.eq.s32.totalorder %s19, 0
    %p54 = por %p52, %p53
    %p55 = scmp.ne.s32.totalorder %s41, %s42
    %p56 = scmp.eq.s32.totalorder %s20, 1
    %p57 = por %p55, %p56
    %p59 = scmp.ne.s32.totalorder %s42, %s58
    %p60 = scmp.eq.s32.totalorder %s20, 0
    %p61 = por %p59, %p60
    %s63 = sadd.s32 %s62, 1
    %p66 = scmp.eq.s32.totalorder %s14, 1
    %p67 = scmp.ne.s32.totalorder %s62, %s64
    %p68 = scmp.eq.s32.totalorder %s14, 0
    %p69 = por %p67, %p68
    %p70 = scmp.ne.s32.totalorder %s62, %s64
    %p71 = scmp.eq.s32.totalorder %s19, 1
    %p72 = por %p70, %p71
    %p73 = scmp.ne.s32.totalorder %s64, %s65
    %p74 = scmp.eq.s32.totalorder %s19, 0
    %p75 = por %p73, %p74
    %p76 = scmp.ne.s32.totalorder %s64, %s65
    %p77 = scmp.eq.s32.totalorder %s20, 1
    %p78 = por %p76, %p77
    %p80 = scmp.ne.s32.totalorder %s65, %s79
    %p81 = scmp.eq.s32.totalorder %s20, 0
    %p82 = por %p80, %p81
    %s84 = sadd.s32 %s83, 1
    %p87 = scmp.eq.s32.totalorder %s14, 1
    %p88 = scmp.ne.s32.totalorder %s83, %s85
    %p89 = scmp.eq.s32.totalorder %s14, 0
    %p90 = por %p88, %p89
    %p91 = scmp.ne.s32.totalorder %s83, %s85
    %p92 = scmp.eq.s32.totalorder %s19, 1
    %p93 = por %p91, %p92
    %p94 = scmp.ne.s32.totalorder %s85, %s86
    %p95 = scmp.eq.s32.totalorder %s19, 0
    %p96 = por %p94, %p95
    %p97 = scmp.ne.s32.totalorder %s85, %s86
    %p98 = scmp.eq.s32.totalorder %s20, 1
    %p99 = por %p97, %p98
    %p101 = scmp.ne.s32.totalorder %s86, %s100
    %p102 = scmp.eq.s32.totalorder %s20, 0
    %p103 = por %p101, %p102
    %s105 = sadd.s32 %s104, 1
    %p108 = scmp.eq.s32.totalorder %s14, 1
    %p109 = scmp.ne.s32.totalorder %s104, %s106
    %p110 = scmp.eq.s32.totalorder %s14, 0
    %p111 = por %p109, %p110
    %p112 = scmp.ne.s32.totalorder %s104, %s106
    %p113 = scmp.eq.s32.totalorder %s19, 1
    %p114 = por %p112, %p113
    %p115 = scmp.ne.s32.totalorder %s106, %s107
    %p116 = scmp.eq.s32.totalorder %s19, 0
    %p117 = por %p115, %p116
    %p118 = scmp.ne.s32.totalorder %s106, %s107
    %p119 = scmp.eq.s32.totalorder %s20, 1
    %p120 = por %p118, %p119
    %p122 = scmp.ne.s32.totalorder %s107, %s121
    %p123 = scmp.eq.s32.totalorder %s20, 0
    %p124 = por %p122, %p123
    %s126 = sadd.s32 %s125, 1
    %p129 = scmp.eq.s32.totalorder %s14, 1
    %p130 = scmp.ne.s32.totalorder %s125, %s127
    %p131 = scmp.eq.s32.totalorder %s14, 0
    %p132 = por %p130, %p131
    %p133 = scmp.ne.s32.totalorder %s125, %s127
    %p134 = scmp.eq.s32.totalorder %s19, 1
    %p135 = por %p133, %p134
    %p136 = scmp.ne.s32.totalorder %s127, %s128
    %p137 = scmp.eq.s32.totalorder %s19, 0
    %p138 = por %p136, %p137
    %p139 = scmp.ne.s32.totalorder %s127, %s128
    %p140 = scmp.eq.s32.totalorder %s20, 1
    %p141 = por %p139, %p140
    %p143 = scmp.ne.s32.totalorder %s128, %s142
    %p144 = scmp.eq.s32.totalorder %s20, 0
    %p145 = por %p143, %p144
    %s147 = sadd.s32 %s146, 1
    %p150 = scmp.eq.s32.totalorder %s14, 1
    %p151 = scmp.ne.s32.totalorder %s146, %s148
    %p152 = scmp.eq.s32.totalorder %s14, 0
    %p153 = por %p151, %p152
    %p154 = scmp.ne.s32.totalorder %s146, %s148
    %p155 = scmp.eq.s32.totalorder %s19, 1
    %p156 = por %p154, %p155
    %p157 = scmp.ne.s32.totalorder %s148, %s149
    %p158 = scmp.eq.s32.totalorder %s19, 0
    %p159 = por %p157, %p158
    %p160 = scmp.ne.s32.totalorder %s148, %s149
    %p161 = scmp.eq.s32.totalorder %s20, 1
    %p162 = por %p160, %p161
    %p164 = scmp.ne.s32.totalorder %s149, %s163
    %p165 = scmp.eq.s32.totalorder %s20, 0
    %p166 = por %p164, %p165
    %s167 = ssub.s32 %s21, %s33
    %s168 = ssub.s32 %s22, %s29
    %s169 = sor.u32 %s167, %s168
    %p170 = scmp.eq.s32.totalorder %s169, 0
    %s172 = sadd.s32 %s171, 1
    %s173 = scalar_select %p170, %s171, %s172
    %p176 = pneg %p170
    %p177 = scmp.eq.s32.totalorder %s14, 1
    %p178 = por %p176, %p177
    %p179 = scmp.ne.s32.totalorder %s171, %s174
    %p180 = scmp.eq.s32.totalorder %s14, 0
    %p181 = por %p179, %p180
    %p182 = scmp.ne.s32.totalorder %s171, %s174
    %p183 = scmp.eq.s32.totalorder %s19, 1
    %p184 = por %p182, %p183
    %p185 = scmp.ne.s32.totalorder %s174, %s175
    %p186 = scmp.eq.s32.totalorder %s19, 0
    %p187 = por %p185, %p186
    %p188 = scmp.ne.s32.totalorder %s174, %s175
    %p189 = scmp.eq.s32.totalorder %s20, 1
    %p190 = por %p188, %p189
    %p192 = scmp.ne.s32.totalorder %s175, %s191
    %p193 = scmp.eq.s32.totalorder %s20, 0
    %p194 = por %p192, %p193
    %s195 = ssub.s32 %s21, %s33
    %s196 = ssub.s32 %s22, %s29
    %s197 = sor.u32 %s195, %s196
    %p198 = scmp.eq.s32.totalorder %s197, 0
    %s200 = sadd.s32 %s199, 1
    %s201 = scalar_select %p198, %s199, %s200
    %p204 = pneg %p198
    %p205 = scmp.eq.s32.totalorder %s14, 1
    %p206 = por %p204, %p205
    %p207 = scmp.ne.s32.totalorder %s199, %s202
    %p208 = scmp.eq.s32.totalorder %s14, 0
    %p209 = por %p207, %p208
    %p210 = scmp.ne.s32.totalorder %s199, %s202
    %p211 = scmp.eq.s32.totalorder %s19, 1
    %p212 = por %p210, %p211
    %p213 = scmp.ne.s32.totalorder %s202, %s203
    %p214 = scmp.eq.s32.totalorder %s19, 0
    %p215 = por %p213, %p214
    %p216 = scmp.ne.s32.totalorder %s202, %s203
    %p217 = scmp.eq.s32.totalorder %s20, 1
    %p218 = por %p216, %p217
    %p220 = scmp.ne.s32.totalorder %s203, %s219
    %p221 = scmp.eq.s32.totalorder %s20, 0
    %p222 = por %p220, %p221
    %p223 = scmp.le.s32.totalorder 1, %s14
    %p224 = scmp.lt.s32.totalorder %s14, 3
    %p225 = pnand %p223, %p224
    %p226 = pneg %p225
    // Predicated region
    $region9: #{cnn_1d_forward.11} parent=5 // pred_check
      _
    $region10: #{cnn_1d_forward.11} parent=5 // pred_check_branch
      %228 = sbr.rel (%p225) target = $region12
    $region11: #{cnn_1d_forward.11} parent=5 // pred_region
      %s229 = ssub.s32 %s14, 1
      // Predicated region
      $region13: #{cnn_1d_forward.11} parent=11 // pred_check
        %p230 = pneg %p75
      $region14: #{cnn_1d_forward.11} parent=11 // pred_check_branch
        %232 = sbr.rel (%p230) target = $region16
      $region15: #{cnn_1d_forward.11} parent=11 // pred_region
        _
      $region16: #{cnn_1d_forward.11} parent=11 // pred_fallthru
        _
      // Predicated region
      $region17: #{cnn_1d_forward.11} parent=11 // pred_check
        %p233 = pneg %p96
      $region18: #{cnn_1d_forward.11} parent=11 // pred_check_branch
        %235 = sbr.rel (%p233) target = $region20
      $region19: #{cnn_1d_forward.11} parent=11 // pred_region
        _
      $region20: #{cnn_1d_forward.11} parent=11 // pred_fallthru
        _
      // Predicated region
      $region21: #{cnn_1d_forward.11} parent=11 // pred_check
        %p236 = pneg %p117
      $region22: #{cnn_1d_forward.11} parent=11 // pred_check_branch
        %238 = sbr.rel (%p236) target = $region24
      $region23: #{cnn_1d_forward.11} parent=11 // pred_region
        _
      $region24: #{cnn_1d_forward.11} parent=11 // pred_fallthru
        _
      // Predicated region
      $region25: #{cnn_1d_forward.11} parent=11 // pred_check
        %p239 = pneg %p138
      $region26: #{cnn_1d_forward.11} parent=11 // pred_check_branch
        %241 = sbr.rel (%p239) target = $region28
      $region27: #{cnn_1d_forward.11} parent=11 // pred_region
        _
      $region28: #{cnn_1d_forward.11} parent=11 // pred_fallthru
        _
      // Predicated region
      $region29: #{cnn_1d_forward.11} parent=11 // pred_check
        %p242 = pneg %p159
      $region30: #{cnn_1d_forward.11} parent=11 // pred_check_branch
        %244 = sbr.rel (%p242) target = $region32
      $region31: #{cnn_1d_forward.11} parent=11 // pred_region
        _
      $region32: #{cnn_1d_forward.11} parent=11 // pred_fallthru
        _
    $region12: #{cnn_1d_forward.11} parent=5 // pred_fallthru
      _
    %p245 = scmp.lt.s32.totalorder %s14, 2
    // Predicated region
    $region33: #{cnn_1d_forward.11} parent=5 // pred_check
      %p246 = pneg %p245
    $region34: #{cnn_1d_forward.11} parent=5 // pred_check_branch
      %248 = sbr.rel (%p246) target = $region36
    $region35: #{cnn_1d_forward.11} parent=5 // pred_region
      // Predicated region
      $region37: #{cnn_1d_forward.11} parent=35 // pred_check
        %p249 = pneg %p48
      $region38: #{cnn_1d_forward.11} parent=35 // pred_check_branch
        %251 = sbr.rel (%p249) target = $region40
      $region39: #{cnn_1d_forward.11} parent=35 // pred_region
        %p252 = scmp.lt.s32.totalorder %s21, 1
        %s253 = scalar_select %p252, %s21, 1
        %p254 = scmp.lt.s32.totalorder %s22, 0
        %s255 = scalar_select %p254, %s22, 0
        %s256 = smul.addr %s255, 3
        %s257 = smul.addr %s253, 3
        %s258 = sadd.s32 %s256, %s257
        %s259 = smul.addr %s258, 4
        %s260 = scalar_lea.vmem %s0, %s259
      $region40: #{cnn_1d_forward.11} parent=35 // pred_fallthru
        _
    $region36: #{cnn_1d_forward.11} parent=5 // pred_fallthru
      _
    %p261 = scmp.le.s32.totalorder 1, %s14
    %p262 = scmp.lt.s32.totalorder %s14, 3
    %p263 = pnand %p261, %p262
    %p264 = pneg %p263
    // Predicated region
    $region41: #{cnn_1d_forward.11} parent=5 // pred_check
      _
    $region42: #{cnn_1d_forward.11} parent=5 // pred_check_branch
      %266 = sbr.rel (%p263) target = $region44
    $region43: #{cnn_1d_forward.11} parent=5 // pred_region
      %s267 = ssub.s32 %s14, 1
      %p268 = scmp.lt.s32.totalorder %s23, 1
      %s269 = scalar_select %p268, %s23, 1
      %p270 = scmp.lt.s32.totalorder %s24, 0
      %s271 = scalar_select %p270, %s24, 0
      %s272 = smul.addr %s271, 3
      %s273 = smul.addr %s269, 3
      %s274 = sadd.s32 %s272, %s273
      %s275 = smul.addr %s274, 4
      %s276 = scalar_lea.vmem %s0, %s275
      %p277 = pneg %p54
      %p278 = pneg %p51
      %p279 = pneg %p75
      %p280 = pneg %p72
      %p281 = pneg %p96
      %p282 = pneg %p93
      %p283 = pneg %p117
      %p284 = pneg %p114
      %p285 = pneg %p138
      %p286 = pneg %p135
      %p287 = pneg %p159
      %p288 = pneg %p156
      %p289 = pneg %p187
      %p290 = pneg %p184
      %p291 = scmp.lt.s32.totalorder %s23, 1
      %s292 = scalar_select %p291, %s23, 1
      %p293 = scmp.lt.s32.totalorder %s24, 0
      %s294 = scalar_select %p293, %s24, 0
      %s295 = sadd.s32 %s294, %s292
      %s296 = smul.addr %s295, 4
      %s297 = scalar_lea.vmem %s6, %s296
      %p298 = pneg %p215
      %p299 = pneg %p212
      %p300 = scmp.lt.s32.totalorder %s23, 1
      %s301 = scalar_select %p300, %s23, 1
      %p302 = scmp.lt.s32.totalorder %s24, 0
      %s303 = scalar_select %p302, %s24, 0
      %s304 = sadd.s32 %s303, %s301
      %s305 = smul.addr %s304, 4
      %s306 = scalar_lea.vmem %s7, %s305
      %p307 = scmp.lt.s32.totalorder %s23, 1
      %s308 = scalar_select %p307, %s23, 1
      %p309 = scmp.lt.s32.totalorder %s24, 0
      %s310 = scalar_select %p309, %s24, 0
      %s311 = smul.addr %s310, 3
      %s312 = smul.addr %s308, 3
      %s313 = sadd.s32 %s311, %s312
      %s314 = smul.addr %s313, 4
      %s315 = scalar_lea.vmem %s0, %s314
      %p316 = scmp.lt.s32.totalorder %s23, 1
      %s317 = scalar_select %p316, %s23, 1
      %p318 = scmp.lt.s32.totalorder %s24, 0
      %s319 = scalar_select %p318, %s24, 0
      %s320 = sadd.s32 %s319, %s317
      %s321 = smul.addr %s320, 4
      %s322 = scalar_lea.vmem %s6, %s321
      %p323 = scmp.lt.s32.totalorder %s23, 1
      %s324 = scalar_select %p323, %s23, 1
      %p325 = scmp.lt.s32.totalorder %s24, 0
      %s326 = scalar_select %p325, %s24, 0
      %s327 = sadd.s32 %s326, %s324
      %s328 = smul.addr %s327, 4
      %s329 = scalar_lea.vmem %s7, %s328
      %v331 = vld [vmem:[%s315] sm:$0xf]
      %v332 = vld [vmem:[%s1] sm:$0xf]
      %v333 = vld [vmem:[%s1 + $0x4] sm:$0xf]
      %v334 = vld [vmem:[%s1 + $0x8] sm:$0xf]
      %v335 = vld [vmem:[%s1 + $0xc] sm:$0xf]
      %v336 = vld [vmem:[%s1 + $0x10] sm:$0xf]
      %v337 = vld [vmem:[%s1 + $0x14] sm:$0xf]
      %v338 = vld [vmem:[%s1 + $0x18] sm:$0xf]
      %v339 = vld [vmem:[%s1 + $0x1c] sm:$0xf]
      %v340 = vld [vmem:[%s1 + $0x20] sm:$0xf]
      %v341 = vld [vmem:[%s1 + $0x24] sm:$0xf]
      %v342 = vld [vmem:[%s1 + $0x28] sm:$0xf]
      %v343 = vld [vmem:[%s1 + $0x2c] sm:$0xf]
      %v344 = vld [vmem:[%s1 + $0x30] sm:$0xf]
      %v345 = vld [vmem:[%s1 + $0x34] sm:$0xf]
      %v346 = vld [vmem:[%s1 + $0x38] sm:$0xf]
      %v347 = vld [vmem:[%s1 + $0x3c] sm:$0xf]
      %v348 = vld [vmem:[%s315 + $0x4] sm:$0xf]
      %s349 = scalar_lea.vmem %s1, 64
      %v350 = vld [vmem:[%s349] sm:$0xf]
      %v351 = vld [vmem:[%s349 + $0x4] sm:$0xf]
      %v352 = vld [vmem:[%s349 + $0x8] sm:$0xf]
      %v353 = vld [vmem:[%s349 + $0xc] sm:$0xf]
      %v354 = vld [vmem:[%s349 + $0x10] sm:$0xf]
      %v355 = vld [vmem:[%s349 + $0x14] sm:$0xf]
      %v356 = vld [vmem:[%s349 + $0x18] sm:$0xf]
      %v357 = vld [vmem:[%s349 + $0x1c] sm:$0xf]
      %v358 = vld [vmem:[%s349 + $0x20] sm:$0xf]
      %v359 = vld [vmem:[%s349 + $0x24] sm:$0xf]
      %v360 = vld [vmem:[%s349 + $0x28] sm:$0xf]
      %v361 = vld [vmem:[%s349 + $0x2c] sm:$0xf]
      %v362 = vld [vmem:[%s349 + $0x30] sm:$0xf]
      %v363 = vld [vmem:[%s349 + $0x34] sm:$0xf]
      %v364 = vld [vmem:[%s349 + $0x38] sm:$0xf]
      %v365 = vld [vmem:[%s349 + $0x3c] sm:$0xf]
      %v382 = vunpack.c.l.b16 %v350
      %v383 = vunpack.c.l.b16 %v351
      %v384 = vunpack.c.l.b16 %v352
      %v385 = vunpack.c.l.b16 %v353
      %v386 = vunpack.c.l.b16 %v354
      %v387 = vunpack.c.l.b16 %v355
      %v388 = vunpack.c.l.b16 %v356
      %v389 = vunpack.c.l.b16 %v357
      %v390 = vunpack.c.l.b16 %v358
      %v391 = vunpack.c.l.b16 %v359
      %v392 = vunpack.c.l.b16 %v360
      %v393 = vunpack.c.l.b16 %v361
      %v394 = vunpack.c.l.b16 %v362
      %v395 = vunpack.c.l.b16 %v363
      %v396 = vunpack.c.l.b16 %v364
      %v397 = vunpack.c.l.b16 %v365
      %v398 = vpack.c.b16 %v383, %v382
      %v399 = vpack.c.b16 %v385, %v384
      %v400 = vpack.c.b16 %v387, %v386
      %v401 = vpack.c.b16 %v389, %v388
      %v402 = vpack.c.b16 %v391, %v390
      %v403 = vpack.c.b16 %v393, %v392
      %v404 = vpack.c.b16 %v395, %v394
      %v405 = vpack.c.b16 %v397, %v396
      %414 = vmatprep.subr.bf16.mxu0 0
      %415 = vmatpush1.bf16.msra.mxu0 %v398
      %416 = vmatprep.subr.bf16.mxu0 0
      %417 = vmatpush1.bf16.msra.mxu0 %v399
      %418 = vmatprep.subr.bf16.mxu0 0
      %419 = vmatpush1.bf16.msra.mxu0 %v400
      %420 = vmatprep.subr.bf16.mxu0 0
      %421 = vmatpush1.bf16.msra.mxu0 %v401
      %422 = vmatprep.subr.bf16.mxu0 0
      %423 = vmatpush1.bf16.msra.mxu0 %v402
      %424 = vmatprep.subr.bf16.mxu0 0
      %425 = vmatpush1.bf16.msra.mxu0 %v403
      %426 = vmatprep.subr.bf16.mxu0 0
      %427 = vmatpush1.bf16.msra.mxu0 %v404
      %428 = vmatprep.subr.bf16.mxu0 0
      %429 = vmatpush1.bf16.msra.mxu0 %v405
      %430 = vmatprep.subr.bf16.mxu0 0
      %431 = vmatpush1.bf16.msra.mxu0 0
      %432 = vmatprep.subr.bf16.mxu0 0
      %433 = vmatpush1.bf16.msra.mxu0 0
      %434 = vmatprep.subr.bf16.mxu0 0
      %435 = vmatpush1.bf16.msra.mxu0 0
      %436 = vmatprep.subr.bf16.mxu0 0
      %437 = vmatpush1.bf16.msra.mxu0 0
      %438 = vmatprep.subr.bf16.mxu0 0
      %439 = vmatpush1.bf16.msra.mxu0 0
      %440 = vmatprep.subr.bf16.mxu0 0
      %441 = vmatpush1.bf16.msra.mxu0 0
      %442 = vmatprep.subr.bf16.mxu0 0
      %443 = vmatpush1.bf16.msra.mxu0 0
      %444 = vmatprep.subr.bf16.mxu0 0
      %445 = vmatpush1.bf16.msra.mxu0 0
      %446 = vmatprep.mubr.bf16.mxu0 0
      %447 = vmatmul.mubr.bf16.gmra.mrb[0].mxu0 %v348
      %v448 = vpop.f32.mrb[0].mxu0
      %v449 = vadd.f32 0.0, %v448
      %v450 = vpop.f32.mrb[0].mxu0
      %v451 = vpop.f32.mrb[0].mxu0
      %v452 = vpop.f32.mrb[0].mxu0
      %453 = vdwg.mxu0
      %v470 = vunpack.c.l.b16 %v332
      %v471 = vunpack.c.l.b16 %v333
      %v472 = vunpack.c.l.b16 %v334
      %v473 = vunpack.c.l.b16 %v335
      %v474 = vunpack.c.l.b16 %v336
      %v475 = vunpack.c.l.b16 %v337
      %v476 = vunpack.c.l.b16 %v338
      %v477 = vunpack.c.l.b16 %v339
      %v478 = vunpack.c.l.b16 %v340
      %v479 = vunpack.c.l.b16 %v341
      %v480 = vunpack.c.l.b16 %v342
      %v481 = vunpack.c.l.b16 %v343
      %v482 = vunpack.c.l.b16 %v344
      %v483 = vunpack.c.l.b16 %v345
      %v484 = vunpack.c.l.b16 %v346
      %v485 = vunpack.c.l.b16 %v347
      %v486 = vpack.c.b16 %v471, %v470
      %v487 = vpack.c.b16 %v473, %v472
      %v488 = vpack.c.b16 %v475, %v474
      %v489 = vpack.c.b16 %v477, %v476
      %v490 = vpack.c.b16 %v479, %v478
      %v491 = vpack.c.b16 %v481, %v480
      %v492 = vpack.c.b16 %v483, %v482
      %v493 = vpack.c.b16 %v485, %v484
      %502 = vmatprep.subr.bf16.mxu0 0
      %503 = vmatpush1.bf16.msra.mxu0 %v486
      %504 = vmatprep.subr.bf16.mxu0 0
      %505 = vmatpush1.bf16.msra.mxu0 %v487
      %506 = vmatprep.subr.bf16.mxu0 0
      %507 = vmatpush1.bf16.msra.mxu0 %v488
      %508 = vmatprep.subr.bf16.mxu0 0
      %509 = vmatpush1.bf16.msra.mxu0 %v489
      %510 = vmatprep.subr.bf16.mxu0 0
      %511 = vmatpush1.bf16.msra.mxu0 %v490
      %512 = vmatprep.subr.bf16.mxu0 0
      %513 = vmatpush1.bf16.msra.mxu0 %v491
      %514 = vmatprep.subr.bf16.mxu0 0
      %515 = vmatpush1.bf16.msra.mxu0 %v492
      %516 = vmatprep.subr.bf16.mxu0 0
      %517 = vmatpush1.bf16.msra.mxu0 %v493
      %518 = vmatprep.subr.bf16.mxu0 0
      %519 = vmatpush1.bf16.msra.mxu0 0
      %520 = vmatprep.subr.bf16.mxu0 0
      %521 = vmatpush1.bf16.msra.mxu0 0
      %522 = vmatprep.subr.bf16.mxu0 0
      %523 = vmatpush1.bf16.msra.mxu0 0
      %524 = vmatprep.subr.bf16.mxu0 0
      %525 = vmatpush1.bf16.msra.mxu0 0
      %526 = vmatprep.subr.bf16.mxu0 0
      %527 = vmatpush1.bf16.msra.mxu0 0
      %528 = vmatprep.subr.bf16.mxu0 0
      %529 = vmatpush1.bf16.msra.mxu0 0
      %530 = vmatprep.subr.bf16.mxu0 0
      %531 = vmatpush1.bf16.msra.mxu0 0
      %532 = vmatprep.subr.bf16.mxu0 0
      %533 = vmatpush1.bf16.msra.mxu0 0
      %534 = vmatprep.mubr.bf16.mxu0 0
      %535 = vmatmul.mubr.bf16.gmra.mrb[0].mxu0 %v331
      %v536 = vpop.f32.mrb[0].mxu0
      %v537 = vadd.f32 %v449, %v536
      %v538 = vpop.f32.mrb[0].mxu0
      %v539 = vpop.f32.mrb[0].mxu0
      %v540 = vpop.f32.mrb[0].mxu0
      %541 = vdwg.mxu0
      %v542 = vld [vmem:[%s315 + $0x8] sm:$0xf]
      %s543 = scalar_lea.vmem %s1, 128
      %v544 = vld [vmem:[%s543] sm:$0xf]
      %v545 = vld [vmem:[%s543 + $0x4] sm:$0xf]
      %v546 = vld [vmem:[%s543 + $0x8] sm:$0xf]
      %v547 = vld [vmem:[%s543 + $0xc] sm:$0xf]
      %v548 = vld [vmem:[%s543 + $0x10] sm:$0xf]
      %v549 = vld [vmem:[%s543 + $0x14] sm:$0xf]
      %v550 = vld [vmem:[%s543 + $0x18] sm:$0xf]
      %v551 = vld [vmem:[%s543 + $0x1c] sm:$0xf]
      %v552 = vld [vmem:[%s543 + $0x20] sm:$0xf]
      %v553 = vld [vmem:[%s543 + $0x24] sm:$0xf]
      %v554 = vld [vmem:[%s543 + $0x28] sm:$0xf]
      %v555 = vld [vmem:[%s543 + $0x2c] sm:$0xf]
      %v556 = vld [vmem:[%s543 + $0x30] sm:$0xf]
      %v557 = vld [vmem:[%s543 + $0x34] sm:$0xf]
      %v558 = vld [vmem:[%s543 + $0x38] sm:$0xf]
      %v559 = vld [vmem:[%s543 + $0x3c] sm:$0xf]
      %v576 = vunpack.c.l.b16 %v544
      %v577 = vunpack.c.l.b16 %v545
      %v578 = vunpack.c.l.b16 %v546
      %v579 = vunpack.c.l.b16 %v547
      %v580 = vunpack.c.l.b16 %v548
      %v581 = vunpack.c.l.b16 %v549
      %v582 = vunpack.c.l.b16 %v550
      %v583 = vunpack.c.l.b16 %v551
      %v584 = vunpack.c.l.b16 %v552
      %v585 = vunpack.c.l.b16 %v553
      %v586 = vunpack.c.l.b16 %v554
      %v587 = vunpack.c.l.b16 %v555
      %v588 = vunpack.c.l.b16 %v556
      %v589 = vunpack.c.l.b16 %v557
      %v590 = vunpack.c.l.b16 %v558
      %v591 = vunpack.c.l.b16 %v559
      %v592 = vpack.c.b16 %v577, %v576
      %v593 = vpack.c.b16 %v579, %v578
      %v594 = vpack.c.b16 %v581, %v580
      %v595 = vpack.c.b16 %v583, %v582
      %v596 = vpack.c.b16 %v585, %v584
      %v597 = vpack.c.b16 %v587, %v586
      %v598 = vpack.c.b16 %v589, %v588
      %v599 = vpack.c.b16 %v591, %v590
      %608 = vmatprep.subr.bf16.mxu0 0
      %609 = vmatpush1.bf16.msra.mxu0 %v592
      %610 = vmatprep.subr.bf16.mxu0 0
      %611 = vmatpush1.bf16.msra.mxu0 %v593
      %612 = vmatprep.subr.bf16.mxu0 0
      %613 = vmatpush1.bf16.msra.mxu0 %v594
      %614 = vmatprep.subr.bf16.mxu0 0
      %615 = vmatpush1.bf16.msra.mxu0 %v595
      %616 = vmatprep.subr.bf16.mxu0 0
      %617 = vmatpush1.bf16.msra.mxu0 %v596
      %618 = vmatprep.subr.bf16.mxu0 0
      %619 = vmatpush1.bf16.msra.mxu0 %v597
      %620 = vmatprep.subr.bf16.mxu0 0
      %621 = vmatpush1.bf16.msra.mxu0 %v598
      %622 = vmatprep.subr.bf16.mxu0 0
      %623 = vmatpush1.bf16.msra.mxu0 %v599
      %624 = vmatprep.subr.bf16.mxu0 0
      %625 = vmatpush1.bf16.msra.mxu0 0
      %626 = vmatprep.subr.bf16.mxu0 0
      %627 = vmatpush1.bf16.msra.mxu0 0
      %628 = vmatprep.subr.bf16.mxu0 0
      %629 = vmatpush1.bf16.msra.mxu0 0
      %630 = vmatprep.subr.bf16.mxu0 0
      %631 = vmatpush1.bf16.msra.mxu0 0
      %632 = vmatprep.subr.bf16.mxu0 0
      %633 = vmatpush1.bf16.msra.mxu0 0
      %634 = vmatprep.subr.bf16.mxu0 0
      %635 = vmatpush1.bf16.msra.mxu0 0
      %636 = vmatprep.subr.bf16.mxu0 0
      %637 = vmatpush1.bf16.msra.mxu0 0
      %638 = vmatprep.subr.bf16.mxu0 0
      %639 = vmatpush1.bf16.msra.mxu0 0
      %640 = vmatprep.mubr.bf16.mxu0 0
      %641 = vmatmul.mubr.bf16.gmra.mrb[0].mxu0 %v542
      %v642 = vpop.f32.mrb[0].mxu0
      %v643 = vadd.f32 0.0, %v642
      %v644 = vpop.f32.mrb[0].mxu0
      %v645 = vpop.f32.mrb[0].mxu0
      %v646 = vpop.f32.mrb[0].mxu0
      %647 = vdwg.mxu0
      %v648 = vadd.f32 %v537, %v643
      %v649 = vld [vmem:[%s2] sm:$0x1]
      %v651 = vlaneseq
      %v652 = vshrl.u32 %v651, 7
      %v653 = vsub.s32 0, %v652
      %v654 = vrot.slane %v649, %v653
      %v656 = vmul.f32 %v648, %v654
      %v657 = vld [vmem:[%s3] sm:$0x1]
      %v659 = vlaneseq
      %v660 = vshrl.u32 %v659, 7
      %v661 = vsub.s32 0, %v660
      %v662 = vrot.slane %v657, %v661
      %v664 = vadd.f32 %v656, %v662
      %v665 = vmax.f32 %v664, 0.0
      %v666 = vpack.c.bf16 %v665, %v665
      %667 = vst [vmem:[%s322] sm:$0xf] %v666
      %v668 = vld [vmem:[%s315 + $0x4] sm:$0xf]
      %v669 = vld [vmem:[%s4] sm:$0xf]
      %v670 = vld [vmem:[%s4 + $0x4] sm:$0xf]
      %v671 = vld [vmem:[%s4 + $0x8] sm:$0xf]
      %v672 = vld [vmem:[%s4 + $0xc] sm:$0xf]
      %v673 = vld [vmem:[%s4 + $0x10] sm:$0xf]
      %v674 = vld [vmem:[%s4 + $0x14] sm:$0xf]
      %v675 = vld [vmem:[%s4 + $0x18] sm:$0xf]
      %v676 = vld [vmem:[%s4 + $0x1c] sm:$0xf]
      %v677 = vld [vmem:[%s4 + $0x20] sm:$0xf]
      %v678 = vld [vmem:[%s4 + $0x24] sm:$0xf]
      %v679 = vld [vmem:[%s4 + $0x28] sm:$0xf]
      %v680 = vld [vmem:[%s4 + $0x2c] sm:$0xf]
      %v681 = vld [vmem:[%s4 + $0x30] sm:$0xf]
      %v682 = vld [vmem:[%s4 + $0x34] sm:$0xf]
      %v683 = vld [vmem:[%s4 + $0x38] sm:$0xf]
      %v684 = vld [vmem:[%s4 + $0x3c] sm:$0xf]
      %v685 = vld [vmem:[%s5] sm:$0x1]
      %v687 = vlaneseq
      %v688 = vshrl.u32 %v687, 7
      %v689 = vsub.s32 0, %v688
      %v690 = vrot.slane %v685, %v689
      %v708 = vunpack.c.l.b16 %v669
      %v709 = vunpack.c.l.b16 %v670
      %v710 = vunpack.c.l.b16 %v671
      %v711 = vunpack.c.l.b16 %v672
      %v712 = vunpack.c.l.b16 %v673
      %v713 = vunpack.c.l.b16 %v674
      %v714 = vunpack.c.l.b16 %v675
      %v715 = vunpack.c.l.b16 %v676
      %v716 = vunpack.c.l.b16 %v677
      %v717 = vunpack.c.l.b16 %v678
      %v718 = vunpack.c.l.b16 %v679
      %v719 = vunpack.c.l.b16 %v680
      %v720 = vunpack.c.l.b16 %v681
      %v721 = vunpack.c.l.b16 %v682
      %v722 = vunpack.c.l.b16 %v683
      %v723 = vunpack.c.l.b16 %v684
      %v724 = vpack.c.b16 %v709, %v708
      %v725 = vpack.c.b16 %v711, %v710
      %v726 = vpack.c.b16 %v713, %v712
      %v727 = vpack.c.b16 %v715, %v714
      %v728 = vpack.c.b16 %v717, %v716
      %v729 = vpack.c.b16 %v719, %v718
      %v730 = vpack.c.b16 %v721, %v720
      %v731 = vpack.c.b16 %v723, %v722
      %740 = vmatprep.subr.bf16.mxu0 0
      %741 = vmatpush1.bf16.msra.mxu0 %v724
      %742 = vmatprep.subr.bf16.mxu0 0
      %743 = vmatpush1.bf16.msra.mxu0 %v725
      %744 = vmatprep.subr.bf16.mxu0 0
      %745 = vmatpush1.bf16.msra.mxu0 %v726
      %746 = vmatprep.subr.bf16.mxu0 0
      %747 = vmatpush1.bf16.msra.mxu0 %v727
      %748 = vmatprep.subr.bf16.mxu0 0
      %749 = vmatpush1.bf16.msra.mxu0 %v728
      %750 = vmatprep.subr.bf16.mxu0 0
      %751 = vmatpush1.bf16.msra.mxu0 %v729
      %752 = vmatprep.subr.bf16.mxu0 0
      %753 = vmatpush1.bf16.msra.mxu0 %v730
      %754 = vmatprep.subr.bf16.mxu0 0
      %755 = vmatpush1.bf16.msra.mxu0 %v731
      %756 = vmatprep.subr.bf16.mxu0 0
      %757 = vmatpush1.bf16.msra.mxu0 0
      %758 = vmatprep.subr.bf16.mxu0 0
      %759 = vmatpush1.bf16.msra.mxu0 0
      %760 = vmatprep.subr.bf16.mxu0 0
      %761 = vmatpush1.bf16.msra.mxu0 0
      %762 = vmatprep.subr.bf16.mxu0 0
      %763 = vmatpush1.bf16.msra.mxu0 0
      %764 = vmatprep.subr.bf16.mxu0 0
      %765 = vmatpush1.bf16.msra.mxu0 0
      %766 = vmatprep.subr.bf16.mxu0 0
      %767 = vmatpush1.bf16.msra.mxu0 0
      %768 = vmatprep.subr.bf16.mxu0 0
      %769 = vmatpush1.bf16.msra.mxu0 0
      %770 = vmatprep.subr.bf16.mxu0 0
      %771 = vmatpush1.bf16.msra.mxu0 0
      %772 = vmatprep.mubr.bf16.mxu0 0
      %773 = vmatmul.mubr.bf16.gmra.mrb[0].mxu0 %v668
      %v774 = vpop.f32.mrb[0].mxu0
      %v775 = vadd.f32 %v690, %v774
      %v776 = vpop.f32.mrb[0].mxu0
      %v777 = vpop.f32.mrb[0].mxu0
      %v778 = vpop.f32.mrb[0].mxu0
      %779 = vdwg.mxu0
      %v780 = vpack.c.bf16 %v775, %v775
      %781 = vst [vmem:[%s329] sm:$0xf] %v780
      %p782 = scmp.lt.s32.totalorder %s23, 1
      %s783 = scalar_select %p782, %s23, 1
      %p784 = scmp.lt.s32.totalorder %s24, 0
      %s785 = scalar_select %p784, %s24, 0
      %s786 = sadd.s32 %s785, %s783
      %s787 = smul.addr %s786, 4
      %s788 = scalar_lea.vmem %s6, %s787
      %p789 = scmp.lt.s32.totalorder %s23, 1
      %s790 = scalar_select %p789, %s23, 1
      %p791 = scmp.lt.s32.totalorder %s24, 0
      %s792 = scalar_select %p791, %s24, 0
      %s793 = sadd.s32 %s792, %s790
      %s794 = smul.addr %s793, 4
      %s795 = scalar_lea.vmem %s7, %s794
      // Predicated region
      $region45: #{cnn_1d_forward.11} parent=43 // pred_check
        %p796 = pneg %p184
      $region46: #{cnn_1d_forward.11} parent=43 // pred_check_branch
        %798 = sbr.rel (%p796) target = $region48
      $region47: #{cnn_1d_forward.11} parent=43 // pred_region
        _
      $region48: #{cnn_1d_forward.11} parent=43 // pred_fallthru
        _
      // Predicated region
      $region49: #{cnn_1d_forward.11} parent=43 // pred_check
        %p799 = pneg %p212
      $region50: #{cnn_1d_forward.11} parent=43 // pred_check_branch
        %801 = sbr.rel (%p799) target = $region52
      $region51: #{cnn_1d_forward.11} parent=43 // pred_region
        _
      $region52: #{cnn_1d_forward.11} parent=43 // pred_fallthru
        _
    $region44: #{cnn_1d_forward.11} parent=5 // pred_fallthru
      _
    %p802 = scmp.le.s32.totalorder 2, %s14
    // Predicated region
    $region53: #{cnn_1d_forward.11} parent=5 // pred_check
      %p803 = pneg %p802
    $region54: #{cnn_1d_forward.11} parent=5 // pred_check_branch
      %805 = sbr.rel (%p803) target = $region56
    $region55: #{cnn_1d_forward.11} parent=5 // pred_region
      %s806 = ssub.s32 %s14, 2
      // Predicated region
      $region57: #{cnn_1d_forward.11} parent=55 // pred_check
        %p807 = pneg %p190
      $region58: #{cnn_1d_forward.11} parent=55 // pred_check_branch
        %809 = sbr.rel (%p807) target = $region60
      $region59: #{cnn_1d_forward.11} parent=55 // pred_region
        %p810 = scmp.lt.s32.totalorder %s25, 1
        %s811 = scalar_select %p810, %s25, 1
        %p812 = scmp.lt.s32.totalorder %s26, 0
        %s813 = scalar_select %p812, %s26, 0
        %s814 = sadd.s32 %s813, %s811
        %s815 = smul.addr %s814, 4
        %s816 = scalar_lea.vmem %s6, %s815
      $region60: #{cnn_1d_forward.11} parent=55 // pred_fallthru
        _
      // Predicated region
      $region61: #{cnn_1d_forward.11} parent=55 // pred_check
        %p817 = pneg %p218
      $region62: #{cnn_1d_forward.11} parent=55 // pred_check_branch
        %819 = sbr.rel (%p817) target = $region64
      $region63: #{cnn_1d_forward.11} parent=55 // pred_region
        %p820 = scmp.lt.s32.totalorder %s25, 1
        %s821 = scalar_select %p820, %s25, 1
        %p822 = scmp.lt.s32.totalorder %s26, 0
        %s823 = scalar_select %p822, %s26, 0
        %s824 = sadd.s32 %s823, %s821
        %s825 = smul.addr %s824, 4
        %s826 = scalar_lea.vmem %s7, %s825
      $region64: #{cnn_1d_forward.11} parent=55 // pred_fallthru
        _
    $region56: #{cnn_1d_forward.11} parent=5 // pred_fallthru
      _
  $region6: #{cnn_1d_forward.11} parent=0 // loop_footer
    %s18 = sadd.s32 1, %s14
  $region7: #{cnn_1d_forward.11} parent=0 // loop_footer_branch
    %13 = sbr.rel target = $region3
  $region8: #{cnn_1d_forward.11} parent=0 // loop_exit
    _

// kernel: cnn_1d_forward.10
$region0: #{cnn_1d_forward.10}
  #allocation0 [shape = 'u32[]', space=smem, size = 0x4, offset = 0x4, fixed_abs, tag = 'smem constant byte address 0x4 - core index']
  #allocation1 [shape = 'u32[144,128]{1,0:T(1,128)}', space=vmem, size = 0x12000, scoped, tag = 'internal scratch']
  %s0 = inlined_call_operand.vmem [shape: bf16[2,1,22,128], index: 0, kind: input, shape index: {}]
  %s1 = inlined_call_operand.vmem [shape: bf16[5,128,128], index: 1, kind: input, shape index: {}]
  %s2 = inlined_call_operand.vmem [shape: f32[1,128], index: 2, kind: input, shape index: {}]
  %s3 = inlined_call_operand.vmem [shape: f32[1,128], index: 3, kind: input, shape index: {}]
  %s4 = inlined_call_operand.vmem [shape: bf16[2,16,128], index: 4, kind: output, shape index: {}]
  %s5 = sld [smem:[#allocation0]]
  $region49: #{cnn_1d_forward.10} parent=0
    _
  %s7 = ssub.s32 1, %s5
  %s8 = scalar_select 0, %s7, %s5
  loop: start=0, step=1, limit=4
  $region2: #{cnn_1d_forward.10} parent=0 // loop_pre_header
    _
  $region3: #{cnn_1d_forward.10} parent=0 // loop_header
    %s10 = sphi 0, %s14
    %p11 = scmp.ge.s32.totalorder %s10, 4
    %s17 = sphi 0, %s29
    %s18 = sphi 0, %s25
    %s19 = sphi 0, %s17
    %s20 = sphi 0, %s18
    %s21 = sphi 0, %s19
    %s22 = sphi 0, %s20
    %s34 = sphi 0, %s36
    %s37 = sphi 0, %s34
    %s38 = sphi 0, %s37
    %s54 = sphi 0, %s38
    %s58 = sphi 0, %s58
    %s60 = sphi 0, %s58
    %s61 = sphi 0, %s60
    %s75 = sphi 0, %s61
    %s79 = sphi 0, %s79
    %s81 = sphi 0, %s79
    %s82 = sphi 0, %s81
    %s96 = sphi 0, %s82
    %s100 = sphi 0, %s100
    %s102 = sphi 0, %s100
    %s103 = sphi 0, %s102
    %s117 = sphi 0, %s103
    %s125 = sphi 0, %s127
    %s128 = sphi 0, %s125
    %s129 = sphi 0, %s128
    %s145 = sphi 0, %s129
  $region4: #{cnn_1d_forward.10} parent=0 // loop_header_branch
    %13 = sbr.rel (%p11) target = $region8
  $region5: #{cnn_1d_forward.10} parent=0 // loop_body
    %s15 = ssub.s32 %s10, 1
    %s16 = ssub.s32 %s10, 2
    %s23 = sadd.s32 1, %s18
    %p24 = scmp.ge.s32.totalorder %s23, 1
    %s25 = scalar_select %p24, 0, %s23
    %s26 = sadd.s32 1, %s17
    %s27 = scalar_select %p24, %s26, %s17
    %p28 = scmp.ge.s32.totalorder %s27, 2
    %s29 = scalar_select %p28, 0, %s27
    %s30 = ssub.s32 %s17, %s29
    %s31 = ssub.s32 %s18, %s25
    %s32 = sor.u32 %s30, %s31
    %p33 = scmp.eq.s32.totalorder %s32, 0
    %s35 = sadd.s32 %s34, 1
    %s36 = scalar_select %p33, %s34, %s35
    %p39 = pneg %p33
    %p40 = scmp.eq.s32.totalorder %s10, 1
    %p41 = por %p39, %p40
    %p42 = scmp.ne.s32.totalorder %s34, %s37
    %p43 = scmp.eq.s32.totalorder %s10, 0
    %p44 = por %p42, %p43
    %p45 = scmp.ne.s32.totalorder %s34, %s37
    %p46 = scmp.eq.s32.totalorder %s15, 1
    %p47 = por %p45, %p46
    %p48 = scmp.ne.s32.totalorder %s37, %s38
    %p49 = scmp.eq.s32.totalorder %s15, 0
    %p50 = por %p48, %p49
    %p51 = scmp.ne.s32.totalorder %s37, %s38
    %p52 = scmp.eq.s32.totalorder %s16, 1
    %p53 = por %p51, %p52
    %p55 = scmp.ne.s32.totalorder %s38, %s54
    %p56 = scmp.eq.s32.totalorder %s16, 0
    %p57 = por %p55, %p56
    %s59 = sadd.s32 %s58, 1
    %p62 = scmp.eq.s32.totalorder %s10, 1
    %p63 = scmp.ne.s32.totalorder %s58, %s60
    %p64 = scmp.eq.s32.totalorder %s10, 0
    %p65 = por %p63, %p64
    %p66 = scmp.ne.s32.totalorder %s58, %s60
    %p67 = scmp.eq.s32.totalorder %s15, 1
    %p68 = por %p66, %p67
    %p69 = scmp.ne.s32.totalorder %s60, %s61
    %p70 = scmp.eq.s32.totalorder %s15, 0
    %p71 = por %p69, %p70
    %p72 = scmp.ne.s32.totalorder %s60, %s61
    %p73 = scmp.eq.s32.totalorder %s16, 1
    %p74 = por %p72, %p73
    %p76 = scmp.ne.s32.totalorder %s61, %s75
    %p77 = scmp.eq.s32.totalorder %s16, 0
    %p78 = por %p76, %p77
    %s80 = sadd.s32 %s79, 1
    %p83 = scmp.eq.s32.totalorder %s10, 1
    %p84 = scmp.ne.s32.totalorder %s79, %s81
    %p85 = scmp.eq.s32.totalorder %s10, 0
    %p86 = por %p84, %p85
    %p87 = scmp.ne.s32.totalorder %s79, %s81
    %p88 = scmp.eq.s32.totalorder %s15, 1
    %p89 = por %p87, %p88
    %p90 = scmp.ne.s32.totalorder %s81, %s82
    %p91 = scmp.eq.s32.totalorder %s15, 0
    %p92 = por %p90, %p91
    %p93 = scmp.ne.s32.totalorder %s81, %s82
    %p94 = scmp.eq.s32.totalorder %s16, 1
    %p95 = por %p93, %p94
    %p97 = scmp.ne.s32.totalorder %s82, %s96
    %p98 = scmp.eq.s32.totalorder %s16, 0
    %p99 = por %p97, %p98
    %s101 = sadd.s32 %s100, 1
    %p104 = scmp.eq.s32.totalorder %s10, 1
    %p105 = scmp.ne.s32.totalorder %s100, %s102
    %p106 = scmp.eq.s32.totalorder %s10, 0
    %p107 = por %p105, %p106
    %p108 = scmp.ne.s32.totalorder %s100, %s102
    %p109 = scmp.eq.s32.totalorder %s15, 1
    %p110 = por %p108, %p109
    %p111 = scmp.ne.s32.totalorder %s102, %s103
    %p112 = scmp.eq.s32.totalorder %s15, 0
    %p113 = por %p111, %p112
    %p114 = scmp.ne.s32.totalorder %s102, %s103
    %p115 = scmp.eq.s32.totalorder %s16, 1
    %p116 = por %p114, %p115
    %p118 = scmp.ne.s32.totalorder %s103, %s117
    %p119 = scmp.eq.s32.totalorder %s16, 0
    %p120 = por %p118, %p119
    %s121 = ssub.s32 %s17, %s29
    %s122 = ssub.s32 %s18, %s25
    %s123 = sor.u32 %s121, %s122
    %p124 = scmp.eq.s32.totalorder %s123, 0
    %s126 = sadd.s32 %s125, 1
    %s127 = scalar_select %p124, %s125, %s126
    %p130 = pneg %p124
    %p131 = scmp.eq.s32.totalorder %s10, 1
    %p132 = por %p130, %p131
    %p133 = scmp.ne.s32.totalorder %s125, %s128
    %p134 = scmp.eq.s32.totalorder %s10, 0
    %p135 = por %p133, %p134
    %p136 = scmp.ne.s32.totalorder %s125, %s128
    %p137 = scmp.eq.s32.totalorder %s15, 1
    %p138 = por %p136, %p137
    %p139 = scmp.ne.s32.totalorder %s128, %s129
    %p140 = scmp.eq.s32.totalorder %s15, 0
    %p141 = por %p139, %p140
    %p142 = scmp.ne.s32.totalorder %s128, %s129
    %p143 = scmp.eq.s32.totalorder %s16, 1
    %p144 = por %p142, %p143
    %p146 = scmp.ne.s32.totalorder %s129, %s145
    %p147 = scmp.eq.s32.totalorder %s16, 0
    %p148 = por %p146, %p147
    %p149 = scmp.le.s32.totalorder 1, %s10
    %p150 = scmp.lt.s32.totalorder %s10, 3
    %p151 = pnand %p149, %p150
    %p152 = pneg %p151
    // Predicated region
    $region9: #{cnn_1d_forward.10} parent=5 // pred_check
      _
    $region10: #{cnn_1d_forward.10} parent=5 // pred_check_branch
      %154 = sbr.rel (%p151) target = $region12
    $region11: #{cnn_1d_forward.10} parent=5 // pred_region
      %s155 = ssub.s32 %s10, 1
      // Predicated region
      $region13: #{cnn_1d_forward.10} parent=11 // pred_check
        %p156 = pneg %p71
      $region14: #{cnn_1d_forward.10} parent=11 // pred_check_branch
        %158 = sbr.rel (%p156) target = $region16
      $region15: #{cnn_1d_forward.10} parent=11 // pred_region
        _
      $region16: #{cnn_1d_forward.10} parent=11 // pred_fallthru
        _
      // Predicated region
      $region17: #{cnn_1d_forward.10} parent=11 // pred_check
        %p159 = pneg %p92
      $region18: #{cnn_1d_forward.10} parent=11 // pred_check_branch
        %161 = sbr.rel (%p159) target = $region20
      $region19: #{cnn_1d_forward.10} parent=11 // pred_region
        _
      $region20: #{cnn_1d_forward.10} parent=11 // pred_fallthru
        _
      // Predicated region
      $region21: #{cnn_1d_forward.10} parent=11 // pred_check
        %p162 = pneg %p113
      $region22: #{cnn_1d_forward.10} parent=11 // pred_check_branch
        %164 = sbr.rel (%p162) target = $region24
      $region23: #{cnn_1d_forward.10} parent=11 // pred_region
        _
      $region24: #{cnn_1d_forward.10} parent=11 // pred_fallthru
        _
    $region12: #{cnn_1d_forward.10} parent=5 // pred_fallthru
      _
    %p165 = scmp.lt.s32.totalorder %s10, 2
    // Predicated region
    $region25: #{cnn_1d_forward.10} parent=5 // pred_check
      %p166 = pneg %p165
    $region26: #{cnn_1d_forward.10} parent=5 // pred_check_branch
      %168 = sbr.rel (%p166) target = $region28
    $region27: #{cnn_1d_forward.10} parent=5 // pred_region
      // Predicated region
      $region29: #{cnn_1d_forward.10} parent=27 // pred_check
        %p169 = pneg %p44
      $region30: #{cnn_1d_forward.10} parent=27 // pred_check_branch
        %171 = sbr.rel (%p169) target = $region32
      $region31: #{cnn_1d_forward.10} parent=27 // pred_region
        %p172 = scmp.lt.s32.totalorder %s17, 1
        %s173 = scalar_select %p172, %s17, 1
        %p174 = scmp.lt.s32.totalorder %s18, 0
        %s175 = scalar_select %p174, %s18, 0
        %s176 = smul.addr %s175, 3
        %s177 = smul.addr %s173, 3
        %s178 = sadd.s32 %s176, %s177
        %s179 = smul.addr %s178, 4
        %s180 = scalar_lea.vmem %s0, %s179
      $region32: #{cnn_1d_forward.10} parent=27 // pred_fallthru
        _
    $region28: #{cnn_1d_forward.10} parent=5 // pred_fallthru
      _
    %p181 = scmp.le.s32.totalorder 1, %s10
    %p182 = scmp.lt.s32.totalorder %s10, 3
    %p183 = pnand %p181, %p182
    %p184 = pneg %p183
    // Predicated region
    $region33: #{cnn_1d_forward.10} parent=5 // pred_check
      _
    $region34: #{cnn_1d_forward.10} parent=5 // pred_check_branch
      %186 = sbr.rel (%p183) target = $region36
    $region35: #{cnn_1d_forward.10} parent=5 // pred_region
      %s187 = ssub.s32 %s10, 1
      %p188 = scmp.lt.s32.totalorder %s19, 1
      %s189 = scalar_select %p188, %s19, 1
      %p190 = scmp.lt.s32.totalorder %s20, 0
      %s191 = scalar_select %p190, %s20, 0
      %s192 = smul.addr %s191, 3
      %s193 = smul.addr %s189, 3
      %s194 = sadd.s32 %s192, %s193
      %s195 = smul.addr %s194, 4
      %s196 = scalar_lea.vmem %s0, %s195
      %p197 = pneg %p50
      %p198 = pneg %p47
      %p199 = pneg %p71
      %p200 = pneg %p68
      %p201 = pneg %p92
      %p202 = pneg %p89
      %p203 = pneg %p113
      %p204 = pneg %p110
      %p205 = pneg %p141
      %p206 = pneg %p138
      %s207 = smul.u32 2, %s20
      %p208 = scmp.lt.s32.totalorder %s19, 1
      %s209 = scalar_select %p208, %s19, 1
      %p210 = scmp.lt.s32.totalorder %s207, 1
      %s211 = scalar_select %p210, %s207, 1
      %s212 = smul.addr %s209, 2
      %s213 = sadd.s32 %s211, %s212
      %s214 = smul.addr %s213, 4
      %s215 = scalar_lea.vmem %s4, %s214
      %p216 = scmp.lt.s32.totalorder %s19, 1
      %s217 = scalar_select %p216, %s19, 1
      %p218 = scmp.lt.s32.totalorder %s20, 0
      %s219 = scalar_select %p218, %s20, 0
      %s220 = smul.addr %s219, 3
      %s221 = smul.addr %s217, 3
      %s222 = sadd.s32 %s220, %s221
      %s223 = smul.addr %s222, 4
      %s224 = scalar_lea.vmem %s0, %s223
      %s225 = smul.u32 2, %s20
      %p226 = scmp.lt.s32.totalorder %s19, 1
      %s227 = scalar_select %p226, %s19, 1
      %p228 = scmp.lt.s32.totalorder %s225, 1
      %s229 = scalar_select %p228, %s225, 1
      %s230 = smul.addr %s227, 2
      %s231 = sadd.s32 %s229, %s230
      %s232 = smul.addr %s231, 4
      %s233 = scalar_lea.vmem %s4, %s232
      %s234 = smul.u32 2, %s20
      %v236 = vld [vmem:[%s224] sm:$0xf]
      %v237 = vld [vmem:[%s224 + $0x4] sm:$0xf]
      %v238 = vld [vmem:[%s224 + $0x8] sm:$0x1]
      %v239 = vld [vmem:[%s1] sm:$0xf]
      %v240 = vld [vmem:[%s1 + $0x4] sm:$0xf]
      %v241 = vld [vmem:[%s1 + $0x8] sm:$0xf]
      %v242 = vld [vmem:[%s1 + $0xc] sm:$0xf]
      %v243 = vld [vmem:[%s1 + $0x10] sm:$0xf]
      %v244 = vld [vmem:[%s1 + $0x14] sm:$0xf]
      %v245 = vld [vmem:[%s1 + $0x18] sm:$0xf]
      %v246 = vld [vmem:[%s1 + $0x1c] sm:$0xf]
      %v247 = vld [vmem:[%s1 + $0x20] sm:$0xf]
      %v248 = vld [vmem:[%s1 + $0x24] sm:$0xf]
      %v249 = vld [vmem:[%s1 + $0x28] sm:$0xf]
      %v250 = vld [vmem:[%s1 + $0x2c] sm:$0xf]
      %v251 = vld [vmem:[%s1 + $0x30] sm:$0xf]
      %v252 = vld [vmem:[%s1 + $0x34] sm:$0xf]
      %v253 = vld [vmem:[%s1 + $0x38] sm:$0xf]
      %v254 = vld [vmem:[%s1 + $0x3c] sm:$0xf]
      %v255 = vld [vmem:[%s224 + $0x8] sm:$0x3]
      %s256 = scalar_lea.vmem %s1, 64
      %v257 = vld [vmem:[%s256] sm:$0xf]
      %v258 = vld [vmem:[%s256 + $0x4] sm:$0xf]
      %v259 = vld [vmem:[%s256 + $0x8] sm:$0xf]
      %v260 = vld [vmem:[%s256 + $0xc] sm:$0xf]
      %v261 = vld [vmem:[%s256 + $0x10] sm:$0xf]
      %v262 = vld [vmem:[%s256 + $0x14] sm:$0xf]
      %v263 = vld [vmem:[%s256 + $0x18] sm:$0xf]
      %v264 = vld [vmem:[%s256 + $0x1c] sm:$0xf]
      %v265 = vld [vmem:[%s256 + $0x20] sm:$0xf]
      %v266 = vld [vmem:[%s256 + $0x24] sm:$0xf]
      %v267 = vld [vmem:[%s256 + $0x28] sm:$0xf]
      %v268 = vld [vmem:[%s256 + $0x2c] sm:$0xf]
      %v269 = vld [vmem:[%s256 + $0x30] sm:$0xf]
      %v270 = vld [vmem:[%s256 + $0x34] sm:$0xf]
      %v271 = vld [vmem:[%s256 + $0x38] sm:$0xf]
      %v272 = vld [vmem:[%s256 + $0x3c] sm:$0xf]
      %v276 = vunpack.c.l.b16 %v236
      %v277 = vunpack.c.l.b16 %v237
      %v278 = vunpack.c.l.b16 %v255
      %v279 = vpack.c.b16 %v277, %v276
      %v280 = vpack.c.b16 %v278, %v278
      %vm281 = vsmask.f32 7424
      %v283 = vshrl.u32 %v279, 16
      %v285 = vshll.u32 %v279, 16
      %v287 = vrot.slane %v285, 1
      %v288 = vor.u32 %v283, %v287
      %v290 = vshll.u32 %v280, 16
      %v292 = vrot.slane %v290, 1
      %v293 = vsel %vm281, %v288, %v292
      %v294 = vshrl.u32 %v280, 16
      %v296 = vor.u32 %v294, %v292
      %v315 = vunpack.c.l.b16 %v257
      %v316 = vunpack.c.l.b16 %v258
      %v317 = vunpack.c.l.b16 %v259
      %v318 = vunpack.c.l.b16 %v260
      %v319 = vunpack.c.l.b16 %v261
      %v320 = vunpack.c.l.b16 %v262
      %v321 = vunpack.c.l.b16 %v263
      %v322 = vunpack.c.l.b16 %v264
      %v323 = vunpack.c.l.b16 %v265
      %v324 = vunpack.c.l.b16 %v266
      %v325 = vunpack.c.l.b16 %v267
      %v326 = vunpack.c.l.b16 %v268
      %v327 = vunpack.c.l.b16 %v269
      %v328 = vunpack.c.l.b16 %v270
      %v329 = vunpack.c.l.b16 %v271
      %v330 = vunpack.c.l.b16 %v272
      %v331 = vpack.c.b16 %v316, %v315
      %v332 = vpack.c.b16 %v318, %v317
      %v333 = vpack.c.b16 %v320, %v319
      %v334 = vpack.c.b16 %v322, %v321
      %v335 = vpack.c.b16 %v324, %v323
      %v336 = vpack.c.b16 %v326, %v325
      %v337 = vpack.c.b16 %v328, %v327
      %v338 = vpack.c.b16 %v330, %v329
      %347 = vmatprep.subr.bf16.mxu0 0
      %348 = vmatpush1.bf16.msra.mxu0 %v331
      %349 = vmatprep.subr.bf16.mxu0 0
      %350 = vmatpush1.bf16.msra.mxu0 %v332
      %351 = vmatprep.subr.bf16.mxu0 0
      %352 = vmatpush1.bf16.msra.mxu0 %v333
      %353 = vmatprep.subr.bf16.mxu0 0
      %354 = vmatpush1.bf16.msra.mxu0 %v334
      %355 = vmatprep.subr.bf16.mxu0 0
      %356 = vmatpush1.bf16.msra.mxu0 %v335
      %357 = vmatprep.subr.bf16.mxu0 0
      %358 = vmatpush1.bf16.msra.mxu0 %v336
      %359 = vmatprep.subr.bf16.mxu0 0
      %360 = vmatpush1.bf16.msra.mxu0 %v337
      %361 = vmatprep.subr.bf16.mxu0 0
      %362 = vmatpush1.bf16.msra.mxu0 %v338
      %363 = vmatprep.subr.bf16.mxu0 0
      %364 = vmatpush1.bf16.msra.mxu0 0
      %365 = vmatprep.subr.bf16.mxu0 0
      %366 = vmatpush1.bf16.msra.mxu0 0
      %367 = vmatprep.subr.bf16.mxu0 0
      %368 = vmatpush1.bf16.msra.mxu0 0
      %369 = vmatprep.subr.bf16.mxu0 0
      %370 = vmatpush1.bf16.msra.mxu0 0
      %371 = vmatprep.subr.bf16.mxu0 0
      %372 = vmatpush1.bf16.msra.mxu0 0
      %373 = vmatprep.subr.bf16.mxu0 0
      %374 = vmatpush1.bf16.msra.mxu0 0
      %375 = vmatprep.subr.bf16.mxu0 0
      %376 = vmatpush1.bf16.msra.mxu0 0
      %377 = vmatprep.subr.bf16.mxu0 0
      %378 = vmatpush1.bf16.msra.mxu0 0
      %379 = vmatprep.mubr.bf16.mxu0 0
      %380 = vmatmul.mubr.bf16.gmra.mrb[0].mxu0 %v293
      %v381 = vpop.f32.mrb[0].mxu0
      %v382 = vadd.f32 0.0, %v381
      %v383 = vpop.f32.mrb[0].mxu0
      %v384 = vpop.f32.mrb[0].mxu0
      %v385 = vadd.f32 0.0, %v384
      %v386 = vpop.f32.mrb[0].mxu0
      %387 = vmatprep.mubr.bf16.mxu0 0
      %388 = vmatmul.mubr.bf16.gmra.mrb[0].mxu0 %v296
      %v389 = vpop.f32.mrb[0].mxu0
      %v390 = vadd.f32 0.0, %v389
      %v391 = vpop.f32.mrb[0].mxu0
      %v392 = vpop.f32.mrb[0].mxu0
      %v393 = vpop.f32.mrb[0].mxu0
      %394 = vdwg.mxu0
      %v396 = vunpack.c.l.b16 %v238
      %v397 = vpack.c.b16 %v396, %v396
      %v416 = vunpack.c.l.b16 %v239
      %v417 = vunpack.c.l.b16 %v240
      %v418 = vunpack.c.l.b16 %v241
      %v419 = vunpack.c.l.b16 %v242
      %v420 = vunpack.c.l.b16 %v243
      %v421 = vunpack.c.l.b16 %v244
      %v422 = vunpack.c.l.b16 %v245
      %v423 = vunpack.c.l.b16 %v246
      %v424 = vunpack.c.l.b16 %v247
      %v425 = vunpack.c.l.b16 %v248
      %v426 = vunpack.c.l.b16 %v249
      %v427 = vunpack.c.l.b16 %v250
      %v428 = vunpack.c.l.b16 %v251
      %v429 = vunpack.c.l.b16 %v252
      %v430 = vunpack.c.l.b16 %v253
      %v431 = vunpack.c.l.b16 %v254
      %v432 = vpack.c.b16 %v417, %v416
      %v433 = vpack.c.b16 %v419, %v418
      %v434 = vpack.c.b16 %v421, %v420
      %v435 = vpack.c.b16 %v423, %v422
      %v436 = vpack.c.b16 %v425, %v424
      %v437 = vpack.c.b16 %v427, %v426
      %v438 = vpack.c.b16 %v429, %v428
      %v439 = vpack.c.b16 %v431, %v430
      %448 = vmatprep.subr.bf16.mxu0 0
      %449 = vmatpush1.bf16.msra.mxu0 %v432
      %450 = vmatprep.subr.bf16.mxu0 0
      %451 = vmatpush1.bf16.msra.mxu0 %v433
      %452 = vmatprep.subr.bf16.mxu0 0
      %453 = vmatpush1.bf16.msra.mxu0 %v434
      %454 = vmatprep.subr.bf16.mxu0 0
      %455 = vmatpush1.bf16.msra.mxu0 %v435
      %456 = vmatprep.subr.bf16.mxu0 0
      %457 = vmatpush1.bf16.msra.mxu0 %v436
      %458 = vmatprep.subr.bf16.mxu0 0
      %459 = vmatpush1.bf16.msra.mxu0 %v437
      %460 = vmatprep.subr.bf16.mxu0 0
      %461 = vmatpush1.bf16.msra.mxu0 %v438
      %462 = vmatprep.subr.bf16.mxu0 0
      %463 = vmatpush1.bf16.msra.mxu0 %v439
      %464 = vmatprep.subr.bf16.mxu0 0
      %465 = vmatpush1.bf16.msra.mxu0 0
      %466 = vmatprep.subr.bf16.mxu0 0
      %467 = vmatpush1.bf16.msra.mxu0 0
      %468 = vmatprep.subr.bf16.mxu0 0
      %469 = vmatpush1.bf16.msra.mxu0 0
      %470 = vmatprep.subr.bf16.mxu0 0
      %471 = vmatpush1.bf16.msra.mxu0 0
      %472 = vmatprep.subr.bf16.mxu0 0
      %473 = vmatpush1.bf16.msra.mxu0 0
      %474 = vmatprep.subr.bf16.mxu0 0
      %475 = vmatpush1.bf16.msra.mxu0 0
      %476 = vmatprep.subr.bf16.mxu0 0
      %477 = vmatpush1.bf16.msra.mxu0 0
      %478 = vmatprep.subr.bf16.mxu0 0
      %479 = vmatpush1.bf16.msra.mxu0 0
      %480 = vmatprep.mubr.bf16.mxu0 0
      %481 = vmatmul.mubr.bf16.gmra.mrb[0].mxu0 %v279
      %v482 = vpop.f32.mrb[0].mxu0
      %v483 = vadd.f32 %v382, %v482
      %v484 = vpop.f32.mrb[0].mxu0
      %v485 = vpop.f32.mrb[0].mxu0
      %v486 = vadd.f32 %v385, %v485
      %v487 = vpop.f32.mrb[0].mxu0
      %488 = vmatprep.mubr.bf16.mxu0 0
      %489 = vmatmul.mubr.bf16.gmra.mrb[0].mxu0 %v397
      %v490 = vpop.f32.mrb[0].mxu0
      %v491 = vadd.f32 %v390, %v490
      %v492 = vpop.f32.mrb[0].mxu0
      %v493 = vpop.f32.mrb[0].mxu0
      %v494 = vpop.f32.mrb[0].mxu0
      %495 = vdwg.mxu0
      %v496 = vld [vmem:[%s224] sm:$0xe]
      %s497 = scalar_lea.vmem %s1, 128
      %v498 = vld [vmem:[%s497] sm:$0xf]
      %v499 = vld [vmem:[%s497 + $0x4] sm:$0xf]
      %v500 = vld [vmem:[%s497 + $0x8] sm:$0xf]
      %v501 = vld [vmem:[%s497 + $0xc] sm:$0xf]
      %v502 = vld [vmem:[%s497 + $0x10] sm:$0xf]
      %v503 = vld [vmem:[%s497 + $0x14] sm:$0xf]
      %v504 = vld [vmem:[%s497 + $0x18] sm:$0xf]
      %v505 = vld [vmem:[%s497 + $0x1c] sm:$0xf]
      %v506 = vld [vmem:[%s497 + $0x20] sm:$0xf]
      %v507 = vld [vmem:[%s497 + $0x24] sm:$0xf]
      %v508 = vld [vmem:[%s497 + $0x28] sm:$0xf]
      %v509 = vld [vmem:[%s497 + $0x2c] sm:$0xf]
      %v510 = vld [vmem:[%s497 + $0x30] sm:$0xf]
      %v511 = vld [vmem:[%s497 + $0x34] sm:$0xf]
      %v512 = vld [vmem:[%s497 + $0x38] sm:$0xf]
      %v513 = vld [vmem:[%s497 + $0x3c] sm:$0xf]
      %v515 = vunpack.c.l.b16 %v496
      %v516 = vpack.c.b16 %v277, %v515
      %vm517 = vcmask 1046528
      %v518 = vrot.slane %v516, 1
      %v519 = vrot.slane %v280, 1
      %v520 = vsel %vm517, %v518, %v519
      %v539 = vunpack.c.l.b16 %v498
      %v540 = vunpack.c.l.b16 %v499
      %v541 = vunpack.c.l.b16 %v500
      %v542 = vunpack.c.l.b16 %v501
      %v543 = vunpack.c.l.b16 %v502
      %v544 = vunpack.c.l.b16 %v503
      %v545 = vunpack.c.l.b16 %v504
      %v546 = vunpack.c.l.b16 %v505
      %v547 = vunpack.c.l.b16 %v506
      %v548 = vunpack.c.l.b16 %v507
      %v549 = vunpack.c.l.b16 %v508
      %v550 = vunpack.c.l.b16 %v509
      %v551 = vunpack.c.l.b16 %v510
      %v552 = vunpack.c.l.b16 %v511
      %v553 = vunpack.c.l.b16 %v512
      %v554 = vunpack.c.l.b16 %v513
      %v555 = vpack.c.b16 %v540, %v539
      %v556 = vpack.c.b16 %v542, %v541
      %v557 = vpack.c.b16 %v544, %v543
      %v558 = vpack.c.b16 %v546, %v545
      %v559 = vpack.c.b16 %v548, %v547
      %v560 = vpack.c.b16 %v550, %v549
      %v561 = vpack.c.b16 %v552, %v551
      %v562 = vpack.c.b16 %v554, %v553
      %571 = vmatprep.subr.bf16.mxu0 0
      %572 = vmatpush1.bf16.msra.mxu0 %v555
      %573 = vmatprep.subr.bf16.mxu0 0
      %574 = vmatpush1.bf16.msra.mxu0 %v556
      %575 = vmatprep.subr.bf16.mxu0 0
      %576 = vmatpush1.bf16.msra.mxu0 %v557
      %577 = vmatprep.subr.bf16.mxu0 0
      %578 = vmatpush1.bf16.msra.mxu0 %v558
      %579 = vmatprep.subr.bf16.mxu0 0
      %580 = vmatpush1.bf16.msra.mxu0 %v559
      %581 = vmatprep.subr.bf16.mxu0 0
      %582 = vmatpush1.bf16.msra.mxu0 %v560
      %583 = vmatprep.subr.bf16.mxu0 0
      %584 = vmatpush1.bf16.msra.mxu0 %v561
      %585 = vmatprep.subr.bf16.mxu0 0
      %586 = vmatpush1.bf16.msra.mxu0 %v562
      %587 = vmatprep.subr.bf16.mxu0 0
      %588 = vmatpush1.bf16.msra.mxu0 0
      %589 = vmatprep.subr.bf16.mxu0 0
      %590 = vmatpush1.bf16.msra.mxu0 0
      %591 = vmatprep.subr.bf16.mxu0 0
      %592 = vmatpush1.bf16.msra.mxu0 0
      %593 = vmatprep.subr.bf16.mxu0 0
      %594 = vmatpush1.bf16.msra.mxu0 0
      %595 = vmatprep.subr.bf16.mxu0 0
      %596 = vmatpush1.bf16.msra.mxu0 0
      %597 = vmatprep.subr.bf16.mxu0 0
      %598 = vmatpush1.bf16.msra.mxu0 0
      %599 = vmatprep.subr.bf16.mxu0 0
      %600 = vmatpush1.bf16.msra.mxu0 0
      %601 = vmatprep.subr.bf16.mxu0 0
      %602 = vmatpush1.bf16.msra.mxu0 0
      %603 = vmatprep.mubr.bf16.mxu0 0
      %604 = vmatmul.mubr.bf16.gmra.mrb[0].mxu0 %v520
      %v605 = vpop.f32.mrb[0].mxu0
      %v606 = vadd.f32 0.0, %v605
      %v607 = vpop.f32.mrb[0].mxu0
      %v608 = vpop.f32.mrb[0].mxu0
      %v609 = vadd.f32 0.0, %v608
      %v610 = vpop.f32.mrb[0].mxu0
      %611 = vmatprep.mubr.bf16.mxu0 0
      %612 = vmatmul.mubr.bf16.gmra.mrb[0].mxu0 %v519
      %v613 = vpop.f32.mrb[0].mxu0
      %v614 = vadd.f32 0.0, %v613
      %v615 = vpop.f32.mrb[0].mxu0
      %v616 = vpop.f32.mrb[0].mxu0
      %v617 = vpop.f32.mrb[0].mxu0
      %618 = vdwg.mxu0
      %v619 = vadd.f32 %v483, %v606
      %v620 = vadd.f32 %v486, %v609
      %v621 = vadd.f32 %v491, %v614
      %v622 = vld [vmem:[%s224 + $0x8] sm:$0x7]
      %s623 = scalar_lea.vmem %s1, 192
      %v624 = vld [vmem:[%s623] sm:$0xf]
      %v625 = vld [vmem:[%s623 + $0x4] sm:$0xf]
      %v626 = vld [vmem:[%s623 + $0x8] sm:$0xf]
      %v627 = vld [vmem:[%s623 + $0xc] sm:$0xf]
      %v628 = vld [vmem:[%s623 + $0x10] sm:$0xf]
      %v629 = vld [vmem:[%s623 + $0x14] sm:$0xf]
      %v630 = vld [vmem:[%s623 + $0x18] sm:$0xf]
      %v631 = vld [vmem:[%s623 + $0x1c] sm:$0xf]
      %v632 = vld [vmem:[%s623 + $0x20] sm:$0xf]
      %v633 = vld [vmem:[%s623 + $0x24] sm:$0xf]
      %v634 = vld [vmem:[%s623 + $0x28] sm:$0xf]
      %v635 = vld [vmem:[%s623 + $0x2c] sm:$0xf]
      %v636 = vld [vmem:[%s623 + $0x30] sm:$0xf]
      %v637 = vld [vmem:[%s623 + $0x34] sm:$0xf]
      %v638 = vld [vmem:[%s623 + $0x38] sm:$0xf]
      %v639 = vld [vmem:[%s623 + $0x3c] sm:$0xf]
      %v641 = vunpack.c.l.b16 %v622
      %v642 = vpack.c.b16 %v641, %v641
      %vm643 = vsmask.f32 6400
      %v645 = vshrl.u32 %v516, 16
      %v647 = vrot.slane %v645, 1
      %v648 = vshll.u32 %v516, 16
      %v650 = vrot.slane %v648, 2
      %v651 = vor.u32 %v647, %v650
      %v653 = vshrl.u32 %v642, 16
      %v655 = vrot.slane %v653, 1
      %v656 = vshll.u32 %v642, 16
      %v658 = vrot.slane %v656, 2
      %v659 = vor.u32 %v655, %v658
      %v660 = vsel %vm643, %v651, %v659
      %v679 = vunpack.c.l.b16 %v624
      %v680 = vunpack.c.l.b16 %v625
      %v681 = vunpack.c.l.b16 %v626
      %v682 = vunpack.c.l.b16 %v627
      %v683 = vunpack.c.l.b16 %v628
      %v684 = vunpack.c.l.b16 %v629
      %v685 = vunpack.c.l.b16 %v630
      %v686 = vunpack.c.l.b16 %v631
      %v687 = vunpack.c.l.b16 %v632
      %v688 = vunpack.c.l.b16 %v633
      %v689 = vunpack.c.l.b16 %v634
      %v690 = vunpack.c.l.b16 %v635
      %v691 = vunpack.c.l.b16 %v636
      %v692 = vunpack.c.l.b16 %v637
      %v693 = vunpack.c.l.b16 %v638
      %v694 = vunpack.c.l.b16 %v639
      %v695 = vpack.c.b16 %v680, %v679
      %v696 = vpack.c.b16 %v682, %v681
      %v697 = vpack.c.b16 %v684, %v683
      %v698 = vpack.c.b16 %v686, %v685
      %v699 = vpack.c.b16 %v688, %v687
      %v700 = vpack.c.b16 %v690, %v689
      %v701 = vpack.c.b16 %v692, %v691
      %v702 = vpack.c.b16 %v694, %v693
      %711 = vmatprep.subr.bf16.mxu0 0
      %712 = vmatpush1.bf16.msra.mxu0 %v695
      %713 = vmatprep.subr.bf16.mxu0 0
      %714 = vmatpush1.bf16.msra.mxu0 %v696
      %715 = vmatprep.subr.bf16.mxu0 0
      %716 = vmatpush1.bf16.msra.mxu0 %v697
      %717 = vmatprep.subr.bf16.mxu0 0
      %718 = vmatpush1.bf16.msra.mxu0 %v698
      %719 = vmatprep.subr.bf16.mxu0 0
      %720 = vmatpush1.bf16.msra.mxu0 %v699
      %721 = vmatprep.subr.bf16.mxu0 0
      %722 = vmatpush1.bf16.msra.mxu0 %v700
      %723 = vmatprep.subr.bf16.mxu0 0
      %724 = vmatpush1.bf16.msra.mxu0 %v701
      %725 = vmatprep.subr.bf16.mxu0 0
      %726 = vmatpush1.bf16.msra.mxu0 %v702
      %727 = vmatprep.subr.bf16.mxu0 0
      %728 = vmatpush1.bf16.msra.mxu0 0
      %729 = vmatprep.subr.bf16.mxu0 0
      %730 = vmatpush1.bf16.msra.mxu0 0
      %731 = vmatprep.subr.bf16.mxu0 0
      %732 = vmatpush1.bf16.msra.mxu0 0
      %733 = vmatprep.subr.bf16.mxu0 0
      %734 = vmatpush1.bf16.msra.mxu0 0
      %735 = vmatprep.subr.bf16.mxu0 0
      %736 = vmatpush1.bf16.msra.mxu0 0
      %737 = vmatprep.subr.bf16.mxu0 0
      %738 = vmatpush1.bf16.msra.mxu0 0
      %739 = vmatprep.subr.bf16.mxu0 0
      %740 = vmatpush1.bf16.msra.mxu0 0
      %741 = vmatprep.subr.bf16.mxu0 0
      %742 = vmatpush1.bf16.msra.mxu0 0
      %743 = vmatprep.mubr.bf16.mxu0 0
      %744 = vmatmul.mubr.bf16.gmra.mrb[0].mxu0 %v660
      %v745 = vpop.f32.mrb[0].mxu0
      %v746 = vadd.f32 0.0, %v745
      %v747 = vpop.f32.mrb[0].mxu0
      %v748 = vpop.f32.mrb[0].mxu0
      %v749 = vadd.f32 0.0, %v748
      %v750 = vpop.f32.mrb[0].mxu0
      %751 = vmatprep.mubr.bf16.mxu0 0
      %752 = vmatmul.mubr.bf16.gmra.mrb[0].mxu0 %v659
      %v753 = vpop.f32.mrb[0].mxu0
      %v754 = vadd.f32 0.0, %v753
      %v755 = vpop.f32.mrb[0].mxu0
      %v756 = vpop.f32.mrb[0].mxu0
      %v757 = vpop.f32.mrb[0].mxu0
      %758 = vdwg.mxu0
      %v759 = vadd.f32 %v619, %v746
      %v760 = vadd.f32 %v620, %v749
      %v761 = vadd.f32 %v621, %v754
      %v762 = vld [vmem:[%s224] sm:$0xc]
      %s763 = scalar_lea.vmem %s1, 256
      %v764 = vld [vmem:[%s763] sm:$0xf]
      %v765 = vld [vmem:[%s763 + $0x4] sm:$0xf]
      %v766 = vld [vmem:[%s763 + $0x8] sm:$0xf]
      %v767 = vld [vmem:[%s763 + $0xc] sm:$0xf]
      %v768 = vld [vmem:[%s763 + $0x10] sm:$0xf]
      %v769 = vld [vmem:[%s763 + $0x14] sm:$0xf]
      %v770 = vld [vmem:[%s763 + $0x18] sm:$0xf]
      %v771 = vld [vmem:[%s763 + $0x1c] sm:$0xf]
      %v772 = vld [vmem:[%s763 + $0x20] sm:$0xf]
      %v773 = vld [vmem:[%s763 + $0x24] sm:$0xf]
      %v774 = vld [vmem:[%s763 + $0x28] sm:$0xf]
      %v775 = vld [vmem:[%s763 + $0x2c] sm:$0xf]
      %v776 = vld [vmem:[%s763 + $0x30] sm:$0xf]
      %v777 = vld [vmem:[%s763 + $0x34] sm:$0xf]
      %v778 = vld [vmem:[%s763 + $0x38] sm:$0xf]
      %v779 = vld [vmem:[%s763 + $0x3c] sm:$0xf]
      %v781 = vunpack.c.l.b16 %v762
      %v782 = vpack.c.b16 %v277, %v781
      %vm783 = vcmask 1045504
      %v784 = vrot.slane %v782, 2
      %v785 = vrot.slane %v642, 2
      %v786 = vsel %vm783, %v784, %v785
      %v805 = vunpack.c.l.b16 %v764
      %v806 = vunpack.c.l.b16 %v765
      %v807 = vunpack.c.l.b16 %v766
      %v808 = vunpack.c.l.b16 %v767
      %v809 = vunpack.c.l.b16 %v768
      %v810 = vunpack.c.l.b16 %v769
      %v811 = vunpack.c.l.b16 %v770
      %v812 = vunpack.c.l.b16 %v771
      %v813 = vunpack.c.l.b16 %v772
      %v814 = vunpack.c.l.b16 %v773
      %v815 = vunpack.c.l.b16 %v774
      %v816 = vunpack.c.l.b16 %v775
      %v817 = vunpack.c.l.b16 %v776
      %v818 = vunpack.c.l.b16 %v777
      %v819 = vunpack.c.l.b16 %v778
      %v820 = vunpack.c.l.b16 %v779
      %v821 = vpack.c.b16 %v806, %v805
      %v822 = vpack.c.b16 %v808, %v807
      %v823 = vpack.c.b16 %v810, %v809
      %v824 = vpack.c.b16 %v812, %v811
      %v825 = vpack.c.b16 %v814, %v813
      %v826 = vpack.c.b16 %v816, %v815
      %v827 = vpack.c.b16 %v818, %v817
      %v828 = vpack.c.b16 %v820, %v819
      %837 = vmatprep.subr.bf16.mxu0 0
      %838 = vmatpush1.bf16.msra.mxu0 %v821
      %839 = vmatprep.subr.bf16.mxu0 0
      %840 = vmatpush1.bf16.msra.mxu0 %v822
      %841 = vmatprep.subr.bf16.mxu0 0
      %842 = vmatpush1.bf16.msra.mxu0 %v823
      %843 = vmatprep.subr.bf16.mxu0 0
      %844 = vmatpush1.bf16.msra.mxu0 %v824
      %845 = vmatprep.subr.bf16.mxu0 0
      %846 = vmatpush1.bf16.msra.mxu0 %v825
      %847 = vmatprep.subr.bf16.mxu0 0
      %848 = vmatpush1.bf16.msra.mxu0 %v826
      %849 = vmatprep.subr.bf16.mxu0 0
      %850 = vmatpush1.bf16.msra.mxu0 %v827
      %851 = vmatprep.subr.bf16.mxu0 0
      %852 = vmatpush1.bf16.msra.mxu0 %v828
      %853 = vmatprep.subr.bf16.mxu0 0
      %854 = vmatpush1.bf16.msra.mxu0 0
      %855 = vmatprep.subr.bf16.mxu0 0
      %856 = vmatpush1.bf16.msra.mxu0 0
      %857 = vmatprep.subr.bf16.mxu0 0
      %858 = vmatpush1.bf16.msra.mxu0 0
      %859 = vmatprep.subr.bf16.mxu0 0
      %860 = vmatpush1.bf16.msra.mxu0 0
      %861 = vmatprep.subr.bf16.mxu0 0
      %862 = vmatpush1.bf16.msra.mxu0 0
      %863 = vmatprep.subr.bf16.mxu0 0
      %864 = vmatpush1.bf16.msra.mxu0 0
      %865 = vmatprep.subr.bf16.mxu0 0
      %866 = vmatpush1.bf16.msra.mxu0 0
      %867 = vmatprep.subr.bf16.mxu0 0
      %868 = vmatpush1.bf16.msra.mxu0 0
      %869 = vmatprep.mubr.bf16.mxu0 0
      %870 = vmatmul.mubr.bf16.gmra.mrb[0].mxu0 %v786
      %v871 = vpop.f32.mrb[0].mxu0
      %v872 = vadd.f32 0.0, %v871
      %v873 = vpop.f32.mrb[0].mxu0
      %v874 = vpop.f32.mrb[0].mxu0
      %v875 = vadd.f32 0.0, %v874
      %v876 = vpop.f32.mrb[0].mxu0
      %877 = vmatprep.mubr.bf16.mxu0 0
      %878 = vmatmul.mubr.bf16.gmra.mrb[0].mxu0 %v785
      %v879 = vpop.f32.mrb[0].mxu0
      %v880 = vadd.f32 0.0, %v879
      %v881 = vpop.f32.mrb[0].mxu0
      %v882 = vpop.f32.mrb[0].mxu0
      %v883 = vpop.f32.mrb[0].mxu0
      %884 = vdwg.mxu0
      %v885 = vadd.f32 %v759, %v872
      %v886 = vadd.f32 %v760, %v875
      %v887 = vadd.f32 %v761, %v880
      %v888 = vld [vmem:[%s2] sm:$0x1]
      %v890 = vlaneseq
      %v891 = vshrl.u32 %v890, 7
      %v892 = vsub.s32 0, %v891
      %v893 = vrot.slane %v888, %v892
      %v895 = vmul.f32 %v885, %v893
      %v896 = vmul.f32 %v886, %v893
      %v897 = vmul.f32 %v887, %v893
      %v898 = vld [vmem:[%s3] sm:$0x1]
      %v900 = vlaneseq
      %v901 = vshrl.u32 %v900, 7
      %v902 = vsub.s32 0, %v901
      %v903 = vrot.slane %v898, %v902
      %v905 = vadd.f32 %v895, %v903
      %v906 = vadd.f32 %v896, %v903
      %v907 = vadd.f32 %v897, %v903
      %v908 = vmax.f32 %v905, 0.0
      %v909 = vmax.f32 %v906, 0.0
      %v910 = vmax.f32 %v907, 0.0
      %s911 = smul.u32 %s20, 16
      %s912 = ssub.s32 %s911, 1
      %v913 = vlaneseq
      %v914 = vshrl.u32 %v913, 7
      %v915 = vadd.s32 %v914, 8
      %v916 = vadd.s32 %v914, 16
      %v917 = vstv %s912
      %v918 = vadd.s32 %v917, %v914
      %v919 = vadd.s32 %v917, %v915
      %v920 = vadd.s32 %v917, %v916
      %vm921 = vcmp.ge.s32.totalorder %v918, 0
      %vm922 = vcmp.ge.s32.totalorder %v919, 0
      %vm923 = vcmp.ge.s32.totalorder %v920, 0
      %vm924 = vcmp.lt.s32.totalorder %v918, 16
      %vm925 = vcmp.lt.s32.totalorder %v919, 16
      %vm926 = vcmp.lt.s32.totalorder %v920, 16
      %vm927 = vmand %vm921, %vm924
      %vm928 = vmand %vm922, %vm925
      %vm929 = vmand %vm923, %vm926
      %v930 = vsel %vm927, 1, 0
      %v931 = vsel %vm928, 1, 0
      %v932 = vsel %vm929, 1, 0
      %vm933 = vcmp.eq.s32.totalorder %v930, 1
      %vm934 = vcmp.eq.s32.totalorder %v931, 1
      %vm935 = vcmp.eq.s32.totalorder %v932, 1
      %v936 = vsel %vm933, %v908, 0.0
      %v937 = vsel %vm934, %v909, 0.0
      %v938 = vsel %vm935, %v910, 0.0
      %vm942 = vcmask 1046528
      %v943 = vrot.slane %v936, 1
      %v944 = vrot.slane %v937, 1
      %v945 = vsel %vm942, %v943, %v944
      %v946 = vrot.slane %v938, 1
      %v947 = vsel %vm942, %v944, %v946
      %v950 = vmax.f32 %v936, %v945
      %v951 = vmax.f32 %v937, %v947
      %vm952 = vcmask 1045504
      %v953 = vrot.slane %v936, 2
      %v954 = vrot.slane %v937, 2
      %v955 = vsel %vm952, %v953, %v954
      %v956 = vrot.slane %v938, 2
      %v957 = vsel %vm952, %v954, %v956
      %v960 = vmax.f32 %v950, %v955
      %v961 = vmax.f32 %v951, %v957
      %v962 = vpack.c.bf16 %v961, %v960
      %v964 = vunpack.c.l.b16 %v962
      %v965 = vunpack.c.h.b16 %v962
      %v966 = vpack.c.b16 %v964, %v964
      %v967 = vpack.c.b16 %v965, %v965
      %970 = vst [vmem:[%s233] sm:$0xf] %v966
      %971 = vst [vmem:[%s233 + $0x4] sm:$0xf] %v967
      %s972 = smul.u32 2, %s20
      %p973 = scmp.lt.s32.totalorder %s19, 1
      %s974 = scalar_select %p973, %s19, 1
      %p975 = scmp.lt.s32.totalorder %s972, 1
      %s976 = scalar_select %p975, %s972, 1
      %s977 = smul.addr %s974, 2
      %s978 = sadd.s32 %s976, %s977
      %s979 = smul.addr %s978, 4
      %s980 = scalar_lea.vmem %s4, %s979
      // Predicated region
      $region37: #{cnn_1d_forward.10} parent=35 // pred_check
        %p981 = pneg %p138
      $region38: #{cnn_1d_forward.10} parent=35 // pred_check_branch
        %983 = sbr.rel (%p981) target = $region40
      $region39: #{cnn_1d_forward.10} parent=35 // pred_region
        %s984 = smul.u32 2, %s20
      $region40: #{cnn_1d_forward.10} parent=35 // pred_fallthru
        _
    $region36: #{cnn_1d_forward.10} parent=5 // pred_fallthru
      _
    %p985 = scmp.le.s32.totalorder 2, %s10
    // Predicated region
    $region41: #{cnn_1d_forward.10} parent=5 // pred_check
      %p986 = pneg %p985
    $region42: #{cnn_1d_forward.10} parent=5 // pred_check_branch
      %988 = sbr.rel (%p986) target = $region44
    $region43: #{cnn_1d_forward.10} parent=5 // pred_region
      %s989 = ssub.s32 %s10, 2
      // Predicated region
      $region45: #{cnn_1d_forward.10} parent=43 // pred_check
        %p990 = pneg %p144
      $region46: #{cnn_1d_forward.10} parent=43 // pred_check_branch
        %992 = sbr.rel (%p990) target = $region48
      $region47: #{cnn_1d_forward.10} parent=43 // pred_region
        %s993 = smul.u32 2, %s22
        %p994 = scmp.lt.s32.totalorder %s21, 1
        %s995 = scalar_select %p994, %s21, 1
        %p996 = scmp.lt.s32.totalorder %s993, 1
        %s997 = scalar_select %p996, %s993, 1
        %s998 = smul.addr %s995, 2
        %s999 = sadd.s32 %s997, %s998
        %s1000 = smul.addr %s999, 4
        %s1001 = scalar_lea.vmem %s4, %s1000
      $region48: #{cnn_1d_forward.10} parent=43 // pred_fallthru
        _
    $region44: #{cnn_1d_forward.10} parent=5 // pred_fallthru
      _
  $region6: #{cnn_1d_forward.10} parent=0 // loop_footer
    %s14 = sadd.s32 1, %s10
  $region7: #{cnn_1d_forward.10} parent=0 // loop_footer_branch
    %9 = sbr.rel target = $region3
  $region8: #{cnn_1d_forward.10} parent=0 // loop_exit
    _

// kernel: cnn_1d_forward.12
$region0: #{cnn_1d_forward.12}
  #allocation0 [shape = 'u32[]', space=smem, size = 0x4, offset = 0x4, fixed_abs, tag = 'smem constant byte address 0x4 - core index']
  #allocation1 [shape = 'u32[144,128]{1,0:T(1,128)}', space=vmem, size = 0x12000, scoped, tag = 'internal scratch']
  %s0 = inlined_call_operand.vmem [shape: bf16[2,1,10,128], index: 0, kind: input, shape index: {}]
  %s1 = inlined_call_operand.vmem [shape: bf16[3,128,128], index: 1, kind: input, shape index: {}]
  %s2 = inlined_call_operand.vmem [shape: f32[1,128], index: 2, kind: input, shape index: {}]
  %s3 = inlined_call_operand.vmem [shape: f32[1,128], index: 3, kind: input, shape index: {}]
  %s4 = inlined_call_operand.vmem [shape: bf16[2,8,128], index: 4, kind: input, shape index: {}]
  %s5 = inlined_call_operand.vmem [shape: bf16[2,8,128], index: 5, kind: output, shape index: {}]
  %s6 = sld [smem:[#allocation0]]
  $region53: #{cnn_1d_forward.12} parent=0
    _
  %s8 = ssub.s32 1, %s6
  %s9 = scalar_select 0, %s8, %s6
  loop: start=0, step=1, limit=4
  $region2: #{cnn_1d_forward.12} parent=0 // loop_pre_header
    _
  $region3: #{cnn_1d_forward.12} parent=0 // loop_header
    %s11 = sphi 0, %s15
    %p12 = scmp.ge.s32.totalorder %s11, 4
    %s18 = sphi 0, %s30
    %s19 = sphi 0, %s26
    %s20 = sphi 0, %s18
    %s21 = sphi 0, %s19
    %s22 = sphi 0, %s20
    %s23 = sphi 0, %s21
    %s35 = sphi 0, %s37
    %s38 = sphi 0, %s35
    %s39 = sphi 0, %s38
    %s55 = sphi 0, %s39
    %s59 = sphi 0, %s59
    %s61 = sphi 0, %s59
    %s62 = sphi 0, %s61
    %s76 = sphi 0, %s62
    %s80 = sphi 0, %s80
    %s82 = sphi 0, %s80
    %s83 = sphi 0, %s82
    %s97 = sphi 0, %s83
    %s101 = sphi 0, %s101
    %s103 = sphi 0, %s101
    %s104 = sphi 0, %s103
    %s118 = sphi 0, %s104
    %s126 = sphi 0, %s128
    %s129 = sphi 0, %s126
    %s130 = sphi 0, %s129
    %s146 = sphi 0, %s130
    %s154 = sphi 0, %s156
    %s157 = sphi 0, %s154
    %s158 = sphi 0, %s157
    %s174 = sphi 0, %s158
  $region4: #{cnn_1d_forward.12} parent=0 // loop_header_branch
    %14 = sbr.rel (%p12) target = $region8
  $region5: #{cnn_1d_forward.12} parent=0 // loop_body
    %s16 = ssub.s32 %s11, 1
    %s17 = ssub.s32 %s11, 2
    %s24 = sadd.s32 1, %s19
    %p25 = scmp.ge.s32.totalorder %s24, 1
    %s26 = scalar_select %p25, 0, %s24
    %s27 = sadd.s32 1, %s18
    %s28 = scalar_select %p25, %s27, %s18
    %p29 = scmp.ge.s32.totalorder %s28, 2
    %s30 = scalar_select %p29, 0, %s28
    %s31 = ssub.s32 %s18, %s30
    %s32 = ssub.s32 %s19, %s26
    %s33 = sor.u32 %s31, %s32
    %p34 = scmp.eq.s32.totalorder %s33, 0
    %s36 = sadd.s32 %s35, 1
    %s37 = scalar_select %p34, %s35, %s36
    %p40 = pneg %p34
    %p41 = scmp.eq.s32.totalorder %s11, 1
    %p42 = por %p40, %p41
    %p43 = scmp.ne.s32.totalorder %s35, %s38
    %p44 = scmp.eq.s32.totalorder %s11, 0
    %p45 = por %p43, %p44
    %p46 = scmp.ne.s32.totalorder %s35, %s38
    %p47 = scmp.eq.s32.totalorder %s16, 1
    %p48 = por %p46, %p47
    %p49 = scmp.ne.s32.totalorder %s38, %s39
    %p50 = scmp.eq.s32.totalorder %s16, 0
    %p51 = por %p49, %p50
    %p52 = scmp.ne.s32.totalorder %s38, %s39
    %p53 = scmp.eq.s32.totalorder %s17, 1
    %p54 = por %p52, %p53
    %p56 = scmp.ne.s32.totalorder %s39, %s55
    %p57 = scmp.eq.s32.totalorder %s17, 0
    %p58 = por %p56, %p57
    %s60 = sadd.s32 %s59, 1
    %p63 = scmp.eq.s32.totalorder %s11, 1
    %p64 = scmp.ne.s32.totalorder %s59, %s61
    %p65 = scmp.eq.s32.totalorder %s11, 0
    %p66 = por %p64, %p65
    %p67 = scmp.ne.s32.totalorder %s59, %s61
    %p68 = scmp.eq.s32.totalorder %s16, 1
    %p69 = por %p67, %p68
    %p70 = scmp.ne.s32.totalorder %s61, %s62
    %p71 = scmp.eq.s32.totalorder %s16, 0
    %p72 = por %p70, %p71
    %p73 = scmp.ne.s32.totalorder %s61, %s62
    %p74 = scmp.eq.s32.totalorder %s17, 1
    %p75 = por %p73, %p74
    %p77 = scmp.ne.s32.totalorder %s62, %s76
    %p78 = scmp.eq.s32.totalorder %s17, 0
    %p79 = por %p77, %p78
    %s81 = sadd.s32 %s80, 1
    %p84 = scmp.eq.s32.totalorder %s11, 1
    %p85 = scmp.ne.s32.totalorder %s80, %s82
    %p86 = scmp.eq.s32.totalorder %s11, 0
    %p87 = por %p85, %p86
    %p88 = scmp.ne.s32.totalorder %s80, %s82
    %p89 = scmp.eq.s32.totalorder %s16, 1
    %p90 = por %p88, %p89
    %p91 = scmp.ne.s32.totalorder %s82, %s83
    %p92 = scmp.eq.s32.totalorder %s16, 0
    %p93 = por %p91, %p92
    %p94 = scmp.ne.s32.totalorder %s82, %s83
    %p95 = scmp.eq.s32.totalorder %s17, 1
    %p96 = por %p94, %p95
    %p98 = scmp.ne.s32.totalorder %s83, %s97
    %p99 = scmp.eq.s32.totalorder %s17, 0
    %p100 = por %p98, %p99
    %s102 = sadd.s32 %s101, 1
    %p105 = scmp.eq.s32.totalorder %s11, 1
    %p106 = scmp.ne.s32.totalorder %s101, %s103
    %p107 = scmp.eq.s32.totalorder %s11, 0
    %p108 = por %p106, %p107
    %p109 = scmp.ne.s32.totalorder %s101, %s103
    %p110 = scmp.eq.s32.totalorder %s16, 1
    %p111 = por %p109, %p110
    %p112 = scmp.ne.s32.totalorder %s103, %s104
    %p113 = scmp.eq.s32.totalorder %s16, 0
    %p114 = por %p112, %p113
    %p115 = scmp.ne.s32.totalorder %s103, %s104
    %p116 = scmp.eq.s32.totalorder %s17, 1
    %p117 = por %p115, %p116
    %p119 = scmp.ne.s32.totalorder %s104, %s118
    %p120 = scmp.eq.s32.totalorder %s17, 0
    %p121 = por %p119, %p120
    %s122 = ssub.s32 %s18, %s30
    %s123 = ssub.s32 %s19, %s26
    %s124 = sor.u32 %s122, %s123
    %p125 = scmp.eq.s32.totalorder %s124, 0
    %s127 = sadd.s32 %s126, 1
    %s128 = scalar_select %p125, %s126, %s127
    %p131 = pneg %p125
    %p132 = scmp.eq.s32.totalorder %s11, 1
    %p133 = por %p131, %p132
    %p134 = scmp.ne.s32.totalorder %s126, %s129
    %p135 = scmp.eq.s32.totalorder %s11, 0
    %p136 = por %p134, %p135
    %p137 = scmp.ne.s32.totalorder %s126, %s129
    %p138 = scmp.eq.s32.totalorder %s16, 1
    %p139 = por %p137, %p138
    %p140 = scmp.ne.s32.totalorder %s129, %s130
    %p141 = scmp.eq.s32.totalorder %s16, 0
    %p142 = por %p140, %p141
    %p143 = scmp.ne.s32.totalorder %s129, %s130
    %p144 = scmp.eq.s32.totalorder %s17, 1
    %p145 = por %p143, %p144
    %p147 = scmp.ne.s32.totalorder %s130, %s146
    %p148 = scmp.eq.s32.totalorder %s17, 0
    %p149 = por %p147, %p148
    %s150 = ssub.s32 %s18, %s30
    %s151 = ssub.s32 %s19, %s26
    %s152 = sor.u32 %s150, %s151
    %p153 = scmp.eq.s32.totalorder %s152, 0
    %s155 = sadd.s32 %s154, 1
    %s156 = scalar_select %p153, %s154, %s155
    %p159 = pneg %p153
    %p160 = scmp.eq.s32.totalorder %s11, 1
    %p161 = por %p159, %p160
    %p162 = scmp.ne.s32.totalorder %s154, %s157
    %p163 = scmp.eq.s32.totalorder %s11, 0
    %p164 = por %p162, %p163
    %p165 = scmp.ne.s32.totalorder %s154, %s157
    %p166 = scmp.eq.s32.totalorder %s16, 1
    %p167 = por %p165, %p166
    %p168 = scmp.ne.s32.totalorder %s157, %s158
    %p169 = scmp.eq.s32.totalorder %s16, 0
    %p170 = por %p168, %p169
    %p171 = scmp.ne.s32.totalorder %s157, %s158
    %p172 = scmp.eq.s32.totalorder %s17, 1
    %p173 = por %p171, %p172
    %p175 = scmp.ne.s32.totalorder %s158, %s174
    %p176 = scmp.eq.s32.totalorder %s17, 0
    %p177 = por %p175, %p176
    %p178 = scmp.le.s32.totalorder 1, %s11
    %p179 = scmp.lt.s32.totalorder %s11, 3
    %p180 = pnand %p178, %p179
    %p181 = pneg %p180
    // Predicated region
    $region9: #{cnn_1d_forward.12} parent=5 // pred_check
      _
    $region10: #{cnn_1d_forward.12} parent=5 // pred_check_branch
      %183 = sbr.rel (%p180) target = $region12
    $region11: #{cnn_1d_forward.12} parent=5 // pred_region
      %s184 = ssub.s32 %s11, 1
      // Predicated region
      $region13: #{cnn_1d_forward.12} parent=11 // pred_check
        %p185 = pneg %p72
      $region14: #{cnn_1d_forward.12} parent=11 // pred_check_branch
        %187 = sbr.rel (%p185) target = $region16
      $region15: #{cnn_1d_forward.12} parent=11 // pred_region
        _
      $region16: #{cnn_1d_forward.12} parent=11 // pred_fallthru
        _
      // Predicated region
      $region17: #{cnn_1d_forward.12} parent=11 // pred_check
        %p188 = pneg %p93
      $region18: #{cnn_1d_forward.12} parent=11 // pred_check_branch
        %190 = sbr.rel (%p188) target = $region20
      $region19: #{cnn_1d_forward.12} parent=11 // pred_region
        _
      $region20: #{cnn_1d_forward.12} parent=11 // pred_fallthru
        _
      // Predicated region
      $region21: #{cnn_1d_forward.12} parent=11 // pred_check
        %p191 = pneg %p114
      $region22: #{cnn_1d_forward.12} parent=11 // pred_check_branch
        %193 = sbr.rel (%p191) target = $region24
      $region23: #{cnn_1d_forward.12} parent=11 // pred_region
        _
      $region24: #{cnn_1d_forward.12} parent=11 // pred_fallthru
        _
    $region12: #{cnn_1d_forward.12} parent=5 // pred_fallthru
      _
    %p194 = scmp.lt.s32.totalorder %s11, 2
    // Predicated region
    $region25: #{cnn_1d_forward.12} parent=5 // pred_check
      %p195 = pneg %p194
    $region26: #{cnn_1d_forward.12} parent=5 // pred_check_branch
      %197 = sbr.rel (%p195) target = $region28
    $region27: #{cnn_1d_forward.12} parent=5 // pred_region
      // Predicated region
      $region29: #{cnn_1d_forward.12} parent=27 // pred_check
        %p198 = pneg %p45
      $region30: #{cnn_1d_forward.12} parent=27 // pred_check_branch
        %200 = sbr.rel (%p198) target = $region32
      $region31: #{cnn_1d_forward.12} parent=27 // pred_region
        %p201 = scmp.lt.s32.totalorder %s18, 1
        %s202 = scalar_select %p201, %s18, 1
        %p203 = scmp.lt.s32.totalorder %s19, 0
        %s204 = scalar_select %p203, %s19, 0
        %s205 = smul.addr %s204, 2
        %s206 = smul.addr %s202, 2
        %s207 = sadd.s32 %s205, %s206
        %s208 = smul.addr %s207, 4
        %s209 = scalar_lea.vmem %s0, %s208
      $region32: #{cnn_1d_forward.12} parent=27 // pred_fallthru
        _
      // Predicated region
      $region33: #{cnn_1d_forward.12} parent=27 // pred_check
        %p210 = pneg %p136
      $region34: #{cnn_1d_forward.12} parent=27 // pred_check_branch
        %212 = sbr.rel (%p210) target = $region36
      $region35: #{cnn_1d_forward.12} parent=27 // pred_region
        %p213 = scmp.lt.s32.totalorder %s18, 1
        %s214 = scalar_select %p213, %s18, 1
        %p215 = scmp.lt.s32.totalorder %s19, 0
        %s216 = scalar_select %p215, %s19, 0
        %s217 = sadd.s32 %s216, %s214
        %s218 = smul.addr %s217, 4
        %s219 = scalar_lea.vmem %s4, %s218
      $region36: #{cnn_1d_forward.12} parent=27 // pred_fallthru
        _
    $region28: #{cnn_1d_forward.12} parent=5 // pred_fallthru
      _
    %p220 = scmp.le.s32.totalorder 1, %s11
    %p221 = scmp.lt.s32.totalorder %s11, 3
    %p222 = pnand %p220, %p221
    %p223 = pneg %p222
    // Predicated region
    $region37: #{cnn_1d_forward.12} parent=5 // pred_check
      _
    $region38: #{cnn_1d_forward.12} parent=5 // pred_check_branch
      %225 = sbr.rel (%p222) target = $region40
    $region39: #{cnn_1d_forward.12} parent=5 // pred_region
      %s226 = ssub.s32 %s11, 1
      %p227 = scmp.lt.s32.totalorder %s20, 1
      %s228 = scalar_select %p227, %s20, 1
      %p229 = scmp.lt.s32.totalorder %s21, 0
      %s230 = scalar_select %p229, %s21, 0
      %s231 = smul.addr %s230, 2
      %s232 = smul.addr %s228, 2
      %s233 = sadd.s32 %s231, %s232
      %s234 = smul.addr %s233, 4
      %s235 = scalar_lea.vmem %s0, %s234
      %p236 = pneg %p51
      %p237 = pneg %p48
      %p238 = pneg %p72
      %p239 = pneg %p69
      %p240 = pneg %p93
      %p241 = pneg %p90
      %p242 = pneg %p114
      %p243 = pneg %p111
      %p244 = scmp.lt.s32.totalorder %s20, 1
      %s245 = scalar_select %p244, %s20, 1
      %p246 = scmp.lt.s32.totalorder %s21, 0
      %s247 = scalar_select %p246, %s21, 0
      %s248 = sadd.s32 %s247, %s245
      %s249 = smul.addr %s248, 4
      %s250 = scalar_lea.vmem %s4, %s249
      %p251 = pneg %p142
      %p252 = pneg %p139
      %p253 = pneg %p170
      %p254 = pneg %p167
      %p255 = scmp.lt.s32.totalorder %s20, 1
      %s256 = scalar_select %p255, %s20, 1
      %p257 = scmp.lt.s32.totalorder %s21, 0
      %s258 = scalar_select %p257, %s21, 0
      %s259 = sadd.s32 %s258, %s256
      %s260 = smul.addr %s259, 4
      %s261 = scalar_lea.vmem %s5, %s260
      %p262 = scmp.lt.s32.totalorder %s20, 1
      %s263 = scalar_select %p262, %s20, 1
      %p264 = scmp.lt.s32.totalorder %s21, 0
      %s265 = scalar_select %p264, %s21, 0
      %s266 = smul.addr %s265, 2
      %s267 = smul.addr %s263, 2
      %s268 = sadd.s32 %s266, %s267
      %s269 = smul.addr %s268, 4
      %s270 = scalar_lea.vmem %s0, %s269
      %p271 = scmp.lt.s32.totalorder %s20, 1
      %s272 = scalar_select %p271, %s20, 1
      %p273 = scmp.lt.s32.totalorder %s21, 0
      %s274 = scalar_select %p273, %s21, 0
      %s275 = sadd.s32 %s274, %s272
      %s276 = smul.addr %s275, 4
      %s277 = scalar_lea.vmem %s4, %s276
      %p278 = scmp.lt.s32.totalorder %s20, 1
      %s279 = scalar_select %p278, %s20, 1
      %p280 = scmp.lt.s32.totalorder %s21, 0
      %s281 = scalar_select %p280, %s21, 0
      %s282 = sadd.s32 %s281, %s279
      %s283 = smul.addr %s282, 4
      %s284 = scalar_lea.vmem %s5, %s283
      %v286 = vld [vmem:[%s270] sm:$0xf]
      %v287 = vld [vmem:[%s1] sm:$0xf]
      %v288 = vld [vmem:[%s1 + $0x4] sm:$0xf]
      %v289 = vld [vmem:[%s1 + $0x8] sm:$0xf]
      %v290 = vld [vmem:[%s1 + $0xc] sm:$0xf]
      %v291 = vld [vmem:[%s1 + $0x10] sm:$0xf]
      %v292 = vld [vmem:[%s1 + $0x14] sm:$0xf]
      %v293 = vld [vmem:[%s1 + $0x18] sm:$0xf]
      %v294 = vld [vmem:[%s1 + $0x1c] sm:$0xf]
      %v295 = vld [vmem:[%s1 + $0x20] sm:$0xf]
      %v296 = vld [vmem:[%s1 + $0x24] sm:$0xf]
      %v297 = vld [vmem:[%s1 + $0x28] sm:$0xf]
      %v298 = vld [vmem:[%s1 + $0x2c] sm:$0xf]
      %v299 = vld [vmem:[%s1 + $0x30] sm:$0xf]
      %v300 = vld [vmem:[%s1 + $0x34] sm:$0xf]
      %v301 = vld [vmem:[%s1 + $0x38] sm:$0xf]
      %v302 = vld [vmem:[%s1 + $0x3c] sm:$0xf]
      %v303 = vld [vmem:[%s270 + $0x4] sm:$0x1]
      %s304 = scalar_lea.vmem %s1, 64
      %v305 = vld [vmem:[%s304] sm:$0xf]
      %v306 = vld [vmem:[%s304 + $0x4] sm:$0xf]
      %v307 = vld [vmem:[%s304 + $0x8] sm:$0xf]
      %v308 = vld [vmem:[%s304 + $0xc] sm:$0xf]
      %v309 = vld [vmem:[%s304 + $0x10] sm:$0xf]
      %v310 = vld [vmem:[%s304 + $0x14] sm:$0xf]
      %v311 = vld [vmem:[%s304 + $0x18] sm:$0xf]
      %v312 = vld [vmem:[%s304 + $0x1c] sm:$0xf]
      %v313 = vld [vmem:[%s304 + $0x20] sm:$0xf]
      %v314 = vld [vmem:[%s304 + $0x24] sm:$0xf]
      %v315 = vld [vmem:[%s304 + $0x28] sm:$0xf]
      %v316 = vld [vmem:[%s304 + $0x2c] sm:$0xf]
      %v317 = vld [vmem:[%s304 + $0x30] sm:$0xf]
      %v318 = vld [vmem:[%s304 + $0x34] sm:$0xf]
      %v319 = vld [vmem:[%s304 + $0x38] sm:$0xf]
      %v320 = vld [vmem:[%s304 + $0x3c] sm:$0xf]
      %v323 = vunpack.c.l.b16 %v286
      %v324 = vunpack.c.l.b16 %v303
      %v325 = vpack.c.b16 %v324, %v323
      %v327 = vshrl.u32 %v325, 16
      %v329 = vshll.u32 %v325, 16
      %v331 = vrot.slane %v329, 1
      %v332 = vor.u32 %v327, %v331
      %v350 = vunpack.c.l.b16 %v305
      %v351 = vunpack.c.l.b16 %v306
      %v352 = vunpack.c.l.b16 %v307
      %v353 = vunpack.c.l.b16 %v308
      %v354 = vunpack.c.l.b16 %v309
      %v355 = vunpack.c.l.b16 %v310
      %v356 = vunpack.c.l.b16 %v311
      %v357 = vunpack.c.l.b16 %v312
      %v358 = vunpack.c.l.b16 %v313
      %v359 = vunpack.c.l.b16 %v314
      %v360 = vunpack.c.l.b16 %v315
      %v361 = vunpack.c.l.b16 %v316
      %v362 = vunpack.c.l.b16 %v317
      %v363 = vunpack.c.l.b16 %v318
      %v364 = vunpack.c.l.b16 %v319
      %v365 = vunpack.c.l.b16 %v320
      %v366 = vpack.c.b16 %v351, %v350
      %v367 = vpack.c.b16 %v353, %v352
      %v368 = vpack.c.b16 %v355, %v354
      %v369 = vpack.c.b16 %v357, %v356
      %v370 = vpack.c.b16 %v359, %v358
      %v371 = vpack.c.b16 %v361, %v360
      %v372 = vpack.c.b16 %v363, %v362
      %v373 = vpack.c.b16 %v365, %v364
      %382 = vmatprep.subr.bf16.mxu0 0
      %383 = vmatpush1.bf16.msra.mxu0 %v366
      %384 = vmatprep.subr.bf16.mxu0 0
      %385 = vmatpush1.bf16.msra.mxu0 %v367
      %386 = vmatprep.subr.bf16.mxu0 0
      %387 = vmatpush1.bf16.msra.mxu0 %v368
      %388 = vmatprep.subr.bf16.mxu0 0
      %389 = vmatpush1.bf16.msra.mxu0 %v369
      %390 = vmatprep.subr.bf16.mxu0 0
      %391 = vmatpush1.bf16.msra.mxu0 %v370
      %392 = vmatprep.subr.bf16.mxu0 0
      %393 = vmatpush1.bf16.msra.mxu0 %v371
      %394 = vmatprep.subr.bf16.mxu0 0
      %395 = vmatpush1.bf16.msra.mxu0 %v372
      %396 = vmatprep.subr.bf16.mxu0 0
      %397 = vmatpush1.bf16.msra.mxu0 %v373
      %398 = vmatprep.subr.bf16.mxu0 0
      %399 = vmatpush1.bf16.msra.mxu0 0
      %400 = vmatprep.subr.bf16.mxu0 0
      %401 = vmatpush1.bf16.msra.mxu0 0
      %402 = vmatprep.subr.bf16.mxu0 0
      %403 = vmatpush1.bf16.msra.mxu0 0
      %404 = vmatprep.subr.bf16.mxu0 0
      %405 = vmatpush1.bf16.msra.mxu0 0
      %406 = vmatprep.subr.bf16.mxu0 0
      %407 = vmatpush1.bf16.msra.mxu0 0
      %408 = vmatprep.subr.bf16.mxu0 0
      %409 = vmatpush1.bf16.msra.mxu0 0
      %410 = vmatprep.subr.bf16.mxu0 0
      %411 = vmatpush1.bf16.msra.mxu0 0
      %412 = vmatprep.subr.bf16.mxu0 0
      %413 = vmatpush1.bf16.msra.mxu0 0
      %414 = vmatprep.mubr.bf16.mxu0 0
      %415 = vmatmul.mubr.bf16.gmra.mrb[0].mxu0 %v332
      %v416 = vpop.f32.mrb[0].mxu0
      %v417 = vadd.f32 0.0, %v416
      %v418 = vpop.f32.mrb[0].mxu0
      %v419 = vpop.f32.mrb[0].mxu0
      %v420 = vpop.f32.mrb[0].mxu0
      %421 = vdwg.mxu0
      %v438 = vunpack.c.l.b16 %v287
      %v439 = vunpack.c.l.b16 %v288
      %v440 = vunpack.c.l.b16 %v289
      %v441 = vunpack.c.l.b16 %v290
      %v442 = vunpack.c.l.b16 %v291
      %v443 = vunpack.c.l.b16 %v292
      %v444 = vunpack.c.l.b16 %v293
      %v445 = vunpack.c.l.b16 %v294
      %v446 = vunpack.c.l.b16 %v295
      %v447 = vunpack.c.l.b16 %v296
      %v448 = vunpack.c.l.b16 %v297
      %v449 = vunpack.c.l.b16 %v298
      %v450 = vunpack.c.l.b16 %v299
      %v451 = vunpack.c.l.b16 %v300
      %v452 = vunpack.c.l.b16 %v301
      %v453 = vunpack.c.l.b16 %v302
      %v454 = vpack.c.b16 %v439, %v438
      %v455 = vpack.c.b16 %v441, %v440
      %v456 = vpack.c.b16 %v443, %v442
      %v457 = vpack.c.b16 %v445, %v444
      %v458 = vpack.c.b16 %v447, %v446
      %v459 = vpack.c.b16 %v449, %v448
      %v460 = vpack.c.b16 %v451, %v450
      %v461 = vpack.c.b16 %v453, %v452
      %470 = vmatprep.subr.bf16.mxu0 0
      %471 = vmatpush1.bf16.msra.mxu0 %v454
      %472 = vmatprep.subr.bf16.mxu0 0
      %473 = vmatpush1.bf16.msra.mxu0 %v455
      %474 = vmatprep.subr.bf16.mxu0 0
      %475 = vmatpush1.bf16.msra.mxu0 %v456
      %476 = vmatprep.subr.bf16.mxu0 0
      %477 = vmatpush1.bf16.msra.mxu0 %v457
      %478 = vmatprep.subr.bf16.mxu0 0
      %479 = vmatpush1.bf16.msra.mxu0 %v458
      %480 = vmatprep.subr.bf16.mxu0 0
      %481 = vmatpush1.bf16.msra.mxu0 %v459
      %482 = vmatprep.subr.bf16.mxu0 0
      %483 = vmatpush1.bf16.msra.mxu0 %v460
      %484 = vmatprep.subr.bf16.mxu0 0
      %485 = vmatpush1.bf16.msra.mxu0 %v461
      %486 = vmatprep.subr.bf16.mxu0 0
      %487 = vmatpush1.bf16.msra.mxu0 0
      %488 = vmatprep.subr.bf16.mxu0 0
      %489 = vmatpush1.bf16.msra.mxu0 0
      %490 = vmatprep.subr.bf16.mxu0 0
      %491 = vmatpush1.bf16.msra.mxu0 0
      %492 = vmatprep.subr.bf16.mxu0 0
      %493 = vmatpush1.bf16.msra.mxu0 0
      %494 = vmatprep.subr.bf16.mxu0 0
      %495 = vmatpush1.bf16.msra.mxu0 0
      %496 = vmatprep.subr.bf16.mxu0 0
      %497 = vmatpush1.bf16.msra.mxu0 0
      %498 = vmatprep.subr.bf16.mxu0 0
      %499 = vmatpush1.bf16.msra.mxu0 0
      %500 = vmatprep.subr.bf16.mxu0 0
      %501 = vmatpush1.bf16.msra.mxu0 0
      %502 = vmatprep.mubr.bf16.mxu0 0
      %503 = vmatmul.mubr.bf16.gmra.mrb[0].mxu0 %v286
      %v504 = vpop.f32.mrb[0].mxu0
      %v505 = vadd.f32 %v417, %v504
      %v506 = vpop.f32.mrb[0].mxu0
      %v507 = vpop.f32.mrb[0].mxu0
      %v508 = vpop.f32.mrb[0].mxu0
      %509 = vdwg.mxu0
      %v510 = vld [vmem:[%s270] sm:$0xe]
      %s511 = scalar_lea.vmem %s1, 128
      %v512 = vld [vmem:[%s511] sm:$0xf]
      %v513 = vld [vmem:[%s511 + $0x4] sm:$0xf]
      %v514 = vld [vmem:[%s511 + $0x8] sm:$0xf]
      %v515 = vld [vmem:[%s511 + $0xc] sm:$0xf]
      %v516 = vld [vmem:[%s511 + $0x10] sm:$0xf]
      %v517 = vld [vmem:[%s511 + $0x14] sm:$0xf]
      %v518 = vld [vmem:[%s511 + $0x18] sm:$0xf]
      %v519 = vld [vmem:[%s511 + $0x1c] sm:$0xf]
      %v520 = vld [vmem:[%s511 + $0x20] sm:$0xf]
      %v521 = vld [vmem:[%s511 + $0x24] sm:$0xf]
      %v522 = vld [vmem:[%s511 + $0x28] sm:$0xf]
      %v523 = vld [vmem:[%s511 + $0x2c] sm:$0xf]
      %v524 = vld [vmem:[%s511 + $0x30] sm:$0xf]
      %v525 = vld [vmem:[%s511 + $0x34] sm:$0xf]
      %v526 = vld [vmem:[%s511 + $0x38] sm:$0xf]
      %v527 = vld [vmem:[%s511 + $0x3c] sm:$0xf]
      %v529 = vunpack.c.l.b16 %v510
      %v530 = vpack.c.b16 %v324, %v529
      %v531 = vrot.slane %v530, 1
      %v549 = vunpack.c.l.b16 %v512
      %v550 = vunpack.c.l.b16 %v513
      %v551 = vunpack.c.l.b16 %v514
      %v552 = vunpack.c.l.b16 %v515
      %v553 = vunpack.c.l.b16 %v516
      %v554 = vunpack.c.l.b16 %v517
      %v555 = vunpack.c.l.b16 %v518
      %v556 = vunpack.c.l.b16 %v519
      %v557 = vunpack.c.l.b16 %v520
      %v558 = vunpack.c.l.b16 %v521
      %v559 = vunpack.c.l.b16 %v522
      %v560 = vunpack.c.l.b16 %v523
      %v561 = vunpack.c.l.b16 %v524
      %v562 = vunpack.c.l.b16 %v525
      %v563 = vunpack.c.l.b16 %v526
      %v564 = vunpack.c.l.b16 %v527
      %v565 = vpack.c.b16 %v550, %v549
      %v566 = vpack.c.b16 %v552, %v551
      %v567 = vpack.c.b16 %v554, %v553
      %v568 = vpack.c.b16 %v556, %v555
      %v569 = vpack.c.b16 %v558, %v557
      %v570 = vpack.c.b16 %v560, %v559
      %v571 = vpack.c.b16 %v562, %v561
      %v572 = vpack.c.b16 %v564, %v563
      %581 = vmatprep.subr.bf16.mxu0 0
      %582 = vmatpush1.bf16.msra.mxu0 %v565
      %583 = vmatprep.subr.bf16.mxu0 0
      %584 = vmatpush1.bf16.msra.mxu0 %v566
      %585 = vmatprep.subr.bf16.mxu0 0
      %586 = vmatpush1.bf16.msra.mxu0 %v567
      %587 = vmatprep.subr.bf16.mxu0 0
      %588 = vmatpush1.bf16.msra.mxu0 %v568
      %589 = vmatprep.subr.bf16.mxu0 0
      %590 = vmatpush1.bf16.msra.mxu0 %v569
      %591 = vmatprep.subr.bf16.mxu0 0
      %592 = vmatpush1.bf16.msra.mxu0 %v570
      %593 = vmatprep.subr.bf16.mxu0 0
      %594 = vmatpush1.bf16.msra.mxu0 %v571
      %595 = vmatprep.subr.bf16.mxu0 0
      %596 = vmatpush1.bf16.msra.mxu0 %v572
      %597 = vmatprep.subr.bf16.mxu0 0
      %598 = vmatpush1.bf16.msra.mxu0 0
      %599 = vmatprep.subr.bf16.mxu0 0
      %600 = vmatpush1.bf16.msra.mxu0 0
      %601 = vmatprep.subr.bf16.mxu0 0
      %602 = vmatpush1.bf16.msra.mxu0 0
      %603 = vmatprep.subr.bf16.mxu0 0
      %604 = vmatpush1.bf16.msra.mxu0 0
      %605 = vmatprep.subr.bf16.mxu0 0
      %606 = vmatpush1.bf16.msra.mxu0 0
      %607 = vmatprep.subr.bf16.mxu0 0
      %608 = vmatpush1.bf16.msra.mxu0 0
      %609 = vmatprep.subr.bf16.mxu0 0
      %610 = vmatpush1.bf16.msra.mxu0 0
      %611 = vmatprep.subr.bf16.mxu0 0
      %612 = vmatpush1.bf16.msra.mxu0 0
      %613 = vmatprep.mubr.bf16.mxu0 0
      %614 = vmatmul.mubr.bf16.gmra.mrb[0].mxu0 %v531
      %v615 = vpop.f32.mrb[0].mxu0
      %v616 = vadd.f32 0.0, %v615
      %v617 = vpop.f32.mrb[0].mxu0
      %v618 = vpop.f32.mrb[0].mxu0
      %v619 = vpop.f32.mrb[0].mxu0
      %620 = vdwg.mxu0
      %v621 = vadd.f32 %v505, %v616
      %v622 = vld [vmem:[%s2] sm:$0x1]
      %v624 = vlaneseq
      %v625 = vshrl.u32 %v624, 7
      %v626 = vsub.s32 0, %v625
      %v627 = vrot.slane %v622, %v626
      %v629 = vmul.f32 %v621, %v627
      %v630 = vld [vmem:[%s3] sm:$0x1]
      %v632 = vlaneseq
      %v633 = vshrl.u32 %v632, 7
      %v634 = vsub.s32 0, %v633
      %v635 = vrot.slane %v630, %v634
      %v637 = vadd.f32 %v629, %v635
      %v638 = vld [vmem:[%s277] sm:$0xf]
      %v639 = vunpack.c.l.bf16 %v638
      %v640 = vadd.f32 %v637, %v639
      %v641 = vmax.f32 %v640, 0.0
      %v642 = vpack.c.bf16 %v641, %v641
      %643 = vst [vmem:[%s284] sm:$0xf] %v642
      %p644 = scmp.lt.s32.totalorder %s20, 1
      %s645 = scalar_select %p644, %s20, 1
      %p646 = scmp.lt.s32.totalorder %s21, 0
      %s647 = scalar_select %p646, %s21, 0
      %s648 = sadd.s32 %s647, %s645
      %s649 = smul.addr %s648, 4
      %s650 = scalar_lea.vmem %s5, %s649
      // Predicated region
      $region41: #{cnn_1d_forward.12} parent=39 // pred_check
        %p651 = pneg %p167
      $region42: #{cnn_1d_forward.12} parent=39 // pred_check_branch
        %653 = sbr.rel (%p651) target = $region44
      $region43: #{cnn_1d_forward.12} parent=39 // pred_region
        _
      $region44: #{cnn_1d_forward.12} parent=39 // pred_fallthru
        _
    $region40: #{cnn_1d_forward.12} parent=5 // pred_fallthru
      _
    %p654 = scmp.le.s32.totalorder 2, %s11
    // Predicated region
    $region45: #{cnn_1d_forward.12} parent=5 // pred_check
      %p655 = pneg %p654
    $region46: #{cnn_1d_forward.12} parent=5 // pred_check_branch
      %657 = sbr.rel (%p655) target = $region48
    $region47: #{cnn_1d_forward.12} parent=5 // pred_region
      %s658 = ssub.s32 %s11, 2
      // Predicated region
      $region49: #{cnn_1d_forward.12} parent=47 // pred_check
        %p659 = pneg %p173
      $region50: #{cnn_1d_forward.12} parent=47 // pred_check_branch
        %661 = sbr.rel (%p659) target = $region52
      $region51: #{cnn_1d_forward.12} parent=47 // pred_region
        %p662 = scmp.lt.s32.totalorder %s22, 1
        %s663 = scalar_select %p662, %s22, 1
        %p664 = scmp.lt.s32.totalorder %s23, 0
        %s665 = scalar_select %p664, %s23, 0
        %s666 = sadd.s32 %s665, %s663
        %s667 = smul.addr %s666, 4
        %s668 = scalar_lea.vmem %s5, %s667
      $region52: #{cnn_1d_forward.12} parent=47 // pred_fallthru
        _
    $region48: #{cnn_1d_forward.12} parent=5 // pred_fallthru
      _
  $region6: #{cnn_1d_forward.12} parent=0 // loop_footer
    %s15 = sadd.s32 1, %s11
  $region7: #{cnn_1d_forward.12} parent=0 // loop_footer_branch
    %10 = sbr.rel target = $region3
  $region8: #{cnn_1d_forward.12} parent=0 // loop_exit
    _

// kernel: cnn_1d_forward.13
$region0: #{cnn_1d_forward.13}
  #allocation0 [shape = 'u32[]', space=smem, size = 0x4, offset = 0x4, fixed_abs, tag = 'smem constant byte address 0x4 - core index']
  #allocation1 [shape = 'u32[144,128]{1,0:T(1,128)}', space=vmem, size = 0x12000, scoped, tag = 'internal scratch']
  %s0 = inlined_call_operand.vmem [shape: bf16[2,1,10,128], index: 0, kind: input, shape index: {}]
  %s1 = inlined_call_operand.vmem [shape: bf16[3,128,128], index: 1, kind: input, shape index: {}]
  %s2 = inlined_call_operand.vmem [shape: f32[1,128], index: 2, kind: input, shape index: {}]
  %s3 = inlined_call_operand.vmem [shape: f32[1,128], index: 3, kind: input, shape index: {}]
  %s4 = inlined_call_operand.vmem [shape: bf16[2,8,128], index: 4, kind: output, shape index: {}]
  %s5 = sld [smem:[#allocation0]]
  $region49: #{cnn_1d_forward.13} parent=0
    _
  %s7 = ssub.s32 1, %s5
  %s8 = scalar_select 0, %s7, %s5
  loop: start=0, step=1, limit=4
  $region2: #{cnn_1d_forward.13} parent=0 // loop_pre_header
    _
  $region3: #{cnn_1d_forward.13} parent=0 // loop_header
    %s10 = sphi 0, %s14
    %p11 = scmp.ge.s32.totalorder %s10, 4
    %s17 = sphi 0, %s29
    %s18 = sphi 0, %s25
    %s19 = sphi 0, %s17
    %s20 = sphi 0, %s18
    %s21 = sphi 0, %s19
    %s22 = sphi 0, %s20
    %s34 = sphi 0, %s36
    %s37 = sphi 0, %s34
    %s38 = sphi 0, %s37
    %s54 = sphi 0, %s38
    %s58 = sphi 0, %s58
    %s60 = sphi 0, %s58
    %s61 = sphi 0, %s60
    %s75 = sphi 0, %s61
    %s79 = sphi 0, %s79
    %s81 = sphi 0, %s79
    %s82 = sphi 0, %s81
    %s96 = sphi 0, %s82
    %s100 = sphi 0, %s100
    %s102 = sphi 0, %s100
    %s103 = sphi 0, %s102
    %s117 = sphi 0, %s103
    %s125 = sphi 0, %s127
    %s128 = sphi 0, %s125
    %s129 = sphi 0, %s128
    %s145 = sphi 0, %s129
  $region4: #{cnn_1d_forward.13} parent=0 // loop_header_branch
    %13 = sbr.rel (%p11) target = $region8
  $region5: #{cnn_1d_forward.13} parent=0 // loop_body
    %s15 = ssub.s32 %s10, 1
    %s16 = ssub.s32 %s10, 2
    %s23 = sadd.s32 1, %s18
    %p24 = scmp.ge.s32.totalorder %s23, 1
    %s25 = scalar_select %p24, 0, %s23
    %s26 = sadd.s32 1, %s17
    %s27 = scalar_select %p24, %s26, %s17
    %p28 = scmp.ge.s32.totalorder %s27, 2
    %s29 = scalar_select %p28, 0, %s27
    %s30 = ssub.s32 %s17, %s29
    %s31 = ssub.s32 %s18, %s25
    %s32 = sor.u32 %s30, %s31
    %p33 = scmp.eq.s32.totalorder %s32, 0
    %s35 = sadd.s32 %s34, 1
    %s36 = scalar_select %p33, %s34, %s35
    %p39 = pneg %p33
    %p40 = scmp.eq.s32.totalorder %s10, 1
    %p41 = por %p39, %p40
    %p42 = scmp.ne.s32.totalorder %s34, %s37
    %p43 = scmp.eq.s32.totalorder %s10, 0
    %p44 = por %p42, %p43
    %p45 = scmp.ne.s32.totalorder %s34, %s37
    %p46 = scmp.eq.s32.totalorder %s15, 1
    %p47 = por %p45, %p46
    %p48 = scmp.ne.s32.totalorder %s37, %s38
    %p49 = scmp.eq.s32.totalorder %s15, 0
    %p50 = por %p48, %p49
    %p51 = scmp.ne.s32.totalorder %s37, %s38
    %p52 = scmp.eq.s32.totalorder %s16, 1
    %p53 = por %p51, %p52
    %p55 = scmp.ne.s32.totalorder %s38, %s54
    %p56 = scmp.eq.s32.totalorder %s16, 0
    %p57 = por %p55, %p56
    %s59 = sadd.s32 %s58, 1
    %p62 = scmp.eq.s32.totalorder %s10, 1
    %p63 = scmp.ne.s32.totalorder %s58, %s60
    %p64 = scmp.eq.s32.totalorder %s10, 0
    %p65 = por %p63, %p64
    %p66 = scmp.ne.s32.totalorder %s58, %s60
    %p67 = scmp.eq.s32.totalorder %s15, 1
    %p68 = por %p66, %p67
    %p69 = scmp.ne.s32.totalorder %s60, %s61
    %p70 = scmp.eq.s32.totalorder %s15, 0
    %p71 = por %p69, %p70
    %p72 = scmp.ne.s32.totalorder %s60, %s61
    %p73 = scmp.eq.s32.totalorder %s16, 1
    %p74 = por %p72, %p73
    %p76 = scmp.ne.s32.totalorder %s61, %s75
    %p77 = scmp.eq.s32.totalorder %s16, 0
    %p78 = por %p76, %p77
    %s80 = sadd.s32 %s79, 1
    %p83 = scmp.eq.s32.totalorder %s10, 1
    %p84 = scmp.ne.s32.totalorder %s79, %s81
    %p85 = scmp.eq.s32.totalorder %s10, 0
    %p86 = por %p84, %p85
    %p87 = scmp.ne.s32.totalorder %s79, %s81
    %p88 = scmp.eq.s32.totalorder %s15, 1
    %p89 = por %p87, %p88
    %p90 = scmp.ne.s32.totalorder %s81, %s82
    %p91 = scmp.eq.s32.totalorder %s15, 0
    %p92 = por %p90, %p91
    %p93 = scmp.ne.s32.totalorder %s81, %s82
    %p94 = scmp.eq.s32.totalorder %s16, 1
    %p95 = por %p93, %p94
    %p97 = scmp.ne.s32.totalorder %s82, %s96
    %p98 = scmp.eq.s32.totalorder %s16, 0
    %p99 = por %p97, %p98
    %s101 = sadd.s32 %s100, 1
    %p104 = scmp.eq.s32.totalorder %s10, 1
    %p105 = scmp.ne.s32.totalorder %s100, %s102
    %p106 = scmp.eq.s32.totalorder %s10, 0
    %p107 = por %p105, %p106
    %p108 = scmp.ne.s32.totalorder %s100, %s102
    %p109 = scmp.eq.s32.totalorder %s15, 1
    %p110 = por %p108, %p109
    %p111 = scmp.ne.s32.totalorder %s102, %s103
    %p112 = scmp.eq.s32.totalorder %s15, 0
    %p113 = por %p111, %p112
    %p114 = scmp.ne.s32.totalorder %s102, %s103
    %p115 = scmp.eq.s32.totalorder %s16, 1
    %p116 = por %p114, %p115
    %p118 = scmp.ne.s32.totalorder %s103, %s117
    %p119 = scmp.eq.s32.totalorder %s16, 0
    %p120 = por %p118, %p119
    %s121 = ssub.s32 %s17, %s29
    %s122 = ssub.s32 %s18, %s25
    %s123 = sor.u32 %s121, %s122
    %p124 = scmp.eq.s32.totalorder %s123, 0
    %s126 = sadd.s32 %s125, 1
    %s127 = scalar_select %p124, %s125, %s126
    %p130 = pneg %p124
    %p131 = scmp.eq.s32.totalorder %s10, 1
    %p132 = por %p130, %p131
    %p133 = scmp.ne.s32.totalorder %s125, %s128
    %p134 = scmp.eq.s32.totalorder %s10, 0
    %p135 = por %p133, %p134
    %p136 = scmp.ne.s32.totalorder %s125, %s128
    %p137 = scmp.eq.s32.totalorder %s15, 1
    %p138 = por %p136, %p137
    %p139 = scmp.ne.s32.totalorder %s128, %s129
    %p140 = scmp.eq.s32.totalorder %s15, 0
    %p141 = por %p139, %p140
    %p142 = scmp.ne.s32.totalorder %s128, %s129
    %p143 = scmp.eq.s32.totalorder %s16, 1
    %p144 = por %p142, %p143
    %p146 = scmp.ne.s32.totalorder %s129, %s145
    %p147 = scmp.eq.s32.totalorder %s16, 0
    %p148 = por %p146, %p147
    %p149 = scmp.le.s32.totalorder 1, %s10
    %p150 = scmp.lt.s32.totalorder %s10, 3
    %p151 = pnand %p149, %p150
    %p152 = pneg %p151
    // Predicated region
    $region9: #{cnn_1d_forward.13} parent=5 // pred_check
      _
    $region10: #{cnn_1d_forward.13} parent=5 // pred_check_branch
      %154 = sbr.rel (%p151) target = $region12
    $region11: #{cnn_1d_forward.13} parent=5 // pred_region
      %s155 = ssub.s32 %s10, 1
      // Predicated region
      $region13: #{cnn_1d_forward.13} parent=11 // pred_check
        %p156 = pneg %p71
      $region14: #{cnn_1d_forward.13} parent=11 // pred_check_branch
        %158 = sbr.rel (%p156) target = $region16
      $region15: #{cnn_1d_forward.13} parent=11 // pred_region
        _
      $region16: #{cnn_1d_forward.13} parent=11 // pred_fallthru
        _
      // Predicated region
      $region17: #{cnn_1d_forward.13} parent=11 // pred_check
        %p159 = pneg %p92
      $region18: #{cnn_1d_forward.13} parent=11 // pred_check_branch
        %161 = sbr.rel (%p159) target = $region20
      $region19: #{cnn_1d_forward.13} parent=11 // pred_region
        _
      $region20: #{cnn_1d_forward.13} parent=11 // pred_fallthru
        _
      // Predicated region
      $region21: #{cnn_1d_forward.13} parent=11 // pred_check
        %p162 = pneg %p113
      $region22: #{cnn_1d_forward.13} parent=11 // pred_check_branch
        %164 = sbr.rel (%p162) target = $region24
      $region23: #{cnn_1d_forward.13} parent=11 // pred_region
        _
      $region24: #{cnn_1d_forward.13} parent=11 // pred_fallthru
        _
    $region12: #{cnn_1d_forward.13} parent=5 // pred_fallthru
      _
    %p165 = scmp.lt.s32.totalorder %s10, 2
    // Predicated region
    $region25: #{cnn_1d_forward.13} parent=5 // pred_check
      %p166 = pneg %p165
    $region26: #{cnn_1d_forward.13} parent=5 // pred_check_branch
      %168 = sbr.rel (%p166) target = $region28
    $region27: #{cnn_1d_forward.13} parent=5 // pred_region
      // Predicated region
      $region29: #{cnn_1d_forward.13} parent=27 // pred_check
        %p169 = pneg %p44
      $region30: #{cnn_1d_forward.13} parent=27 // pred_check_branch
        %171 = sbr.rel (%p169) target = $region32
      $region31: #{cnn_1d_forward.13} parent=27 // pred_region
        %p172 = scmp.lt.s32.totalorder %s17, 1
        %s173 = scalar_select %p172, %s17, 1
        %p174 = scmp.lt.s32.totalorder %s18, 0
        %s175 = scalar_select %p174, %s18, 0
        %s176 = smul.addr %s175, 2
        %s177 = smul.addr %s173, 2
        %s178 = sadd.s32 %s176, %s177
        %s179 = smul.addr %s178, 4
        %s180 = scalar_lea.vmem %s0, %s179
      $region32: #{cnn_1d_forward.13} parent=27 // pred_fallthru
        _
    $region28: #{cnn_1d_forward.13} parent=5 // pred_fallthru
      _
    %p181 = scmp.le.s32.totalorder 1, %s10
    %p182 = scmp.lt.s32.totalorder %s10, 3
    %p183 = pnand %p181, %p182
    %p184 = pneg %p183
    // Predicated region
    $region33: #{cnn_1d_forward.13} parent=5 // pred_check
      _
    $region34: #{cnn_1d_forward.13} parent=5 // pred_check_branch
      %186 = sbr.rel (%p183) target = $region36
    $region35: #{cnn_1d_forward.13} parent=5 // pred_region
      %s187 = ssub.s32 %s10, 1
      %p188 = scmp.lt.s32.totalorder %s19, 1
      %s189 = scalar_select %p188, %s19, 1
      %p190 = scmp.lt.s32.totalorder %s20, 0
      %s191 = scalar_select %p190, %s20, 0
      %s192 = smul.addr %s191, 2
      %s193 = smul.addr %s189, 2
      %s194 = sadd.s32 %s192, %s193
      %s195 = smul.addr %s194, 4
      %s196 = scalar_lea.vmem %s0, %s195
      %p197 = pneg %p50
      %p198 = pneg %p47
      %p199 = pneg %p71
      %p200 = pneg %p68
      %p201 = pneg %p92
      %p202 = pneg %p89
      %p203 = pneg %p113
      %p204 = pneg %p110
      %p205 = pneg %p141
      %p206 = pneg %p138
      %p207 = scmp.lt.s32.totalorder %s19, 1
      %s208 = scalar_select %p207, %s19, 1
      %p209 = scmp.lt.s32.totalorder %s20, 0
      %s210 = scalar_select %p209, %s20, 0
      %s211 = sadd.s32 %s210, %s208
      %s212 = smul.addr %s211, 4
      %s213 = scalar_lea.vmem %s4, %s212
      %p214 = scmp.lt.s32.totalorder %s19, 1
      %s215 = scalar_select %p214, %s19, 1
      %p216 = scmp.lt.s32.totalorder %s20, 0
      %s217 = scalar_select %p216, %s20, 0
      %s218 = smul.addr %s217, 2
      %s219 = smul.addr %s215, 2
      %s220 = sadd.s32 %s218, %s219
      %s221 = smul.addr %s220, 4
      %s222 = scalar_lea.vmem %s0, %s221
      %p223 = scmp.lt.s32.totalorder %s19, 1
      %s224 = scalar_select %p223, %s19, 1
      %p225 = scmp.lt.s32.totalorder %s20, 0
      %s226 = scalar_select %p225, %s20, 0
      %s227 = sadd.s32 %s226, %s224
      %s228 = smul.addr %s227, 4
      %s229 = scalar_lea.vmem %s4, %s228
      %v231 = vld [vmem:[%s222] sm:$0xf]
      %v232 = vld [vmem:[%s1] sm:$0xf]
      %v233 = vld [vmem:[%s1 + $0x4] sm:$0xf]
      %v234 = vld [vmem:[%s1 + $0x8] sm:$0xf]
      %v235 = vld [vmem:[%s1 + $0xc] sm:$0xf]
      %v236 = vld [vmem:[%s1 + $0x10] sm:$0xf]
      %v237 = vld [vmem:[%s1 + $0x14] sm:$0xf]
      %v238 = vld [vmem:[%s1 + $0x18] sm:$0xf]
      %v239 = vld [vmem:[%s1 + $0x1c] sm:$0xf]
      %v240 = vld [vmem:[%s1 + $0x20] sm:$0xf]
      %v241 = vld [vmem:[%s1 + $0x24] sm:$0xf]
      %v242 = vld [vmem:[%s1 + $0x28] sm:$0xf]
      %v243 = vld [vmem:[%s1 + $0x2c] sm:$0xf]
      %v244 = vld [vmem:[%s1 + $0x30] sm:$0xf]
      %v245 = vld [vmem:[%s1 + $0x34] sm:$0xf]
      %v246 = vld [vmem:[%s1 + $0x38] sm:$0xf]
      %v247 = vld [vmem:[%s1 + $0x3c] sm:$0xf]
      %v248 = vld [vmem:[%s222 + $0x4] sm:$0x1]
      %s249 = scalar_lea.vmem %s1, 64
      %v250 = vld [vmem:[%s249] sm:$0xf]
      %v251 = vld [vmem:[%s249 + $0x4] sm:$0xf]
      %v252 = vld [vmem:[%s249 + $0x8] sm:$0xf]
      %v253 = vld [vmem:[%s249 + $0xc] sm:$0xf]
      %v254 = vld [vmem:[%s249 + $0x10] sm:$0xf]
      %v255 = vld [vmem:[%s249 + $0x14] sm:$0xf]
      %v256 = vld [vmem:[%s249 + $0x18] sm:$0xf]
      %v257 = vld [vmem:[%s249 + $0x1c] sm:$0xf]
      %v258 = vld [vmem:[%s249 + $0x20] sm:$0xf]
      %v259 = vld [vmem:[%s249 + $0x24] sm:$0xf]
      %v260 = vld [vmem:[%s249 + $0x28] sm:$0xf]
      %v261 = vld [vmem:[%s249 + $0x2c] sm:$0xf]
      %v262 = vld [vmem:[%s249 + $0x30] sm:$0xf]
      %v263 = vld [vmem:[%s249 + $0x34] sm:$0xf]
      %v264 = vld [vmem:[%s249 + $0x38] sm:$0xf]
      %v265 = vld [vmem:[%s249 + $0x3c] sm:$0xf]
      %v268 = vunpack.c.l.b16 %v231
      %v269 = vunpack.c.l.b16 %v248
      %v270 = vpack.c.b16 %v269, %v268
      %v272 = vshrl.u32 %v270, 16
      %v274 = vshll.u32 %v270, 16
      %v276 = vrot.slane %v274, 1
      %v277 = vor.u32 %v272, %v276
      %v295 = vunpack.c.l.b16 %v250
      %v296 = vunpack.c.l.b16 %v251
      %v297 = vunpack.c.l.b16 %v252
      %v298 = vunpack.c.l.b16 %v253
      %v299 = vunpack.c.l.b16 %v254
      %v300 = vunpack.c.l.b16 %v255
      %v301 = vunpack.c.l.b16 %v256
      %v302 = vunpack.c.l.b16 %v257
      %v303 = vunpack.c.l.b16 %v258
      %v304 = vunpack.c.l.b16 %v259
      %v305 = vunpack.c.l.b16 %v260
      %v306 = vunpack.c.l.b16 %v261
      %v307 = vunpack.c.l.b16 %v262
      %v308 = vunpack.c.l.b16 %v263
      %v309 = vunpack.c.l.b16 %v264
      %v310 = vunpack.c.l.b16 %v265
      %v311 = vpack.c.b16 %v296, %v295
      %v312 = vpack.c.b16 %v298, %v297
      %v313 = vpack.c.b16 %v300, %v299
      %v314 = vpack.c.b16 %v302, %v301
      %v315 = vpack.c.b16 %v304, %v303
      %v316 = vpack.c.b16 %v306, %v305
      %v317 = vpack.c.b16 %v308, %v307
      %v318 = vpack.c.b16 %v310, %v309
      %327 = vmatprep.subr.bf16.mxu0 0
      %328 = vmatpush1.bf16.msra.mxu0 %v311
      %329 = vmatprep.subr.bf16.mxu0 0
      %330 = vmatpush1.bf16.msra.mxu0 %v312
      %331 = vmatprep.subr.bf16.mxu0 0
      %332 = vmatpush1.bf16.msra.mxu0 %v313
      %333 = vmatprep.subr.bf16.mxu0 0
      %334 = vmatpush1.bf16.msra.mxu0 %v314
      %335 = vmatprep.subr.bf16.mxu0 0
      %336 = vmatpush1.bf16.msra.mxu0 %v315
      %337 = vmatprep.subr.bf16.mxu0 0
      %338 = vmatpush1.bf16.msra.mxu0 %v316
      %339 = vmatprep.subr.bf16.mxu0 0
      %340 = vmatpush1.bf16.msra.mxu0 %v317
      %341 = vmatprep.subr.bf16.mxu0 0
      %342 = vmatpush1.bf16.msra.mxu0 %v318
      %343 = vmatprep.subr.bf16.mxu0 0
      %344 = vmatpush1.bf16.msra.mxu0 0
      %345 = vmatprep.subr.bf16.mxu0 0
      %346 = vmatpush1.bf16.msra.mxu0 0
      %347 = vmatprep.subr.bf16.mxu0 0
      %348 = vmatpush1.bf16.msra.mxu0 0
      %349 = vmatprep.subr.bf16.mxu0 0
      %350 = vmatpush1.bf16.msra.mxu0 0
      %351 = vmatprep.subr.bf16.mxu0 0
      %352 = vmatpush1.bf16.msra.mxu0 0
      %353 = vmatprep.subr.bf16.mxu0 0
      %354 = vmatpush1.bf16.msra.mxu0 0
      %355 = vmatprep.subr.bf16.mxu0 0
      %356 = vmatpush1.bf16.msra.mxu0 0
      %357 = vmatprep.subr.bf16.mxu0 0
      %358 = vmatpush1.bf16.msra.mxu0 0
      %359 = vmatprep.mubr.bf16.mxu0 0
      %360 = vmatmul.mubr.bf16.gmra.mrb[0].mxu0 %v277
      %v361 = vpop.f32.mrb[0].mxu0
      %v362 = vadd.f32 0.0, %v361
      %v363 = vpop.f32.mrb[0].mxu0
      %v364 = vpop.f32.mrb[0].mxu0
      %v365 = vpop.f32.mrb[0].mxu0
      %366 = vdwg.mxu0
      %v383 = vunpack.c.l.b16 %v232
      %v384 = vunpack.c.l.b16 %v233
      %v385 = vunpack.c.l.b16 %v234
      %v386 = vunpack.c.l.b16 %v235
      %v387 = vunpack.c.l.b16 %v236
      %v388 = vunpack.c.l.b16 %v237
      %v389 = vunpack.c.l.b16 %v238
      %v390 = vunpack.c.l.b16 %v239
      %v391 = vunpack.c.l.b16 %v240
      %v392 = vunpack.c.l.b16 %v241
      %v393 = vunpack.c.l.b16 %v242
      %v394 = vunpack.c.l.b16 %v243
      %v395 = vunpack.c.l.b16 %v244
      %v396 = vunpack.c.l.b16 %v245
      %v397 = vunpack.c.l.b16 %v246
      %v398 = vunpack.c.l.b16 %v247
      %v399 = vpack.c.b16 %v384, %v383
      %v400 = vpack.c.b16 %v386, %v385
      %v401 = vpack.c.b16 %v388, %v387
      %v402 = vpack.c.b16 %v390, %v389
      %v403 = vpack.c.b16 %v392, %v391
      %v404 = vpack.c.b16 %v394, %v393
      %v405 = vpack.c.b16 %v396, %v395
      %v406 = vpack.c.b16 %v398, %v397
      %415 = vmatprep.subr.bf16.mxu0 0
      %416 = vmatpush1.bf16.msra.mxu0 %v399
      %417 = vmatprep.subr.bf16.mxu0 0
      %418 = vmatpush1.bf16.msra.mxu0 %v400
      %419 = vmatprep.subr.bf16.mxu0 0
      %420 = vmatpush1.bf16.msra.mxu0 %v401
      %421 = vmatprep.subr.bf16.mxu0 0
      %422 = vmatpush1.bf16.msra.mxu0 %v402
      %423 = vmatprep.subr.bf16.mxu0 0
      %424 = vmatpush1.bf16.msra.mxu0 %v403
      %425 = vmatprep.subr.bf16.mxu0 0
      %426 = vmatpush1.bf16.msra.mxu0 %v404
      %427 = vmatprep.subr.bf16.mxu0 0
      %428 = vmatpush1.bf16.msra.mxu0 %v405
      %429 = vmatprep.subr.bf16.mxu0 0
      %430 = vmatpush1.bf16.msra.mxu0 %v406
      %431 = vmatprep.subr.bf16.mxu0 0
      %432 = vmatpush1.bf16.msra.mxu0 0
      %433 = vmatprep.subr.bf16.mxu0 0
      %434 = vmatpush1.bf16.msra.mxu0 0
      %435 = vmatprep.subr.bf16.mxu0 0
      %436 = vmatpush1.bf16.msra.mxu0 0
      %437 = vmatprep.subr.bf16.mxu0 0
      %438 = vmatpush1.bf16.msra.mxu0 0
      %439 = vmatprep.subr.bf16.mxu0 0
      %440 = vmatpush1.bf16.msra.mxu0 0
      %441 = vmatprep.subr.bf16.mxu0 0
      %442 = vmatpush1.bf16.msra.mxu0 0
      %443 = vmatprep.subr.bf16.mxu0 0
      %444 = vmatpush1.bf16.msra.mxu0 0
      %445 = vmatprep.subr.bf16.mxu0 0
      %446 = vmatpush1.bf16.msra.mxu0 0
      %447 = vmatprep.mubr.bf16.mxu0 0
      %448 = vmatmul.mubr.bf16.gmra.mrb[0].mxu0 %v231
      %v449 = vpop.f32.mrb[0].mxu0
      %v450 = vadd.f32 %v362, %v449
      %v451 = vpop.f32.mrb[0].mxu0
      %v452 = vpop.f32.mrb[0].mxu0
      %v453 = vpop.f32.mrb[0].mxu0
      %454 = vdwg.mxu0
      %v455 = vld [vmem:[%s222] sm:$0xe]
      %s456 = scalar_lea.vmem %s1, 128
      %v457 = vld [vmem:[%s456] sm:$0xf]
      %v458 = vld [vmem:[%s456 + $0x4] sm:$0xf]
      %v459 = vld [vmem:[%s456 + $0x8] sm:$0xf]
      %v460 = vld [vmem:[%s456 + $0xc] sm:$0xf]
      %v461 = vld [vmem:[%s456 + $0x10] sm:$0xf]
      %v462 = vld [vmem:[%s456 + $0x14] sm:$0xf]
      %v463 = vld [vmem:[%s456 + $0x18] sm:$0xf]
      %v464 = vld [vmem:[%s456 + $0x1c] sm:$0xf]
      %v465 = vld [vmem:[%s456 + $0x20] sm:$0xf]
      %v466 = vld [vmem:[%s456 + $0x24] sm:$0xf]
      %v467 = vld [vmem:[%s456 + $0x28] sm:$0xf]
      %v468 = vld [vmem:[%s456 + $0x2c] sm:$0xf]
      %v469 = vld [vmem:[%s456 + $0x30] sm:$0xf]
      %v470 = vld [vmem:[%s456 + $0x34] sm:$0xf]
      %v471 = vld [vmem:[%s456 + $0x38] sm:$0xf]
      %v472 = vld [vmem:[%s456 + $0x3c] sm:$0xf]
      %v474 = vunpack.c.l.b16 %v455
      %v475 = vpack.c.b16 %v269, %v474
      %v476 = vrot.slane %v475, 1
      %v494 = vunpack.c.l.b16 %v457
      %v495 = vunpack.c.l.b16 %v458
      %v496 = vunpack.c.l.b16 %v459
      %v497 = vunpack.c.l.b16 %v460
      %v498 = vunpack.c.l.b16 %v461
      %v499 = vunpack.c.l.b16 %v462
      %v500 = vunpack.c.l.b16 %v463
      %v501 = vunpack.c.l.b16 %v464
      %v502 = vunpack.c.l.b16 %v465
      %v503 = vunpack.c.l.b16 %v466
      %v504 = vunpack.c.l.b16 %v467
      %v505 = vunpack.c.l.b16 %v468
      %v506 = vunpack.c.l.b16 %v469
      %v507 = vunpack.c.l.b16 %v470
      %v508 = vunpack.c.l.b16 %v471
      %v509 = vunpack.c.l.b16 %v472
      %v510 = vpack.c.b16 %v495, %v494
      %v511 = vpack.c.b16 %v497, %v496
      %v512 = vpack.c.b16 %v499, %v498
      %v513 = vpack.c.b16 %v501, %v500
      %v514 = vpack.c.b16 %v503, %v502
      %v515 = vpack.c.b16 %v505, %v504
      %v516 = vpack.c.b16 %v507, %v506
      %v517 = vpack.c.b16 %v509, %v508
      %526 = vmatprep.subr.bf16.mxu0 0
      %527 = vmatpush1.bf16.msra.mxu0 %v510
      %528 = vmatprep.subr.bf16.mxu0 0
      %529 = vmatpush1.bf16.msra.mxu0 %v511
      %530 = vmatprep.subr.bf16.mxu0 0
      %531 = vmatpush1.bf16.msra.mxu0 %v512
      %532 = vmatprep.subr.bf16.mxu0 0
      %533 = vmatpush1.bf16.msra.mxu0 %v513
      %534 = vmatprep.subr.bf16.mxu0 0
      %535 = vmatpush1.bf16.msra.mxu0 %v514
      %536 = vmatprep.subr.bf16.mxu0 0
      %537 = vmatpush1.bf16.msra.mxu0 %v515
      %538 = vmatprep.subr.bf16.mxu0 0
      %539 = vmatpush1.bf16.msra.mxu0 %v516
      %540 = vmatprep.subr.bf16.mxu0 0
      %541 = vmatpush1.bf16.msra.mxu0 %v517
      %542 = vmatprep.subr.bf16.mxu0 0
      %543 = vmatpush1.bf16.msra.mxu0 0
      %544 = vmatprep.subr.bf16.mxu0 0
      %545 = vmatpush1.bf16.msra.mxu0 0
      %546 = vmatprep.subr.bf16.mxu0 0
      %547 = vmatpush1.bf16.msra.mxu0 0
      %548 = vmatprep.subr.bf16.mxu0 0
      %549 = vmatpush1.bf16.msra.mxu0 0
      %550 = vmatprep.subr.bf16.mxu0 0
      %551 = vmatpush1.bf16.msra.mxu0 0
      %552 = vmatprep.subr.bf16.mxu0 0
      %553 = vmatpush1.bf16.msra.mxu0 0
      %554 = vmatprep.subr.bf16.mxu0 0
      %555 = vmatpush1.bf16.msra.mxu0 0
      %556 = vmatprep.subr.bf16.mxu0 0
      %557 = vmatpush1.bf16.msra.mxu0 0
      %558 = vmatprep.mubr.bf16.mxu0 0
      %559 = vmatmul.mubr.bf16.gmra.mrb[0].mxu0 %v476
      %v560 = vpop.f32.mrb[0].mxu0
      %v561 = vadd.f32 0.0, %v560
      %v562 = vpop.f32.mrb[0].mxu0
      %v563 = vpop.f32.mrb[0].mxu0
      %v564 = vpop.f32.mrb[0].mxu0
      %565 = vdwg.mxu0
      %v566 = vadd.f32 %v450, %v561
      %v567 = vld [vmem:[%s2] sm:$0x1]
      %v569 = vlaneseq
      %v570 = vshrl.u32 %v569, 7
      %v571 = vsub.s32 0, %v570
      %v572 = vrot.slane %v567, %v571
      %v574 = vmul.f32 %v566, %v572
      %v575 = vld [vmem:[%s3] sm:$0x1]
      %v577 = vlaneseq
      %v578 = vshrl.u32 %v577, 7
      %v579 = vsub.s32 0, %v578
      %v580 = vrot.slane %v575, %v579
      %v582 = vadd.f32 %v574, %v580
      %v583 = vmax.f32 %v582, 0.0
      %v584 = vpack.c.bf16 %v583, %v583
      %585 = vst [vmem:[%s229] sm:$0xf] %v584
      %p586 = scmp.lt.s32.totalorder %s19, 1
      %s587 = scalar_select %p586, %s19, 1
      %p588 = scmp.lt.s32.totalorder %s20, 0
      %s589 = scalar_select %p588, %s20, 0
      %s590 = sadd.s32 %s589, %s587
      %s591 = smul.addr %s590, 4
      %s592 = scalar_lea.vmem %s4, %s591
      // Predicated region
      $region37: #{cnn_1d_forward.13} parent=35 // pred_check
        %p593 = pneg %p138
      $region38: #{cnn_1d_forward.13} parent=35 // pred_check_branch
        %595 = sbr.rel (%p593) target = $region40
      $region39: #{cnn_1d_forward.13} parent=35 // pred_region
        _
      $region40: #{cnn_1d_forward.13} parent=35 // pred_fallthru
        _
    $region36: #{cnn_1d_forward.13} parent=5 // pred_fallthru
      _
    %p596 = scmp.le.s32.totalorder 2, %s10
    // Predicated region
    $region41: #{cnn_1d_forward.13} parent=5 // pred_check
      %p597 = pneg %p596
    $region42: #{cnn_1d_forward.13} parent=5 // pred_check_branch
      %599 = sbr.rel (%p597) target = $region44
    $region43: #{cnn_1d_forward.13} parent=5 // pred_region
      %s600 = ssub.s32 %s10, 2
      // Predicated region
      $region45: #{cnn_1d_forward.13} parent=43 // pred_check
        %p601 = pneg %p144
      $region46: #{cnn_1d_forward.13} parent=43 // pred_check_branch
        %603 = sbr.rel (%p601) target = $region48
      $region47: #{cnn_1d_forward.13} parent=43 // pred_region
        %p604 = scmp.lt.s32.totalorder %s21, 1
        %s605 = scalar_select %p604, %s21, 1
        %p606 = scmp.lt.s32.totalorder %s22, 0
        %s607 = scalar_select %p606, %s22, 0
        %s608 = sadd.s32 %s607, %s605
        %s609 = smul.addr %s608, 4
        %s610 = scalar_lea.vmem %s4, %s609
      $region48: #{cnn_1d_forward.13} parent=43 // pred_fallthru
        _
    $region44: #{cnn_1d_forward.13} parent=5 // pred_fallthru
      _
  $region6: #{cnn_1d_forward.13} parent=0 // loop_footer
    %s14 = sadd.s32 1, %s10
  $region7: #{cnn_1d_forward.13} parent=0 // loop_footer_branch
    %9 = sbr.rel target = $region3
  $region8: #{cnn_1d_forward.13} parent=0 // loop_exit
    _

// kernel: cnn_1d_forward.19
$region0: #{cnn_1d_forward.19}
  #allocation0 [shape = 'u32[]', space=smem, size = 0x4, offset = 0x4, fixed_abs, tag = 'smem constant byte address 0x4 - core index']
  #allocation1 [shape = 'u32[144,128]{1,0:T(1,128)}', space=vmem, size = 0x12000, scoped, tag = 'internal scratch']
  %s0 = inlined_call_operand.vmem [shape: bf16[2,4,128], index: 0, kind: input, shape index: {}]
  %s1 = inlined_call_operand.vmem [shape: f32[2,8,128], index: 1, kind: output, shape index: {}]
  %s2 = sld [smem:[#allocation0]]
  $region41: #{cnn_1d_forward.19} parent=0
    _
  %s4 = ssub.s32 1, %s2
  %s5 = scalar_select 0, %s4, %s2
  loop: start=0, step=1, limit=4
  $region2: #{cnn_1d_forward.19} parent=0 // loop_pre_header
    _
  $region3: #{cnn_1d_forward.19} parent=0 // loop_header
    %s7 = sphi 0, %s11
    %p8 = scmp.ge.s32.totalorder %s7, 4
    %s14 = sphi 0, %s26
    %s15 = sphi 0, %s22
    %s16 = sphi 0, %s14
    %s17 = sphi 0, %s15
    %s18 = sphi 0, %s16
    %s19 = sphi 0, %s17
    %s31 = sphi 0, %s33
    %s34 = sphi 0, %s31
    %s35 = sphi 0, %s34
    %s51 = sphi 0, %s35
    %s57 = sphi 0, %s59
    %s60 = sphi 0, %s57
    %s61 = sphi 0, %s60
    %s77 = sphi 0, %s61
  $region4: #{cnn_1d_forward.19} parent=0 // loop_header_branch
    %10 = sbr.rel (%p8) target = $region8
  $region5: #{cnn_1d_forward.19} parent=0 // loop_body
    %s12 = ssub.s32 %s7, 1
    %s13 = ssub.s32 %s7, 2
    %s20 = sadd.s32 1, %s15
    %p21 = scmp.ge.s32.totalorder %s20, 1
    %s22 = scalar_select %p21, 0, %s20
    %s23 = sadd.s32 1, %s14
    %s24 = scalar_select %p21, %s23, %s14
    %p25 = scmp.ge.s32.totalorder %s24, 2
    %s26 = scalar_select %p25, 0, %s24
    %s27 = ssub.s32 %s14, %s26
    %s28 = ssub.s32 %s15, %s22
    %s29 = sor.u32 %s27, %s28
    %p30 = scmp.eq.s32.totalorder %s29, 0
    %s32 = sadd.s32 %s31, 1
    %s33 = scalar_select %p30, %s31, %s32
    %p36 = pneg %p30
    %p37 = scmp.eq.s32.totalorder %s7, 1
    %p38 = por %p36, %p37
    %p39 = scmp.ne.s32.totalorder %s31, %s34
    %p40 = scmp.eq.s32.totalorder %s7, 0
    %p41 = por %p39, %p40
    %p42 = scmp.ne.s32.totalorder %s31, %s34
    %p43 = scmp.eq.s32.totalorder %s12, 1
    %p44 = por %p42, %p43
    %p45 = scmp.ne.s32.totalorder %s34, %s35
    %p46 = scmp.eq.s32.totalorder %s12, 0
    %p47 = por %p45, %p46
    %p48 = scmp.ne.s32.totalorder %s34, %s35
    %p49 = scmp.eq.s32.totalorder %s13, 1
    %p50 = por %p48, %p49
    %p52 = scmp.ne.s32.totalorder %s35, %s51
    %p53 = scmp.eq.s32.totalorder %s13, 0
    %p54 = por %p52, %p53
    %s55 = ssub.s32 %s14, %s26
    %p56 = scmp.eq.s32.totalorder %s55, 0
    %s58 = sadd.s32 %s57, 1
    %s59 = scalar_select %p56, %s57, %s58
    %p62 = pneg %p56
    %p63 = scmp.eq.s32.totalorder %s7, 1
    %p64 = por %p62, %p63
    %p65 = scmp.ne.s32.totalorder %s57, %s60
    %p66 = scmp.eq.s32.totalorder %s7, 0
    %p67 = por %p65, %p66
    %p68 = scmp.ne.s32.totalorder %s57, %s60
    %p69 = scmp.eq.s32.totalorder %s12, 1
    %p70 = por %p68, %p69
    %p71 = scmp.ne.s32.totalorder %s60, %s61
    %p72 = scmp.eq.s32.totalorder %s12, 0
    %p73 = por %p71, %p72
    %p74 = scmp.ne.s32.totalorder %s60, %s61
    %p75 = scmp.eq.s32.totalorder %s13, 1
    %p76 = por %p74, %p75
    %p78 = scmp.ne.s32.totalorder %s61, %s77
    %p79 = scmp.eq.s32.totalorder %s13, 0
    %p80 = por %p78, %p79
    %p81 = scmp.le.s32.totalorder 1, %s7
    %p82 = scmp.lt.s32.totalorder %s7, 3
    %p83 = pnand %p81, %p82
    %p84 = pneg %p83
    // Predicated region
    $region9: #{cnn_1d_forward.19} parent=5 // pred_check
      _
    $region10: #{cnn_1d_forward.19} parent=5 // pred_check_branch
      %86 = sbr.rel (%p83) target = $region12
    $region11: #{cnn_1d_forward.19} parent=5 // pred_region
      %s87 = ssub.s32 %s7, 1
    $region12: #{cnn_1d_forward.19} parent=5 // pred_fallthru
      _
    %p88 = scmp.lt.s32.totalorder %s7, 2
    // Predicated region
    $region13: #{cnn_1d_forward.19} parent=5 // pred_check
      %p89 = pneg %p88
    $region14: #{cnn_1d_forward.19} parent=5 // pred_check_branch
      %91 = sbr.rel (%p89) target = $region16
    $region15: #{cnn_1d_forward.19} parent=5 // pred_region
      // Predicated region
      $region17: #{cnn_1d_forward.19} parent=15 // pred_check
        %p92 = pneg %p41
      $region18: #{cnn_1d_forward.19} parent=15 // pred_check_branch
        %94 = sbr.rel (%p92) target = $region20
      $region19: #{cnn_1d_forward.19} parent=15 // pred_region
        %p95 = scmp.lt.s32.totalorder %s14, 1
        %s96 = scalar_select %p95, %s14, 1
        %p97 = scmp.lt.s32.totalorder %s15, 0
        %s98 = scalar_select %p97, %s15, 0
        %s99 = sadd.s32 %s98, %s96
        %s100 = smul.addr %s99, 2
        %s101 = scalar_lea.vmem %s0, %s100
      $region20: #{cnn_1d_forward.19} parent=15 // pred_fallthru
        _
    $region16: #{cnn_1d_forward.19} parent=5 // pred_fallthru
      _
    %p102 = scmp.le.s32.totalorder 1, %s7
    %p103 = scmp.lt.s32.totalorder %s7, 3
    %p104 = pnand %p102, %p103
    %p105 = pneg %p104
    // Predicated region
    $region21: #{cnn_1d_forward.19} parent=5 // pred_check
      _
    $region22: #{cnn_1d_forward.19} parent=5 // pred_check_branch
      %107 = sbr.rel (%p104) target = $region24
    $region23: #{cnn_1d_forward.19} parent=5 // pred_region
      %s108 = ssub.s32 %s7, 1
      %p109 = scmp.lt.s32.totalorder %s16, 1
      %s110 = scalar_select %p109, %s16, 1
      %p111 = scmp.lt.s32.totalorder %s17, 0
      %s112 = scalar_select %p111, %s17, 0
      %s113 = sadd.s32 %s112, %s110
      %s114 = smul.addr %s113, 2
      %s115 = scalar_lea.vmem %s0, %s114
      %p116 = pneg %p47
      %p117 = pneg %p44
      %p118 = pneg %p73
      %p119 = pneg %p70
      %p120 = scmp.lt.s32.totalorder %s16, 1
      %s121 = scalar_select %p120, %s16, 1
      %s122 = smul.addr %s121, 8
      %s123 = scalar_lea.vmem %s1, %s122
      %p124 = scmp.lt.s32.totalorder %s16, 1
      %s125 = scalar_select %p124, %s16, 1
      %p126 = scmp.lt.s32.totalorder %s17, 0
      %s127 = scalar_select %p126, %s17, 0
      %s128 = sadd.s32 %s127, %s125
      %s129 = smul.addr %s128, 2
      %s130 = scalar_lea.vmem %s0, %s129
      %p131 = scmp.lt.s32.totalorder %s16, 1
      %s132 = scalar_select %p131, %s16, 1
      %s133 = smul.addr %s132, 8
      %s134 = scalar_lea.vmem %s1, %s133
      %p135 = scmp.eq.s32.totalorder %s17, 0
      // Predicated region
      $region25: #{cnn_1d_forward.19} parent=23 // pred_check
        %p136 = pneg %p135
      $region26: #{cnn_1d_forward.19} parent=23 // pred_check_branch
        %138 = sbr.rel (%p136) target = $region28
      $region27: #{cnn_1d_forward.19} parent=23 // pred_region
        %139 = vst [vmem:[%s134] sm:$0xff] 0.0
      $region28: #{cnn_1d_forward.19} parent=23 // pred_fallthru
        _
      %v140 = vld [vmem:[%s130] sm:$0x3]
      %v141 = vunpack.c.l.bf16 %v140
      %vm142 = vcmask 1043456
      %v143 = vsel %vm142, %v141, 0.0
      %v144 = vrot.slane %v143, 4
      %v145 = vadd.f32 %v143, %v144
      %v146 = vrot.slane %v145, 2
      %v147 = vadd.f32 %v145, %v146
      %v148 = vrot.slane %v147, 1
      %v149 = vadd.f32 %v147, %v148
      %v150 = vmul.f32 %v149, 0.25
      %v151 = vld [vmem:[%s134] sm:$0xff]
      %v152 = vadd.f32 %v151, %v150
      %153 = vst [vmem:[%s134] sm:$0xff] %v152
      %p154 = scmp.lt.s32.totalorder %s16, 1
      %s155 = scalar_select %p154, %s16, 1
      %s156 = smul.addr %s155, 8
      %s157 = scalar_lea.vmem %s1, %s156
      // Predicated region
      $region29: #{cnn_1d_forward.19} parent=23 // pred_check
        %p158 = pneg %p70
      $region30: #{cnn_1d_forward.19} parent=23 // pred_check_branch
        %160 = sbr.rel (%p158) target = $region32
      $region31: #{cnn_1d_forward.19} parent=23 // pred_region
        _
      $region32: #{cnn_1d_forward.19} parent=23 // pred_fallthru
        _
    $region24: #{cnn_1d_forward.19} parent=5 // pred_fallthru
      _
    %p161 = scmp.le.s32.totalorder 2, %s7
    // Predicated region
    $region33: #{cnn_1d_forward.19} parent=5 // pred_check
      %p162 = pneg %p161
    $region34: #{cnn_1d_forward.19} parent=5 // pred_check_branch
      %164 = sbr.rel (%p162) target = $region36
    $region35: #{cnn_1d_forward.19} parent=5 // pred_region
      %s165 = ssub.s32 %s7, 2
      // Predicated region
      $region37: #{cnn_1d_forward.19} parent=35 // pred_check
        %p166 = pneg %p76
      $region38: #{cnn_1d_forward.19} parent=35 // pred_check_branch
        %168 = sbr.rel (%p166) target = $region40
      $region39: #{cnn_1d_forward.19} parent=35 // pred_region
        %p169 = scmp.lt.s32.totalorder %s18, 1
        %s170 = scalar_select %p169, %s18, 1
        %s171 = smul.addr %s170, 8
        %s172 = scalar_lea.vmem %s1, %s171
      $region40: #{cnn_1d_forward.19} parent=35 // pred_fallthru
        _
    $region36: #{cnn_1d_forward.19} parent=5 // pred_fallthru
      _
  $region6: #{cnn_1d_forward.19} parent=0 // loop_footer
    %s11 = sadd.s32 1, %s7
  $region7: #{cnn_1d_forward.19} parent=0 // loop_footer_branch
    %6 = sbr.rel target = $region3
  $region8: #{cnn_1d_forward.19} parent=0 // loop_exit
    _

// kernel: cnn_1d_forward.15
$region0: #{cnn_1d_forward.15}
  #allocation0 [shape = 'u32[]', space=smem, size = 0x4, offset = 0x4, fixed_abs, tag = 'smem constant byte address 0x4 - core index']
  #allocation1 [shape = 'u32[144,128]{1,0:T(1,128)}', space=vmem, size = 0x12000, scoped, tag = 'internal scratch']
  %s0 = inlined_call_operand.vmem [shape: bf16[2,1,12,128], index: 0, kind: input, shape index: {}]
  %s1 = inlined_call_operand.vmem [shape: bf16[3,128,128], index: 1, kind: input, shape index: {}]
  %s2 = inlined_call_operand.vmem [shape: f32[1,128], index: 2, kind: input, shape index: {}]
  %s3 = inlined_call_operand.vmem [shape: f32[1,128], index: 3, kind: input, shape index: {}]
  %s4 = inlined_call_operand.vmem [shape: bf16[128,128], index: 4, kind: input, shape index: {}]
  %s5 = inlined_call_operand.vmem [shape: f32[1,128], index: 5, kind: input, shape index: {}]
  %s6 = inlined_call_operand.vmem [shape: bf16[2,4,128], index: 6, kind: output, shape index: {0}]
  %s7 = inlined_call_operand.vmem [shape: bf16[2,4,128], index: 7, kind: output, shape index: {1}]
  %8 = xla_tuple %s6, %s7
  %s9 = sld [smem:[#allocation0]]
  $region65: #{cnn_1d_forward.15} parent=0
    _
  %s11 = ssub.s32 1, %s9
  %s12 = scalar_select 0, %s11, %s9
  loop: start=0, step=1, limit=4
  $region2: #{cnn_1d_forward.15} parent=0 // loop_pre_header
    _
  $region3: #{cnn_1d_forward.15} parent=0 // loop_header
    %s14 = sphi 0, %s18
    %p15 = scmp.ge.s32.totalorder %s14, 4
    %s21 = sphi 0, %s33
    %s22 = sphi 0, %s29
    %s23 = sphi 0, %s21
    %s24 = sphi 0, %s22
    %s25 = sphi 0, %s23
    %s26 = sphi 0, %s24
    %s38 = sphi 0, %s40
    %s41 = sphi 0, %s38
    %s42 = sphi 0, %s41
    %s58 = sphi 0, %s42
    %s62 = sphi 0, %s62
    %s64 = sphi 0, %s62
    %s65 = sphi 0, %s64
    %s79 = sphi 0, %s65
    %s83 = sphi 0, %s83
    %s85 = sphi 0, %s83
    %s86 = sphi 0, %s85
    %s100 = sphi 0, %s86
    %s104 = sphi 0, %s104
    %s106 = sphi 0, %s104
    %s107 = sphi 0, %s106
    %s121 = sphi 0, %s107
    %s125 = sphi 0, %s125
    %s127 = sphi 0, %s125
    %s128 = sphi 0, %s127
    %s142 = sphi 0, %s128
    %s146 = sphi 0, %s146
    %s148 = sphi 0, %s146
    %s149 = sphi 0, %s148
    %s163 = sphi 0, %s149
    %s171 = sphi 0, %s173
    %s174 = sphi 0, %s171
    %s175 = sphi 0, %s174
    %s191 = sphi 0, %s175
    %s199 = sphi 0, %s201
    %s202 = sphi 0, %s199
    %s203 = sphi 0, %s202
    %s219 = sphi 0, %s203
  $region4: #{cnn_1d_forward.15} parent=0 // loop_header_branch
    %17 = sbr.rel (%p15) target = $region8
  $region5: #{cnn_1d_forward.15} parent=0 // loop_body
    %s19 = ssub.s32 %s14, 1
    %s20 = ssub.s32 %s14, 2
    %s27 = sadd.s32 1, %s22
    %p28 = scmp.ge.s32.totalorder %s27, 1
    %s29 = scalar_select %p28, 0, %s27
    %s30 = sadd.s32 1, %s21
    %s31 = scalar_select %p28, %s30, %s21
    %p32 = scmp.ge.s32.totalorder %s31, 2
    %s33 = scalar_select %p32, 0, %s31
    %s34 = ssub.s32 %s21, %s33
    %s35 = ssub.s32 %s22, %s29
    %s36 = sor.u32 %s34, %s35
    %p37 = scmp.eq.s32.totalorder %s36, 0
    %s39 = sadd.s32 %s38, 1
    %s40 = scalar_select %p37, %s38, %s39
    %p43 = pneg %p37
    %p44 = scmp.eq.s32.totalorder %s14, 1
    %p45 = por %p43, %p44
    %p46 = scmp.ne.s32.totalorder %s38, %s41
    %p47 = scmp.eq.s32.totalorder %s14, 0
    %p48 = por %p46, %p47
    %p49 = scmp.ne.s32.totalorder %s38, %s41
    %p50 = scmp.eq.s32.totalorder %s19, 1
    %p51 = por %p49, %p50
    %p52 = scmp.ne.s32.totalorder %s41, %s42
    %p53 = scmp.eq.s32.totalorder %s19, 0
    %p54 = por %p52, %p53
    %p55 = scmp.ne.s32.totalorder %s41, %s42
    %p56 = scmp.eq.s32.totalorder %s20, 1
    %p57 = por %p55, %p56
    %p59 = scmp.ne.s32.totalorder %s42, %s58
    %p60 = scmp.eq.s32.totalorder %s20, 0
    %p61 = por %p59, %p60
    %s63 = sadd.s32 %s62, 1
    %p66 = scmp.eq.s32.totalorder %s14, 1
    %p67 = scmp.ne.s32.totalorder %s62, %s64
    %p68 = scmp.eq.s32.totalorder %s14, 0
    %p69 = por %p67, %p68
    %p70 = scmp.ne.s32.totalorder %s62, %s64
    %p71 = scmp.eq.s32.totalorder %s19, 1
    %p72 = por %p70, %p71
    %p73 = scmp.ne.s32.totalorder %s64, %s65
    %p74 = scmp.eq.s32.totalorder %s19, 0
    %p75 = por %p73, %p74
    %p76 = scmp.ne.s32.totalorder %s64, %s65
    %p77 = scmp.eq.s32.totalorder %s20, 1
    %p78 = por %p76, %p77
    %p80 = scmp.ne.s32.totalorder %s65, %s79
    %p81 = scmp.eq.s32.totalorder %s20, 0
    %p82 = por %p80, %p81
    %s84 = sadd.s32 %s83, 1
    %p87 = scmp.eq.s32.totalorder %s14, 1
    %p88 = scmp.ne.s32.totalorder %s83, %s85
    %p89 = scmp.eq.s32.totalorder %s14, 0
    %p90 = por %p88, %p89
    %p91 = scmp.ne.s32.totalorder %s83, %s85
    %p92 = scmp.eq.s32.totalorder %s19, 1
    %p93 = por %p91, %p92
    %p94 = scmp.ne.s32.totalorder %s85, %s86
    %p95 = scmp.eq.s32.totalorder %s19, 0
    %p96 = por %p94, %p95
    %p97 = scmp.ne.s32.totalorder %s85, %s86
    %p98 = scmp.eq.s32.totalorder %s20, 1
    %p99 = por %p97, %p98
    %p101 = scmp.ne.s32.totalorder %s86, %s100
    %p102 = scmp.eq.s32.totalorder %s20, 0
    %p103 = por %p101, %p102
    %s105 = sadd.s32 %s104, 1
    %p108 = scmp.eq.s32.totalorder %s14, 1
    %p109 = scmp.ne.s32.totalorder %s104, %s106
    %p110 = scmp.eq.s32.totalorder %s14, 0
    %p111 = por %p109, %p110
    %p112 = scmp.ne.s32.totalorder %s104, %s106
    %p113 = scmp.eq.s32.totalorder %s19, 1
    %p114 = por %p112, %p113
    %p115 = scmp.ne.s32.totalorder %s106, %s107
    %p116 = scmp.eq.s32.totalorder %s19, 0
    %p117 = por %p115, %p116
    %p118 = scmp.ne.s32.totalorder %s106, %s107
    %p119 = scmp.eq.s32.totalorder %s20, 1
    %p120 = por %p118, %p119
    %p122 = scmp.ne.s32.totalorder %s107, %s121
    %p123 = scmp.eq.s32.totalorder %s20, 0
    %p124 = por %p122, %p123
    %s126 = sadd.s32 %s125, 1
    %p129 = scmp.eq.s32.totalorder %s14, 1
    %p130 = scmp.ne.s32.totalorder %s125, %s127
    %p131 = scmp.eq.s32.totalorder %s14, 0
    %p132 = por %p130, %p131
    %p133 = scmp.ne.s32.totalorder %s125, %s127
    %p134 = scmp.eq.s32.totalorder %s19, 1
    %p135 = por %p133, %p134
    %p136 = scmp.ne.s32.totalorder %s127, %s128
    %p137 = scmp.eq.s32.totalorder %s19, 0
    %p138 = por %p136, %p137
    %p139 = scmp.ne.s32.totalorder %s127, %s128
    %p140 = scmp.eq.s32.totalorder %s20, 1
    %p141 = por %p139, %p140
    %p143 = scmp.ne.s32.totalorder %s128, %s142
    %p144 = scmp.eq.s32.totalorder %s20, 0
    %p145 = por %p143, %p144
    %s147 = sadd.s32 %s146, 1
    %p150 = scmp.eq.s32.totalorder %s14, 1
    %p151 = scmp.ne.s32.totalorder %s146, %s148
    %p152 = scmp.eq.s32.totalorder %s14, 0
    %p153 = por %p151, %p152
    %p154 = scmp.ne.s32.totalorder %s146, %s148
    %p155 = scmp.eq.s32.totalorder %s19, 1
    %p156 = por %p154, %p155
    %p157 = scmp.ne.s32.totalorder %s148, %s149
    %p158 = scmp.eq.s32.totalorder %s19, 0
    %p159 = por %p157, %p158
    %p160 = scmp.ne.s32.totalorder %s148, %s149
    %p161 = scmp.eq.s32.totalorder %s20, 1
    %p162 = por %p160, %p161
    %p164 = scmp.ne.s32.totalorder %s149, %s163
    %p165 = scmp.eq.s32.totalorder %s20, 0
    %p166 = por %p164, %p165
    %s167 = ssub.s32 %s21, %s33
    %s168 = ssub.s32 %s22, %s29
    %s169 = sor.u32 %s167, %s168
    %p170 = scmp.eq.s32.totalorder %s169, 0
    %s172 = sadd.s32 %s171, 1
    %s173 = scalar_select %p170, %s171, %s172
    %p176 = pneg %p170
    %p177 = scmp.eq.s32.totalorder %s14, 1
    %p178 = por %p176, %p177
    %p179 = scmp.ne.s32.totalorder %s171, %s174
    %p180 = scmp.eq.s32.totalorder %s14, 0
    %p181 = por %p179, %p180
    %p182 = scmp.ne.s32.totalorder %s171, %s174
    %p183 = scmp.eq.s32.totalorder %s19, 1
    %p184 = por %p182, %p183
    %p185 = scmp.ne.s32.totalorder %s174, %s175
    %p186 = scmp.eq.s32.totalorder %s19, 0
    %p187 = por %p185, %p186
    %p188 = scmp.ne.s32.totalorder %s174, %s175
    %p189 = scmp.eq.s32.totalorder %s20, 1
    %p190 = por %p188, %p189
    %p192 = scmp.ne.s32.totalorder %s175, %s191
    %p193 = scmp.eq.s32.totalorder %s20, 0
    %p194 = por %p192, %p193
    %s195 = ssub.s32 %s21, %s33
    %s196 = ssub.s32 %s22, %s29
    %s197 = sor.u32 %s195, %s196
    %p198 = scmp.eq.s32.totalorder %s197, 0
    %s200 = sadd.s32 %s199, 1
    %s201 = scalar_select %p198, %s199, %s200
    %p204 = pneg %p198
    %p205 = scmp.eq.s32.totalorder %s14, 1
    %p206 = por %p204, %p205
    %p207 = scmp.ne.s32.totalorder %s199, %s202
    %p208 = scmp.eq.s32.totalorder %s14, 0
    %p209 = por %p207, %p208
    %p210 = scmp.ne.s32.totalorder %s199, %s202
    %p211 = scmp.eq.s32.totalorder %s19, 1
    %p212 = por %p210, %p211
    %p213 = scmp.ne.s32.totalorder %s202, %s203
    %p214 = scmp.eq.s32.totalorder %s19, 0
    %p215 = por %p213, %p214
    %p216 = scmp.ne.s32.totalorder %s202, %s203
    %p217 = scmp.eq.s32.totalorder %s20, 1
    %p218 = por %p216, %p217
    %p220 = scmp.ne.s32.totalorder %s203, %s219
    %p221 = scmp.eq.s32.totalorder %s20, 0
    %p222 = por %p220, %p221
    %p223 = scmp.le.s32.totalorder 1, %s14
    %p224 = scmp.lt.s32.totalorder %s14, 3
    %p225 = pnand %p223, %p224
    %p226 = pneg %p225
    // Predicated region
    $region9: #{cnn_1d_forward.15} parent=5 // pred_check
      _
    $region10: #{cnn_1d_forward.15} parent=5 // pred_check_branch
      %228 = sbr.rel (%p225) target = $region12
    $region11: #{cnn_1d_forward.15} parent=5 // pred_region
      %s229 = ssub.s32 %s14, 1
      // Predicated region
      $region13: #{cnn_1d_forward.15} parent=11 // pred_check
        %p230 = pneg %p75
      $region14: #{cnn_1d_forward.15} parent=11 // pred_check_branch
        %232 = sbr.rel (%p230) target = $region16
      $region15: #{cnn_1d_forward.15} parent=11 // pred_region
        _
      $region16: #{cnn_1d_forward.15} parent=11 // pred_fallthru
        _
      // Predicated region
      $region17: #{cnn_1d_forward.15} parent=11 // pred_check
        %p233 = pneg %p96
      $region18: #{cnn_1d_forward.15} parent=11 // pred_check_branch
        %235 = sbr.rel (%p233) target = $region20
      $region19: #{cnn_1d_forward.15} parent=11 // pred_region
        _
      $region20: #{cnn_1d_forward.15} parent=11 // pred_fallthru
        _
      // Predicated region
      $region21: #{cnn_1d_forward.15} parent=11 // pred_check
        %p236 = pneg %p117
      $region22: #{cnn_1d_forward.15} parent=11 // pred_check_branch
        %238 = sbr.rel (%p236) target = $region24
      $region23: #{cnn_1d_forward.15} parent=11 // pred_region
        _
      $region24: #{cnn_1d_forward.15} parent=11 // pred_fallthru
        _
      // Predicated region
      $region25: #{cnn_1d_forward.15} parent=11 // pred_check
        %p239 = pneg %p138
      $region26: #{cnn_1d_forward.15} parent=11 // pred_check_branch
        %241 = sbr.rel (%p239) target = $region28
      $region27: #{cnn_1d_forward.15} parent=11 // pred_region
        _
      $region28: #{cnn_1d_forward.15} parent=11 // pred_fallthru
        _
      // Predicated region
      $region29: #{cnn_1d_forward.15} parent=11 // pred_check
        %p242 = pneg %p159
      $region30: #{cnn_1d_forward.15} parent=11 // pred_check_branch
        %244 = sbr.rel (%p242) target = $region32
      $region31: #{cnn_1d_forward.15} parent=11 // pred_region
        _
      $region32: #{cnn_1d_forward.15} parent=11 // pred_fallthru
        _
    $region12: #{cnn_1d_forward.15} parent=5 // pred_fallthru
      _
    %p245 = scmp.lt.s32.totalorder %s14, 2
    // Predicated region
    $region33: #{cnn_1d_forward.15} parent=5 // pred_check
      %p246 = pneg %p245
    $region34: #{cnn_1d_forward.15} parent=5 // pred_check_branch
      %248 = sbr.rel (%p246) target = $region36
    $region35: #{cnn_1d_forward.15} parent=5 // pred_region
      // Predicated region
      $region37: #{cnn_1d_forward.15} parent=35 // pred_check
        %p249 = pneg %p48
      $region38: #{cnn_1d_forward.15} parent=35 // pred_check_branch
        %251 = sbr.rel (%p249) target = $region40
      $region39: #{cnn_1d_forward.15} parent=35 // pred_region
        %p252 = scmp.lt.s32.totalorder %s21, 1
        %s253 = scalar_select %p252, %s21, 1
        %p254 = scmp.lt.s32.totalorder %s22, 0
        %s255 = scalar_select %p254, %s22, 0
        %s256 = smul.addr %s255, 2
        %s257 = smul.addr %s253, 2
        %s258 = sadd.s32 %s256, %s257
        %s259 = smul.addr %s258, 4
        %s260 = scalar_lea.vmem %s0, %s259
      $region40: #{cnn_1d_forward.15} parent=35 // pred_fallthru
        _
    $region36: #{cnn_1d_forward.15} parent=5 // pred_fallthru
      _
    %p261 = scmp.le.s32.totalorder 1, %s14
    %p262 = scmp.lt.s32.totalorder %s14, 3
    %p263 = pnand %p261, %p262
    %p264 = pneg %p263
    // Predicated region
    $region41: #{cnn_1d_forward.15} parent=5 // pred_check
      _
    $region42: #{cnn_1d_forward.15} parent=5 // pred_check_branch
      %266 = sbr.rel (%p263) target = $region44
    $region43: #{cnn_1d_forward.15} parent=5 // pred_region
      %s267 = ssub.s32 %s14, 1
      %p268 = scmp.lt.s32.totalorder %s23, 1
      %s269 = scalar_select %p268, %s23, 1
      %p270 = scmp.lt.s32.totalorder %s24, 0
      %s271 = scalar_select %p270, %s24, 0
      %s272 = smul.addr %s271, 2
      %s273 = smul.addr %s269, 2
      %s274 = sadd.s32 %s272, %s273
      %s275 = smul.addr %s274, 4
      %s276 = scalar_lea.vmem %s0, %s275
      %p277 = pneg %p54
      %p278 = pneg %p51
      %p279 = pneg %p75
      %p280 = pneg %p72
      %p281 = pneg %p96
      %p282 = pneg %p93
      %p283 = pneg %p117
      %p284 = pneg %p114
      %p285 = pneg %p138
      %p286 = pneg %p135
      %p287 = pneg %p159
      %p288 = pneg %p156
      %p289 = pneg %p187
      %p290 = pneg %p184
      %p291 = scmp.lt.s32.totalorder %s23, 1
      %s292 = scalar_select %p291, %s23, 1
      %p293 = scmp.lt.s32.totalorder %s24, 0
      %s294 = scalar_select %p293, %s24, 0
      %s295 = sadd.s32 %s294, %s292
      %s296 = smul.addr %s295, 2
      %s297 = scalar_lea.vmem %s6, %s296
      %p298 = pneg %p215
      %p299 = pneg %p212
      %p300 = scmp.lt.s32.totalorder %s23, 1
      %s301 = scalar_select %p300, %s23, 1
      %p302 = scmp.lt.s32.totalorder %s24, 0
      %s303 = scalar_select %p302, %s24, 0
      %s304 = sadd.s32 %s303, %s301
      %s305 = smul.addr %s304, 2
      %s306 = scalar_lea.vmem %s7, %s305
      %p307 = scmp.lt.s32.totalorder %s23, 1
      %s308 = scalar_select %p307, %s23, 1
      %p309 = scmp.lt.s32.totalorder %s24, 0
      %s310 = scalar_select %p309, %s24, 0
      %s311 = smul.addr %s310, 2
      %s312 = smul.addr %s308, 2
      %s313 = sadd.s32 %s311, %s312
      %s314 = smul.addr %s313, 4
      %s315 = scalar_lea.vmem %s0, %s314
      %p316 = scmp.lt.s32.totalorder %s23, 1
      %s317 = scalar_select %p316, %s23, 1
      %p318 = scmp.lt.s32.totalorder %s24, 0
      %s319 = scalar_select %p318, %s24, 0
      %s320 = sadd.s32 %s319, %s317
      %s321 = smul.addr %s320, 2
      %s322 = scalar_lea.vmem %s6, %s321
      %p323 = scmp.lt.s32.totalorder %s23, 1
      %s324 = scalar_select %p323, %s23, 1
      %p325 = scmp.lt.s32.totalorder %s24, 0
      %s326 = scalar_select %p325, %s24, 0
      %s327 = sadd.s32 %s326, %s324
      %s328 = smul.addr %s327, 2
      %s329 = scalar_lea.vmem %s7, %s328
      %v331 = vld [vmem:[%s315] sm:$0x3]
      %v332 = vld [vmem:[%s1] sm:$0xf]
      %v333 = vld [vmem:[%s1 + $0x4] sm:$0xf]
      %v334 = vld [vmem:[%s1 + $0x8] sm:$0xf]
      %v335 = vld [vmem:[%s1 + $0xc] sm:$0xf]
      %v336 = vld [vmem:[%s1 + $0x10] sm:$0xf]
      %v337 = vld [vmem:[%s1 + $0x14] sm:$0xf]
      %v338 = vld [vmem:[%s1 + $0x18] sm:$0xf]
      %v339 = vld [vmem:[%s1 + $0x1c] sm:$0xf]
      %v340 = vld [vmem:[%s1 + $0x20] sm:$0xf]
      %v341 = vld [vmem:[%s1 + $0x24] sm:$0xf]
      %v342 = vld [vmem:[%s1 + $0x28] sm:$0xf]
      %v343 = vld [vmem:[%s1 + $0x2c] sm:$0xf]
      %v344 = vld [vmem:[%s1 + $0x30] sm:$0xf]
      %v345 = vld [vmem:[%s1 + $0x34] sm:$0xf]
      %v346 = vld [vmem:[%s1 + $0x38] sm:$0xf]
      %v347 = vld [vmem:[%s1 + $0x3c] sm:$0xf]
      %v348 = vld [vmem:[%s315] sm:$0xc]
      %s349 = scalar_lea.vmem %s1, 64
      %v350 = vld [vmem:[%s349] sm:$0xf]
      %v351 = vld [vmem:[%s349 + $0x4] sm:$0xf]
      %v352 = vld [vmem:[%s349 + $0x8] sm:$0xf]
      %v353 = vld [vmem:[%s349 + $0xc] sm:$0xf]
      %v354 = vld [vmem:[%s349 + $0x10] sm:$0xf]
      %v355 = vld [vmem:[%s349 + $0x14] sm:$0xf]
      %v356 = vld [vmem:[%s349 + $0x18] sm:$0xf]
      %v357 = vld [vmem:[%s349 + $0x1c] sm:$0xf]
      %v358 = vld [vmem:[%s349 + $0x20] sm:$0xf]
      %v359 = vld [vmem:[%s349 + $0x24] sm:$0xf]
      %v360 = vld [vmem:[%s349 + $0x28] sm:$0xf]
      %v361 = vld [vmem:[%s349 + $0x2c] sm:$0xf]
      %v362 = vld [vmem:[%s349 + $0x30] sm:$0xf]
      %v363 = vld [vmem:[%s349 + $0x34] sm:$0xf]
      %v364 = vld [vmem:[%s349 + $0x38] sm:$0xf]
      %v365 = vld [vmem:[%s349 + $0x3c] sm:$0xf]
      %v367 = vunpack.c.l.b16 %v348
      %v368 = vpack.c.b16 %v367, %v367
      %v369 = vrot.slane %v368, 2
      %v387 = vunpack.c.l.b16 %v350
      %v388 = vunpack.c.l.b16 %v351
      %v389 = vunpack.c.l.b16 %v352
      %v390 = vunpack.c.l.b16 %v353
      %v391 = vunpack.c.l.b16 %v354
      %v392 = vunpack.c.l.b16 %v355
      %v393 = vunpack.c.l.b16 %v356
      %v394 = vunpack.c.l.b16 %v357
      %v395 = vunpack.c.l.b16 %v358
      %v396 = vunpack.c.l.b16 %v359
      %v397 = vunpack.c.l.b16 %v360
      %v398 = vunpack.c.l.b16 %v361
      %v399 = vunpack.c.l.b16 %v362
      %v400 = vunpack.c.l.b16 %v363
      %v401 = vunpack.c.l.b16 %v364
      %v402 = vunpack.c.l.b16 %v365
      %v403 = vpack.c.b16 %v388, %v387
      %v404 = vpack.c.b16 %v390, %v389
      %v405 = vpack.c.b16 %v392, %v391
      %v406 = vpack.c.b16 %v394, %v393
      %v407 = vpack.c.b16 %v396, %v395
      %v408 = vpack.c.b16 %v398, %v397
      %v409 = vpack.c.b16 %v400, %v399
      %v410 = vpack.c.b16 %v402, %v401
      %419 = vmatprep.subr.bf16.mxu0 0
      %420 = vmatpush1.bf16.msra.mxu0 %v403
      %421 = vmatprep.subr.bf16.mxu0 0
      %422 = vmatpush1.bf16.msra.mxu0 %v404
      %423 = vmatprep.subr.bf16.mxu0 0
      %424 = vmatpush1.bf16.msra.mxu0 %v405
      %425 = vmatprep.subr.bf16.mxu0 0
      %426 = vmatpush1.bf16.msra.mxu0 %v406
      %427 = vmatprep.subr.bf16.mxu0 0
      %428 = vmatpush1.bf16.msra.mxu0 %v407
      %429 = vmatprep.subr.bf16.mxu0 0
      %430 = vmatpush1.bf16.msra.mxu0 %v408
      %431 = vmatprep.subr.bf16.mxu0 0
      %432 = vmatpush1.bf16.msra.mxu0 %v409
      %433 = vmatprep.subr.bf16.mxu0 0
      %434 = vmatpush1.bf16.msra.mxu0 %v410
      %435 = vmatprep.subr.bf16.mxu0 0
      %436 = vmatpush1.bf16.msra.mxu0 0
      %437 = vmatprep.subr.bf16.mxu0 0
      %438 = vmatpush1.bf16.msra.mxu0 0
      %439 = vmatprep.subr.bf16.mxu0 0
      %440 = vmatpush1.bf16.msra.mxu0 0
      %441 = vmatprep.subr.bf16.mxu0 0
      %442 = vmatpush1.bf16.msra.mxu0 0
      %443 = vmatprep.subr.bf16.mxu0 0
      %444 = vmatpush1.bf16.msra.mxu0 0
      %445 = vmatprep.subr.bf16.mxu0 0
      %446 = vmatpush1.bf16.msra.mxu0 0
      %447 = vmatprep.subr.bf16.mxu0 0
      %448 = vmatpush1.bf16.msra.mxu0 0
      %449 = vmatprep.subr.bf16.mxu0 0
      %450 = vmatpush1.bf16.msra.mxu0 0
      %451 = vmatprep.mubr.bf16.mxu0 0
      %452 = vmatmul.mubr.bf16.gmra.mrb[0].mxu0 %v369
      %v453 = vpop.f32.mrb[0].mxu0
      %v454 = vadd.f32 0.0, %v453
      %v455 = vpop.f32.mrb[0].mxu0
      %v456 = vpop.f32.mrb[0].mxu0
      %v457 = vpop.f32.mrb[0].mxu0
      %458 = vdwg.mxu0
      %v475 = vunpack.c.l.b16 %v332
      %v476 = vunpack.c.l.b16 %v333
      %v477 = vunpack.c.l.b16 %v334
      %v478 = vunpack.c.l.b16 %v335
      %v479 = vunpack.c.l.b16 %v336
      %v480 = vunpack.c.l.b16 %v337
      %v481 = vunpack.c.l.b16 %v338
      %v482 = vunpack.c.l.b16 %v339
      %v483 = vunpack.c.l.b16 %v340
      %v484 = vunpack.c.l.b16 %v341
      %v485 = vunpack.c.l.b16 %v342
      %v486 = vunpack.c.l.b16 %v343
      %v487 = vunpack.c.l.b16 %v344
      %v488 = vunpack.c.l.b16 %v345
      %v489 = vunpack.c.l.b16 %v346
      %v490 = vunpack.c.l.b16 %v347
      %v491 = vpack.c.b16 %v476, %v475
      %v492 = vpack.c.b16 %v478, %v477
      %v493 = vpack.c.b16 %v480, %v479
      %v494 = vpack.c.b16 %v482, %v481
      %v495 = vpack.c.b16 %v484, %v483
      %v496 = vpack.c.b16 %v486, %v485
      %v497 = vpack.c.b16 %v488, %v487
      %v498 = vpack.c.b16 %v490, %v489
      %507 = vmatprep.subr.bf16.mxu0 0
      %508 = vmatpush1.bf16.msra.mxu0 %v491
      %509 = vmatprep.subr.bf16.mxu0 0
      %510 = vmatpush1.bf16.msra.mxu0 %v492
      %511 = vmatprep.subr.bf16.mxu0 0
      %512 = vmatpush1.bf16.msra.mxu0 %v493
      %513 = vmatprep.subr.bf16.mxu0 0
      %514 = vmatpush1.bf16.msra.mxu0 %v494
      %515 = vmatprep.subr.bf16.mxu0 0
      %516 = vmatpush1.bf16.msra.mxu0 %v495
      %517 = vmatprep.subr.bf16.mxu0 0
      %518 = vmatpush1.bf16.msra.mxu0 %v496
      %519 = vmatprep.subr.bf16.mxu0 0
      %520 = vmatpush1.bf16.msra.mxu0 %v497
      %521 = vmatprep.subr.bf16.mxu0 0
      %522 = vmatpush1.bf16.msra.mxu0 %v498
      %523 = vmatprep.subr.bf16.mxu0 0
      %524 = vmatpush1.bf16.msra.mxu0 0
      %525 = vmatprep.subr.bf16.mxu0 0
      %526 = vmatpush1.bf16.msra.mxu0 0
      %527 = vmatprep.subr.bf16.mxu0 0
      %528 = vmatpush1.bf16.msra.mxu0 0
      %529 = vmatprep.subr.bf16.mxu0 0
      %530 = vmatpush1.bf16.msra.mxu0 0
      %531 = vmatprep.subr.bf16.mxu0 0
      %532 = vmatpush1.bf16.msra.mxu0 0
      %533 = vmatprep.subr.bf16.mxu0 0
      %534 = vmatpush1.bf16.msra.mxu0 0
      %535 = vmatprep.subr.bf16.mxu0 0
      %536 = vmatpush1.bf16.msra.mxu0 0
      %537 = vmatprep.subr.bf16.mxu0 0
      %538 = vmatpush1.bf16.msra.mxu0 0
      %539 = vmatprep.mubr.bf16.mxu0 0
      %540 = vmatmul.mubr.bf16.gmra.mrb[0].mxu0 %v331
      %v541 = vpop.f32.mrb[0].mxu0
      %v542 = vadd.f32 %v454, %v541
      %v543 = vpop.f32.mrb[0].mxu0
      %v544 = vpop.f32.mrb[0].mxu0
      %v545 = vpop.f32.mrb[0].mxu0
      %546 = vdwg.mxu0
      %v547 = vld [vmem:[%s315 + $0x4] sm:$0x3]
      %s548 = scalar_lea.vmem %s1, 128
      %v549 = vld [vmem:[%s548] sm:$0xf]
      %v550 = vld [vmem:[%s548 + $0x4] sm:$0xf]
      %v551 = vld [vmem:[%s548 + $0x8] sm:$0xf]
      %v552 = vld [vmem:[%s548 + $0xc] sm:$0xf]
      %v553 = vld [vmem:[%s548 + $0x10] sm:$0xf]
      %v554 = vld [vmem:[%s548 + $0x14] sm:$0xf]
      %v555 = vld [vmem:[%s548 + $0x18] sm:$0xf]
      %v556 = vld [vmem:[%s548 + $0x1c] sm:$0xf]
      %v557 = vld [vmem:[%s548 + $0x20] sm:$0xf]
      %v558 = vld [vmem:[%s548 + $0x24] sm:$0xf]
      %v559 = vld [vmem:[%s548 + $0x28] sm:$0xf]
      %v560 = vld [vmem:[%s548 + $0x2c] sm:$0xf]
      %v561 = vld [vmem:[%s548 + $0x30] sm:$0xf]
      %v562 = vld [vmem:[%s548 + $0x34] sm:$0xf]
      %v563 = vld [vmem:[%s548 + $0x38] sm:$0xf]
      %v564 = vld [vmem:[%s548 + $0x3c] sm:$0xf]
      %v581 = vunpack.c.l.b16 %v549
      %v582 = vunpack.c.l.b16 %v550
      %v583 = vunpack.c.l.b16 %v551
      %v584 = vunpack.c.l.b16 %v552
      %v585 = vunpack.c.l.b16 %v553
      %v586 = vunpack.c.l.b16 %v554
      %v587 = vunpack.c.l.b16 %v555
      %v588 = vunpack.c.l.b16 %v556
      %v589 = vunpack.c.l.b16 %v557
      %v590 = vunpack.c.l.b16 %v558
      %v591 = vunpack.c.l.b16 %v559
      %v592 = vunpack.c.l.b16 %v560
      %v593 = vunpack.c.l.b16 %v561
      %v594 = vunpack.c.l.b16 %v562
      %v595 = vunpack.c.l.b16 %v563
      %v596 = vunpack.c.l.b16 %v564
      %v597 = vpack.c.b16 %v582, %v581
      %v598 = vpack.c.b16 %v584, %v583
      %v599 = vpack.c.b16 %v586, %v585
      %v600 = vpack.c.b16 %v588, %v587
      %v601 = vpack.c.b16 %v590, %v589
      %v602 = vpack.c.b16 %v592, %v591
      %v603 = vpack.c.b16 %v594, %v593
      %v604 = vpack.c.b16 %v596, %v595
      %613 = vmatprep.subr.bf16.mxu0 0
      %614 = vmatpush1.bf16.msra.mxu0 %v597
      %615 = vmatprep.subr.bf16.mxu0 0
      %616 = vmatpush1.bf16.msra.mxu0 %v598
      %617 = vmatprep.subr.bf16.mxu0 0
      %618 = vmatpush1.bf16.msra.mxu0 %v599
      %619 = vmatprep.subr.bf16.mxu0 0
      %620 = vmatpush1.bf16.msra.mxu0 %v600
      %621 = vmatprep.subr.bf16.mxu0 0
      %622 = vmatpush1.bf16.msra.mxu0 %v601
      %623 = vmatprep.subr.bf16.mxu0 0
      %624 = vmatpush1.bf16.msra.mxu0 %v602
      %625 = vmatprep.subr.bf16.mxu0 0
      %626 = vmatpush1.bf16.msra.mxu0 %v603
      %627 = vmatprep.subr.bf16.mxu0 0
      %628 = vmatpush1.bf16.msra.mxu0 %v604
      %629 = vmatprep.subr.bf16.mxu0 0
      %630 = vmatpush1.bf16.msra.mxu0 0
      %631 = vmatprep.subr.bf16.mxu0 0
      %632 = vmatpush1.bf16.msra.mxu0 0
      %633 = vmatprep.subr.bf16.mxu0 0
      %634 = vmatpush1.bf16.msra.mxu0 0
      %635 = vmatprep.subr.bf16.mxu0 0
      %636 = vmatpush1.bf16.msra.mxu0 0
      %637 = vmatprep.subr.bf16.mxu0 0
      %638 = vmatpush1.bf16.msra.mxu0 0
      %639 = vmatprep.subr.bf16.mxu0 0
      %640 = vmatpush1.bf16.msra.mxu0 0
      %641 = vmatprep.subr.bf16.mxu0 0
      %642 = vmatpush1.bf16.msra.mxu0 0
      %643 = vmatprep.subr.bf16.mxu0 0
      %644 = vmatpush1.bf16.msra.mxu0 0
      %645 = vmatprep.mubr.bf16.mxu0 0
      %646 = vmatmul.mubr.bf16.gmra.mrb[0].mxu0 %v547
      %v647 = vpop.f32.mrb[0].mxu0
      %v648 = vadd.f32 0.0, %v647
      %v649 = vpop.f32.mrb[0].mxu0
      %v650 = vpop.f32.mrb[0].mxu0
      %v651 = vpop.f32.mrb[0].mxu0
      %652 = vdwg.mxu0
      %v653 = vadd.f32 %v542, %v648
      %v654 = vld [vmem:[%s2] sm:$0x1]
      %v656 = vlaneseq
      %v657 = vshrl.u32 %v656, 7
      %v658 = vsub.s32 0, %v657
      %v659 = vrot.slane %v654, %v658
      %v661 = vmul.f32 %v653, %v659
      %v662 = vld [vmem:[%s3] sm:$0x1]
      %v664 = vlaneseq
      %v665 = vshrl.u32 %v664, 7
      %v666 = vsub.s32 0, %v665
      %v667 = vrot.slane %v662, %v666
      %v669 = vadd.f32 %v661, %v667
      %v670 = vmax.f32 %v669, 0.0
      %v671 = vpack.c.bf16 %v670, %v670
      %672 = vst [vmem:[%s322] sm:$0x3] %v671
      %v673 = vld [vmem:[%s315] sm:$0xc]
      %v674 = vld [vmem:[%s4] sm:$0xf]
      %v675 = vld [vmem:[%s4 + $0x4] sm:$0xf]
      %v676 = vld [vmem:[%s4 + $0x8] sm:$0xf]
      %v677 = vld [vmem:[%s4 + $0xc] sm:$0xf]
      %v678 = vld [vmem:[%s4 + $0x10] sm:$0xf]
      %v679 = vld [vmem:[%s4 + $0x14] sm:$0xf]
      %v680 = vld [vmem:[%s4 + $0x18] sm:$0xf]
      %v681 = vld [vmem:[%s4 + $0x1c] sm:$0xf]
      %v682 = vld [vmem:[%s4 + $0x20] sm:$0xf]
      %v683 = vld [vmem:[%s4 + $0x24] sm:$0xf]
      %v684 = vld [vmem:[%s4 + $0x28] sm:$0xf]
      %v685 = vld [vmem:[%s4 + $0x2c] sm:$0xf]
      %v686 = vld [vmem:[%s4 + $0x30] sm:$0xf]
      %v687 = vld [vmem:[%s4 + $0x34] sm:$0xf]
      %v688 = vld [vmem:[%s4 + $0x38] sm:$0xf]
      %v689 = vld [vmem:[%s4 + $0x3c] sm:$0xf]
      %v690 = vld [vmem:[%s5] sm:$0x1]
      %v692 = vlaneseq
      %v693 = vshrl.u32 %v692, 7
      %v694 = vsub.s32 0, %v693
      %v695 = vrot.slane %v690, %v694
      %v698 = vunpack.c.l.b16 %v673
      %v699 = vpack.c.b16 %v698, %v698
      %v700 = vrot.slane %v699, 2
      %v718 = vunpack.c.l.b16 %v674
      %v719 = vunpack.c.l.b16 %v675
      %v720 = vunpack.c.l.b16 %v676
      %v721 = vunpack.c.l.b16 %v677
      %v722 = vunpack.c.l.b16 %v678
      %v723 = vunpack.c.l.b16 %v679
      %v724 = vunpack.c.l.b16 %v680
      %v725 = vunpack.c.l.b16 %v681
      %v726 = vunpack.c.l.b16 %v682
      %v727 = vunpack.c.l.b16 %v683
      %v728 = vunpack.c.l.b16 %v684
      %v729 = vunpack.c.l.b16 %v685
      %v730 = vunpack.c.l.b16 %v686
      %v731 = vunpack.c.l.b16 %v687
      %v732 = vunpack.c.l.b16 %v688
      %v733 = vunpack.c.l.b16 %v689
      %v734 = vpack.c.b16 %v719, %v718
      %v735 = vpack.c.b16 %v721, %v720
      %v736 = vpack.c.b16 %v723, %v722
      %v737 = vpack.c.b16 %v725, %v724
      %v738 = vpack.c.b16 %v727, %v726
      %v739 = vpack.c.b16 %v729, %v728
      %v740 = vpack.c.b16 %v731, %v730
      %v741 = vpack.c.b16 %v733, %v732
      %750 = vmatprep.subr.bf16.mxu0 0
      %751 = vmatpush1.bf16.msra.mxu0 %v734
      %752 = vmatprep.subr.bf16.mxu0 0
      %753 = vmatpush1.bf16.msra.mxu0 %v735
      %754 = vmatprep.subr.bf16.mxu0 0
      %755 = vmatpush1.bf16.msra.mxu0 %v736
      %756 = vmatprep.subr.bf16.mxu0 0
      %757 = vmatpush1.bf16.msra.mxu0 %v737
      %758 = vmatprep.subr.bf16.mxu0 0
      %759 = vmatpush1.bf16.msra.mxu0 %v738
      %760 = vmatprep.subr.bf16.mxu0 0
      %761 = vmatpush1.bf16.msra.mxu0 %v739
      %762 = vmatprep.subr.bf16.mxu0 0
      %763 = vmatpush1.bf16.msra.mxu0 %v740
      %764 = vmatprep.subr.bf16.mxu0 0
      %765 = vmatpush1.bf16.msra.mxu0 %v741
      %766 = vmatprep.subr.bf16.mxu0 0
      %767 = vmatpush1.bf16.msra.mxu0 0
      %768 = vmatprep.subr.bf16.mxu0 0
      %769 = vmatpush1.bf16.msra.mxu0 0
      %770 = vmatprep.subr.bf16.mxu0 0
      %771 = vmatpush1.bf16.msra.mxu0 0
      %772 = vmatprep.subr.bf16.mxu0 0
      %773 = vmatpush1.bf16.msra.mxu0 0
      %774 = vmatprep.subr.bf16.mxu0 0
      %775 = vmatpush1.bf16.msra.mxu0 0
      %776 = vmatprep.subr.bf16.mxu0 0
      %777 = vmatpush1.bf16.msra.mxu0 0
      %778 = vmatprep.subr.bf16.mxu0 0
      %779 = vmatpush1.bf16.msra.mxu0 0
      %780 = vmatprep.subr.bf16.mxu0 0
      %781 = vmatpush1.bf16.msra.mxu0 0
      %782 = vmatprep.mubr.bf16.mxu0 0
      %783 = vmatmul.mubr.bf16.gmra.mrb[0].mxu0 %v700
      %v784 = vpop.f32.mrb[0].mxu0
      %v785 = vadd.f32 %v695, %v784
      %v786 = vpop.f32.mrb[0].mxu0
      %v787 = vpop.f32.mrb[0].mxu0
      %v788 = vpop.f32.mrb[0].mxu0
      %789 = vdwg.mxu0
      %v790 = vpack.c.bf16 %v785, %v785
      %791 = vst [vmem:[%s329] sm:$0x3] %v790
      %p792 = scmp.lt.s32.totalorder %s23, 1
      %s793 = scalar_select %p792, %s23, 1
      %p794 = scmp.lt.s32.totalorder %s24, 0
      %s795 = scalar_select %p794, %s24, 0
      %s796 = sadd.s32 %s795, %s793
      %s797 = smul.addr %s796, 2
      %s798 = scalar_lea.vmem %s6, %s797
      %p799 = scmp.lt.s32.totalorder %s23, 1
      %s800 = scalar_select %p799, %s23, 1
      %p801 = scmp.lt.s32.totalorder %s24, 0
      %s802 = scalar_select %p801, %s24, 0
      %s803 = sadd.s32 %s802, %s800
      %s804 = smul.addr %s803, 2
      %s805 = scalar_lea.vmem %s7, %s804
      // Predicated region
      $region45: #{cnn_1d_forward.15} parent=43 // pred_check
        %p806 = pneg %p184
      $region46: #{cnn_1d_forward.15} parent=43 // pred_check_branch
        %808 = sbr.rel (%p806) target = $region48
      $region47: #{cnn_1d_forward.15} parent=43 // pred_region
        _
      $region48: #{cnn_1d_forward.15} parent=43 // pred_fallthru
        _
      // Predicated region
      $region49: #{cnn_1d_forward.15} parent=43 // pred_check
        %p809 = pneg %p212
      $region50: #{cnn_1d_forward.15} parent=43 // pred_check_branch
        %811 = sbr.rel (%p809) target = $region52
      $region51: #{cnn_1d_forward.15} parent=43 // pred_region
        _
      $region52: #{cnn_1d_forward.15} parent=43 // pred_fallthru
        _
    $region44: #{cnn_1d_forward.15} parent=5 // pred_fallthru
      _
    %p812 = scmp.le.s32.totalorder 2, %s14
    // Predicated region
    $region53: #{cnn_1d_forward.15} parent=5 // pred_check
      %p813 = pneg %p812
    $region54: #{cnn_1d_forward.15} parent=5 // pred_check_branch
      %815 = sbr.rel (%p813) target = $region56
    $region55: #{cnn_1d_forward.15} parent=5 // pred_region
      %s816 = ssub.s32 %s14, 2
      // Predicated region
      $region57: #{cnn_1d_forward.15} parent=55 // pred_check
        %p817 = pneg %p190
      $region58: #{cnn_1d_forward.15} parent=55 // pred_check_branch
        %819 = sbr.rel (%p817) target = $region60
      $region59: #{cnn_1d_forward.15} parent=55 // pred_region
        %p820 = scmp.lt.s32.totalorder %s25, 1
        %s821 = scalar_select %p820, %s25, 1
        %p822 = scmp.lt.s32.totalorder %s26, 0
        %s823 = scalar_select %p822, %s26, 0
        %s824 = sadd.s32 %s823, %s821
        %s825 = smul.addr %s824, 2
        %s826 = scalar_lea.vmem %s6, %s825
      $region60: #{cnn_1d_forward.15} parent=55 // pred_fallthru
        _
      // Predicated region
      $region61: #{cnn_1d_forward.15} parent=55 // pred_check
        %p827 = pneg %p218
      $region62: #{cnn_1d_forward.15} parent=55 // pred_check_branch
        %829 = sbr.rel (%p827) target = $region64
      $region63: #{cnn_1d_forward.15} parent=55 // pred_region
        %p830 = scmp.lt.s32.totalorder %s25, 1
        %s831 = scalar_select %p830, %s25, 1
        %p832 = scmp.lt.s32.totalorder %s26, 0
        %s833 = scalar_select %p832, %s26, 0
        %s834 = sadd.s32 %s833, %s831
        %s835 = smul.addr %s834, 2
        %s836 = scalar_lea.vmem %s7, %s835
      $region64: #{cnn_1d_forward.15} parent=55 // pred_fallthru
        _
    $region56: #{cnn_1d_forward.15} parent=5 // pred_fallthru
      _
  $region6: #{cnn_1d_forward.15} parent=0 // loop_footer
    %s18 = sadd.s32 1, %s14
  $region7: #{cnn_1d_forward.15} parent=0 // loop_footer_branch
    %13 = sbr.rel target = $region3
  $region8: #{cnn_1d_forward.15} parent=0 // loop_exit
    _

// kernel: cnn_1d_forward.17
$region0: #{cnn_1d_forward.17}
  #allocation0 [shape = 'u32[]', space=smem, size = 0x4, offset = 0x4, fixed_abs, tag = 'smem constant byte address 0x4 - core index']
  #allocation1 [shape = 'u32[144,128]{1,0:T(1,128)}', space=vmem, size = 0x12000, scoped, tag = 'internal scratch']
  %s0 = inlined_call_operand.vmem [shape: bf16[2,1,6,128], index: 0, kind: input, shape index: {}]
  %s1 = inlined_call_operand.vmem [shape: bf16[3,128,128], index: 1, kind: input, shape index: {}]
  %s2 = inlined_call_operand.vmem [shape: f32[1,128], index: 2, kind: input, shape index: {}]
  %s3 = inlined_call_operand.vmem [shape: f32[1,128], index: 3, kind: input, shape index: {}]
  %s4 = inlined_call_operand.vmem [shape: bf16[2,4,128], index: 4, kind: output, shape index: {}]
  %s5 = sld [smem:[#allocation0]]
  $region49: #{cnn_1d_forward.17} parent=0
    _
  %s7 = ssub.s32 1, %s5
  %s8 = scalar_select 0, %s7, %s5
  loop: start=0, step=1, limit=4
  $region2: #{cnn_1d_forward.17} parent=0 // loop_pre_header
    _
  $region3: #{cnn_1d_forward.17} parent=0 // loop_header
    %s10 = sphi 0, %s14
    %p11 = scmp.ge.s32.totalorder %s10, 4
    %s17 = sphi 0, %s29
    %s18 = sphi 0, %s25
    %s19 = sphi 0, %s17
    %s20 = sphi 0, %s18
    %s21 = sphi 0, %s19
    %s22 = sphi 0, %s20
    %s34 = sphi 0, %s36
    %s37 = sphi 0, %s34
    %s38 = sphi 0, %s37
    %s54 = sphi 0, %s38
    %s58 = sphi 0, %s58
    %s60 = sphi 0, %s58
    %s61 = sphi 0, %s60
    %s75 = sphi 0, %s61
    %s79 = sphi 0, %s79
    %s81 = sphi 0, %s79
    %s82 = sphi 0, %s81
    %s96 = sphi 0, %s82
    %s100 = sphi 0, %s100
    %s102 = sphi 0, %s100
    %s103 = sphi 0, %s102
    %s117 = sphi 0, %s103
    %s125 = sphi 0, %s127
    %s128 = sphi 0, %s125
    %s129 = sphi 0, %s128
    %s145 = sphi 0, %s129
  $region4: #{cnn_1d_forward.17} parent=0 // loop_header_branch
    %13 = sbr.rel (%p11) target = $region8
  $region5: #{cnn_1d_forward.17} parent=0 // loop_body
    %s15 = ssub.s32 %s10, 1
    %s16 = ssub.s32 %s10, 2
    %s23 = sadd.s32 1, %s18
    %p24 = scmp.ge.s32.totalorder %s23, 1
    %s25 = scalar_select %p24, 0, %s23
    %s26 = sadd.s32 1, %s17
    %s27 = scalar_select %p24, %s26, %s17
    %p28 = scmp.ge.s32.totalorder %s27, 2
    %s29 = scalar_select %p28, 0, %s27
    %s30 = ssub.s32 %s17, %s29
    %s31 = ssub.s32 %s18, %s25
    %s32 = sor.u32 %s30, %s31
    %p33 = scmp.eq.s32.totalorder %s32, 0
    %s35 = sadd.s32 %s34, 1
    %s36 = scalar_select %p33, %s34, %s35
    %p39 = pneg %p33
    %p40 = scmp.eq.s32.totalorder %s10, 1
    %p41 = por %p39, %p40
    %p42 = scmp.ne.s32.totalorder %s34, %s37
    %p43 = scmp.eq.s32.totalorder %s10, 0
    %p44 = por %p42, %p43
    %p45 = scmp.ne.s32.totalorder %s34, %s37
    %p46 = scmp.eq.s32.totalorder %s15, 1
    %p47 = por %p45, %p46
    %p48 = scmp.ne.s32.totalorder %s37, %s38
    %p49 = scmp.eq.s32.totalorder %s15, 0
    %p50 = por %p48, %p49
    %p51 = scmp.ne.s32.totalorder %s37, %s38
    %p52 = scmp.eq.s32.totalorder %s16, 1
    %p53 = por %p51, %p52
    %p55 = scmp.ne.s32.totalorder %s38, %s54
    %p56 = scmp.eq.s32.totalorder %s16, 0
    %p57 = por %p55, %p56
    %s59 = sadd.s32 %s58, 1
    %p62 = scmp.eq.s32.totalorder %s10, 1
    %p63 = scmp.ne.s32.totalorder %s58, %s60
    %p64 = scmp.eq.s32.totalorder %s10, 0
    %p65 = por %p63, %p64
    %p66 = scmp.ne.s32.totalorder %s58, %s60
    %p67 = scmp.eq.s32.totalorder %s15, 1
    %p68 = por %p66, %p67
    %p69 = scmp.ne.s32.totalorder %s60, %s61
    %p70 = scmp.eq.s32.totalorder %s15, 0
    %p71 = por %p69, %p70
    %p72 = scmp.ne.s32.totalorder %s60, %s61
    %p73 = scmp.eq.s32.totalorder %s16, 1
    %p74 = por %p72, %p73
    %p76 = scmp.ne.s32.totalorder %s61, %s75
    %p77 = scmp.eq.s32.totalorder %s16, 0
    %p78 = por %p76, %p77
    %s80 = sadd.s32 %s79, 1
    %p83 = scmp.eq.s32.totalorder %s10, 1
    %p84 = scmp.ne.s32.totalorder %s79, %s81
    %p85 = scmp.eq.s32.totalorder %s10, 0
    %p86 = por %p84, %p85
    %p87 = scmp.ne.s32.totalorder %s79, %s81
    %p88 = scmp.eq.s32.totalorder %s15, 1
    %p89 = por %p87, %p88
    %p90 = scmp.ne.s32.totalorder %s81, %s82
    %p91 = scmp.eq.s32.totalorder %s15, 0
    %p92 = por %p90, %p91
    %p93 = scmp.ne.s32.totalorder %s81, %s82
    %p94 = scmp.eq.s32.totalorder %s16, 1
    %p95 = por %p93, %p94
    %p97 = scmp.ne.s32.totalorder %s82, %s96
    %p98 = scmp.eq.s32.totalorder %s16, 0
    %p99 = por %p97, %p98
    %s101 = sadd.s32 %s100, 1
    %p104 = scmp.eq.s32.totalorder %s10, 1
    %p105 = scmp.ne.s32.totalorder %s100, %s102
    %p106 = scmp.eq.s32.totalorder %s10, 0
    %p107 = por %p105, %p106
    %p108 = scmp.ne.s32.totalorder %s100, %s102
    %p109 = scmp.eq.s32.totalorder %s15, 1
    %p110 = por %p108, %p109
    %p111 = scmp.ne.s32.totalorder %s102, %s103
    %p112 = scmp.eq.s32.totalorder %s15, 0
    %p113 = por %p111, %p112
    %p114 = scmp.ne.s32.totalorder %s102, %s103
    %p115 = scmp.eq.s32.totalorder %s16, 1
    %p116 = por %p114, %p115
    %p118 = scmp.ne.s32.totalorder %s103, %s117
    %p119 = scmp.eq.s32.totalorder %s16, 0
    %p120 = por %p118, %p119
    %s121 = ssub.s32 %s17, %s29
    %s122 = ssub.s32 %s18, %s25
    %s123 = sor.u32 %s121, %s122
    %p124 = scmp.eq.s32.totalorder %s123, 0
    %s126 = sadd.s32 %s125, 1
    %s127 = scalar_select %p124, %s125, %s126
    %p130 = pneg %p124
    %p131 = scmp.eq.s32.totalorder %s10, 1
    %p132 = por %p130, %p131
    %p133 = scmp.ne.s32.totalorder %s125, %s128
    %p134 = scmp.eq.s32.totalorder %s10, 0
    %p135 = por %p133, %p134
    %p136 = scmp.ne.s32.totalorder %s125, %s128
    %p137 = scmp.eq.s32.totalorder %s15, 1
    %p138 = por %p136, %p137
    %p139 = scmp.ne.s32.totalorder %s128, %s129
    %p140 = scmp.eq.s32.totalorder %s15, 0
    %p141 = por %p139, %p140
    %p142 = scmp.ne.s32.totalorder %s128, %s129
    %p143 = scmp.eq.s32.totalorder %s16, 1
    %p144 = por %p142, %p143
    %p146 = scmp.ne.s32.totalorder %s129, %s145
    %p147 = scmp.eq.s32.totalorder %s16, 0
    %p148 = por %p146, %p147
    %p149 = scmp.le.s32.totalorder 1, %s10
    %p150 = scmp.lt.s32.totalorder %s10, 3
    %p151 = pnand %p149, %p150
    %p152 = pneg %p151
    // Predicated region
    $region9: #{cnn_1d_forward.17} parent=5 // pred_check
      _
    $region10: #{cnn_1d_forward.17} parent=5 // pred_check_branch
      %154 = sbr.rel (%p151) target = $region12
    $region11: #{cnn_1d_forward.17} parent=5 // pred_region
      %s155 = ssub.s32 %s10, 1
      // Predicated region
      $region13: #{cnn_1d_forward.17} parent=11 // pred_check
        %p156 = pneg %p71
      $region14: #{cnn_1d_forward.17} parent=11 // pred_check_branch
        %158 = sbr.rel (%p156) target = $region16
      $region15: #{cnn_1d_forward.17} parent=11 // pred_region
        _
      $region16: #{cnn_1d_forward.17} parent=11 // pred_fallthru
        _
      // Predicated region
      $region17: #{cnn_1d_forward.17} parent=11 // pred_check
        %p159 = pneg %p92
      $region18: #{cnn_1d_forward.17} parent=11 // pred_check_branch
        %161 = sbr.rel (%p159) target = $region20
      $region19: #{cnn_1d_forward.17} parent=11 // pred_region
        _
      $region20: #{cnn_1d_forward.17} parent=11 // pred_fallthru
        _
      // Predicated region
      $region21: #{cnn_1d_forward.17} parent=11 // pred_check
        %p162 = pneg %p113
      $region22: #{cnn_1d_forward.17} parent=11 // pred_check_branch
        %164 = sbr.rel (%p162) target = $region24
      $region23: #{cnn_1d_forward.17} parent=11 // pred_region
        _
      $region24: #{cnn_1d_forward.17} parent=11 // pred_fallthru
        _
    $region12: #{cnn_1d_forward.17} parent=5 // pred_fallthru
      _
    %p165 = scmp.lt.s32.totalorder %s10, 2
    // Predicated region
    $region25: #{cnn_1d_forward.17} parent=5 // pred_check
      %p166 = pneg %p165
    $region26: #{cnn_1d_forward.17} parent=5 // pred_check_branch
      %168 = sbr.rel (%p166) target = $region28
    $region27: #{cnn_1d_forward.17} parent=5 // pred_region
      // Predicated region
      $region29: #{cnn_1d_forward.17} parent=27 // pred_check
        %p169 = pneg %p44
      $region30: #{cnn_1d_forward.17} parent=27 // pred_check_branch
        %171 = sbr.rel (%p169) target = $region32
      $region31: #{cnn_1d_forward.17} parent=27 // pred_region
        %p172 = scmp.lt.s32.totalorder %s17, 1
        %s173 = scalar_select %p172, %s17, 1
        %p174 = scmp.lt.s32.totalorder %s18, 0
        %s175 = scalar_select %p174, %s18, 0
        %s176 = sadd.s32 %s175, %s173
        %s177 = smul.addr %s176, 4
        %s178 = scalar_lea.vmem %s0, %s177
      $region32: #{cnn_1d_forward.17} parent=27 // pred_fallthru
        _
    $region28: #{cnn_1d_forward.17} parent=5 // pred_fallthru
      _
    %p179 = scmp.le.s32.totalorder 1, %s10
    %p180 = scmp.lt.s32.totalorder %s10, 3
    %p181 = pnand %p179, %p180
    %p182 = pneg %p181
    // Predicated region
    $region33: #{cnn_1d_forward.17} parent=5 // pred_check
      _
    $region34: #{cnn_1d_forward.17} parent=5 // pred_check_branch
      %184 = sbr.rel (%p181) target = $region36
    $region35: #{cnn_1d_forward.17} parent=5 // pred_region
      %s185 = ssub.s32 %s10, 1
      %p186 = scmp.lt.s32.totalorder %s19, 1
      %s187 = scalar_select %p186, %s19, 1
      %p188 = scmp.lt.s32.totalorder %s20, 0
      %s189 = scalar_select %p188, %s20, 0
      %s190 = sadd.s32 %s189, %s187
      %s191 = smul.addr %s190, 4
      %s192 = scalar_lea.vmem %s0, %s191
      %p193 = pneg %p50
      %p194 = pneg %p47
      %p195 = pneg %p71
      %p196 = pneg %p68
      %p197 = pneg %p92
      %p198 = pneg %p89
      %p199 = pneg %p113
      %p200 = pneg %p110
      %p201 = pneg %p141
      %p202 = pneg %p138
      %p203 = scmp.lt.s32.totalorder %s19, 1
      %s204 = scalar_select %p203, %s19, 1
      %p205 = scmp.lt.s32.totalorder %s20, 0
      %s206 = scalar_select %p205, %s20, 0
      %s207 = sadd.s32 %s206, %s204
      %s208 = smul.addr %s207, 2
      %s209 = scalar_lea.vmem %s4, %s208
      %p210 = scmp.lt.s32.totalorder %s19, 1
      %s211 = scalar_select %p210, %s19, 1
      %p212 = scmp.lt.s32.totalorder %s20, 0
      %s213 = scalar_select %p212, %s20, 0
      %s214 = sadd.s32 %s213, %s211
      %s215 = smul.addr %s214, 4
      %s216 = scalar_lea.vmem %s0, %s215
      %p217 = scmp.lt.s32.totalorder %s19, 1
      %s218 = scalar_select %p217, %s19, 1
      %p219 = scmp.lt.s32.totalorder %s20, 0
      %s220 = scalar_select %p219, %s20, 0
      %s221 = sadd.s32 %s220, %s218
      %s222 = smul.addr %s221, 2
      %s223 = scalar_lea.vmem %s4, %s222
      %v225 = vld [vmem:[%s216] sm:$0x3]
      %v226 = vld [vmem:[%s1] sm:$0xf]
      %v227 = vld [vmem:[%s1 + $0x4] sm:$0xf]
      %v228 = vld [vmem:[%s1 + $0x8] sm:$0xf]
      %v229 = vld [vmem:[%s1 + $0xc] sm:$0xf]
      %v230 = vld [vmem:[%s1 + $0x10] sm:$0xf]
      %v231 = vld [vmem:[%s1 + $0x14] sm:$0xf]
      %v232 = vld [vmem:[%s1 + $0x18] sm:$0xf]
      %v233 = vld [vmem:[%s1 + $0x1c] sm:$0xf]
      %v234 = vld [vmem:[%s1 + $0x20] sm:$0xf]
      %v235 = vld [vmem:[%s1 + $0x24] sm:$0xf]
      %v236 = vld [vmem:[%s1 + $0x28] sm:$0xf]
      %v237 = vld [vmem:[%s1 + $0x2c] sm:$0xf]
      %v238 = vld [vmem:[%s1 + $0x30] sm:$0xf]
      %v239 = vld [vmem:[%s1 + $0x34] sm:$0xf]
      %v240 = vld [vmem:[%s1 + $0x38] sm:$0xf]
      %v241 = vld [vmem:[%s1 + $0x3c] sm:$0xf]
      %v242 = vld [vmem:[%s216] sm:$0x7]
      %s243 = scalar_lea.vmem %s1, 64
      %v244 = vld [vmem:[%s243] sm:$0xf]
      %v245 = vld [vmem:[%s243 + $0x4] sm:$0xf]
      %v246 = vld [vmem:[%s243 + $0x8] sm:$0xf]
      %v247 = vld [vmem:[%s243 + $0xc] sm:$0xf]
      %v248 = vld [vmem:[%s243 + $0x10] sm:$0xf]
      %v249 = vld [vmem:[%s243 + $0x14] sm:$0xf]
      %v250 = vld [vmem:[%s243 + $0x18] sm:$0xf]
      %v251 = vld [vmem:[%s243 + $0x1c] sm:$0xf]
      %v252 = vld [vmem:[%s243 + $0x20] sm:$0xf]
      %v253 = vld [vmem:[%s243 + $0x24] sm:$0xf]
      %v254 = vld [vmem:[%s243 + $0x28] sm:$0xf]
      %v255 = vld [vmem:[%s243 + $0x2c] sm:$0xf]
      %v256 = vld [vmem:[%s243 + $0x30] sm:$0xf]
      %v257 = vld [vmem:[%s243 + $0x34] sm:$0xf]
      %v258 = vld [vmem:[%s243 + $0x38] sm:$0xf]
      %v259 = vld [vmem:[%s243 + $0x3c] sm:$0xf]
      %v261 = vunpack.c.l.b16 %v242
      %v262 = vpack.c.b16 %v261, %v261
      %v264 = vshrl.u32 %v262, 16
      %v266 = vshll.u32 %v262, 16
      %v268 = vrot.slane %v266, 1
      %v269 = vor.u32 %v264, %v268
      %v287 = vunpack.c.l.b16 %v244
      %v288 = vunpack.c.l.b16 %v245
      %v289 = vunpack.c.l.b16 %v246
      %v290 = vunpack.c.l.b16 %v247
      %v291 = vunpack.c.l.b16 %v248
      %v292 = vunpack.c.l.b16 %v249
      %v293 = vunpack.c.l.b16 %v250
      %v294 = vunpack.c.l.b16 %v251
      %v295 = vunpack.c.l.b16 %v252
      %v296 = vunpack.c.l.b16 %v253
      %v297 = vunpack.c.l.b16 %v254
      %v298 = vunpack.c.l.b16 %v255
      %v299 = vunpack.c.l.b16 %v256
      %v300 = vunpack.c.l.b16 %v257
      %v301 = vunpack.c.l.b16 %v258
      %v302 = vunpack.c.l.b16 %v259
      %v303 = vpack.c.b16 %v288, %v287
      %v304 = vpack.c.b16 %v290, %v289
      %v305 = vpack.c.b16 %v292, %v291
      %v306 = vpack.c.b16 %v294, %v293
      %v307 = vpack.c.b16 %v296, %v295
      %v308 = vpack.c.b16 %v298, %v297
      %v309 = vpack.c.b16 %v300, %v299
      %v310 = vpack.c.b16 %v302, %v301
      %319 = vmatprep.subr.bf16.mxu0 0
      %320 = vmatpush1.bf16.msra.mxu0 %v303
      %321 = vmatprep.subr.bf16.mxu0 0
      %322 = vmatpush1.bf16.msra.mxu0 %v304
      %323 = vmatprep.subr.bf16.mxu0 0
      %324 = vmatpush1.bf16.msra.mxu0 %v305
      %325 = vmatprep.subr.bf16.mxu0 0
      %326 = vmatpush1.bf16.msra.mxu0 %v306
      %327 = vmatprep.subr.bf16.mxu0 0
      %328 = vmatpush1.bf16.msra.mxu0 %v307
      %329 = vmatprep.subr.bf16.mxu0 0
      %330 = vmatpush1.bf16.msra.mxu0 %v308
      %331 = vmatprep.subr.bf16.mxu0 0
      %332 = vmatpush1.bf16.msra.mxu0 %v309
      %333 = vmatprep.subr.bf16.mxu0 0
      %334 = vmatpush1.bf16.msra.mxu0 %v310
      %335 = vmatprep.subr.bf16.mxu0 0
      %336 = vmatpush1.bf16.msra.mxu0 0
      %337 = vmatprep.subr.bf16.mxu0 0
      %338 = vmatpush1.bf16.msra.mxu0 0
      %339 = vmatprep.subr.bf16.mxu0 0
      %340 = vmatpush1.bf16.msra.mxu0 0
      %341 = vmatprep.subr.bf16.mxu0 0
      %342 = vmatpush1.bf16.msra.mxu0 0
      %343 = vmatprep.subr.bf16.mxu0 0
      %344 = vmatpush1.bf16.msra.mxu0 0
      %345 = vmatprep.subr.bf16.mxu0 0
      %346 = vmatpush1.bf16.msra.mxu0 0
      %347 = vmatprep.subr.bf16.mxu0 0
      %348 = vmatpush1.bf16.msra.mxu0 0
      %349 = vmatprep.subr.bf16.mxu0 0
      %350 = vmatpush1.bf16.msra.mxu0 0
      %351 = vmatprep.mubr.bf16.mxu0 0
      %352 = vmatmul.mubr.bf16.gmra.mrb[0].mxu0 %v269
      %v353 = vpop.f32.mrb[0].mxu0
      %v354 = vadd.f32 0.0, %v353
      %v355 = vpop.f32.mrb[0].mxu0
      %v356 = vpop.f32.mrb[0].mxu0
      %v357 = vpop.f32.mrb[0].mxu0
      %358 = vdwg.mxu0
      %v375 = vunpack.c.l.b16 %v226
      %v376 = vunpack.c.l.b16 %v227
      %v377 = vunpack.c.l.b16 %v228
      %v378 = vunpack.c.l.b16 %v229
      %v379 = vunpack.c.l.b16 %v230
      %v380 = vunpack.c.l.b16 %v231
      %v381 = vunpack.c.l.b16 %v232
      %v382 = vunpack.c.l.b16 %v233
      %v383 = vunpack.c.l.b16 %v234
      %v384 = vunpack.c.l.b16 %v235
      %v385 = vunpack.c.l.b16 %v236
      %v386 = vunpack.c.l.b16 %v237
      %v387 = vunpack.c.l.b16 %v238
      %v388 = vunpack.c.l.b16 %v239
      %v389 = vunpack.c.l.b16 %v240
      %v390 = vunpack.c.l.b16 %v241
      %v391 = vpack.c.b16 %v376, %v375
      %v392 = vpack.c.b16 %v378, %v377
      %v393 = vpack.c.b16 %v380, %v379
      %v394 = vpack.c.b16 %v382, %v381
      %v395 = vpack.c.b16 %v384, %v383
      %v396 = vpack.c.b16 %v386, %v385
      %v397 = vpack.c.b16 %v388, %v387
      %v398 = vpack.c.b16 %v390, %v389
      %407 = vmatprep.subr.bf16.mxu0 0
      %408 = vmatpush1.bf16.msra.mxu0 %v391
      %409 = vmatprep.subr.bf16.mxu0 0
      %410 = vmatpush1.bf16.msra.mxu0 %v392
      %411 = vmatprep.subr.bf16.mxu0 0
      %412 = vmatpush1.bf16.msra.mxu0 %v393
      %413 = vmatprep.subr.bf16.mxu0 0
      %414 = vmatpush1.bf16.msra.mxu0 %v394
      %415 = vmatprep.subr.bf16.mxu0 0
      %416 = vmatpush1.bf16.msra.mxu0 %v395
      %417 = vmatprep.subr.bf16.mxu0 0
      %418 = vmatpush1.bf16.msra.mxu0 %v396
      %419 = vmatprep.subr.bf16.mxu0 0
      %420 = vmatpush1.bf16.msra.mxu0 %v397
      %421 = vmatprep.subr.bf16.mxu0 0
      %422 = vmatpush1.bf16.msra.mxu0 %v398
      %423 = vmatprep.subr.bf16.mxu0 0
      %424 = vmatpush1.bf16.msra.mxu0 0
      %425 = vmatprep.subr.bf16.mxu0 0
      %426 = vmatpush1.bf16.msra.mxu0 0
      %427 = vmatprep.subr.bf16.mxu0 0
      %428 = vmatpush1.bf16.msra.mxu0 0
      %429 = vmatprep.subr.bf16.mxu0 0
      %430 = vmatpush1.bf16.msra.mxu0 0
      %431 = vmatprep.subr.bf16.mxu0 0
      %432 = vmatpush1.bf16.msra.mxu0 0
      %433 = vmatprep.subr.bf16.mxu0 0
      %434 = vmatpush1.bf16.msra.mxu0 0
      %435 = vmatprep.subr.bf16.mxu0 0
      %436 = vmatpush1.bf16.msra.mxu0 0
      %437 = vmatprep.subr.bf16.mxu0 0
      %438 = vmatpush1.bf16.msra.mxu0 0
      %439 = vmatprep.mubr.bf16.mxu0 0
      %440 = vmatmul.mubr.bf16.gmra.mrb[0].mxu0 %v225
      %v441 = vpop.f32.mrb[0].mxu0
      %v442 = vadd.f32 %v354, %v441
      %v443 = vpop.f32.mrb[0].mxu0
      %v444 = vpop.f32.mrb[0].mxu0
      %v445 = vpop.f32.mrb[0].mxu0
      %446 = vdwg.mxu0
      %v447 = vld [vmem:[%s216] sm:$0x6]
      %s448 = scalar_lea.vmem %s1, 128
      %v449 = vld [vmem:[%s448] sm:$0xf]
      %v450 = vld [vmem:[%s448 + $0x4] sm:$0xf]
      %v451 = vld [vmem:[%s448 + $0x8] sm:$0xf]
      %v452 = vld [vmem:[%s448 + $0xc] sm:$0xf]
      %v453 = vld [vmem:[%s448 + $0x10] sm:$0xf]
      %v454 = vld [vmem:[%s448 + $0x14] sm:$0xf]
      %v455 = vld [vmem:[%s448 + $0x18] sm:$0xf]
      %v456 = vld [vmem:[%s448 + $0x1c] sm:$0xf]
      %v457 = vld [vmem:[%s448 + $0x20] sm:$0xf]
      %v458 = vld [vmem:[%s448 + $0x24] sm:$0xf]
      %v459 = vld [vmem:[%s448 + $0x28] sm:$0xf]
      %v460 = vld [vmem:[%s448 + $0x2c] sm:$0xf]
      %v461 = vld [vmem:[%s448 + $0x30] sm:$0xf]
      %v462 = vld [vmem:[%s448 + $0x34] sm:$0xf]
      %v463 = vld [vmem:[%s448 + $0x38] sm:$0xf]
      %v464 = vld [vmem:[%s448 + $0x3c] sm:$0xf]
      %v466 = vunpack.c.l.b16 %v447
      %v467 = vpack.c.b16 %v466, %v466
      %v468 = vrot.slane %v467, 1
      %v486 = vunpack.c.l.b16 %v449
      %v487 = vunpack.c.l.b16 %v450
      %v488 = vunpack.c.l.b16 %v451
      %v489 = vunpack.c.l.b16 %v452
      %v490 = vunpack.c.l.b16 %v453
      %v491 = vunpack.c.l.b16 %v454
      %v492 = vunpack.c.l.b16 %v455
      %v493 = vunpack.c.l.b16 %v456
      %v494 = vunpack.c.l.b16 %v457
      %v495 = vunpack.c.l.b16 %v458
      %v496 = vunpack.c.l.b16 %v459
      %v497 = vunpack.c.l.b16 %v460
      %v498 = vunpack.c.l.b16 %v461
      %v499 = vunpack.c.l.b16 %v462
      %v500 = vunpack.c.l.b16 %v463
      %v501 = vunpack.c.l.b16 %v464
      %v502 = vpack.c.b16 %v487, %v486
      %v503 = vpack.c.b16 %v489, %v488
      %v504 = vpack.c.b16 %v491, %v490
      %v505 = vpack.c.b16 %v493, %v492
      %v506 = vpack.c.b16 %v495, %v494
      %v507 = vpack.c.b16 %v497, %v496
      %v508 = vpack.c.b16 %v499, %v498
      %v509 = vpack.c.b16 %v501, %v500
      %518 = vmatprep.subr.bf16.mxu0 0
      %519 = vmatpush1.bf16.msra.mxu0 %v502
      %520 = vmatprep.subr.bf16.mxu0 0
      %521 = vmatpush1.bf16.msra.mxu0 %v503
      %522 = vmatprep.subr.bf16.mxu0 0
      %523 = vmatpush1.bf16.msra.mxu0 %v504
      %524 = vmatprep.subr.bf16.mxu0 0
      %525 = vmatpush1.bf16.msra.mxu0 %v505
      %526 = vmatprep.subr.bf16.mxu0 0
      %527 = vmatpush1.bf16.msra.mxu0 %v506
      %528 = vmatprep.subr.bf16.mxu0 0
      %529 = vmatpush1.bf16.msra.mxu0 %v507
      %530 = vmatprep.subr.bf16.mxu0 0
      %531 = vmatpush1.bf16.msra.mxu0 %v508
      %532 = vmatprep.subr.bf16.mxu0 0
      %533 = vmatpush1.bf16.msra.mxu0 %v509
      %534 = vmatprep.subr.bf16.mxu0 0
      %535 = vmatpush1.bf16.msra.mxu0 0
      %536 = vmatprep.subr.bf16.mxu0 0
      %537 = vmatpush1.bf16.msra.mxu0 0
      %538 = vmatprep.subr.bf16.mxu0 0
      %539 = vmatpush1.bf16.msra.mxu0 0
      %540 = vmatprep.subr.bf16.mxu0 0
      %541 = vmatpush1.bf16.msra.mxu0 0
      %542 = vmatprep.subr.bf16.mxu0 0
      %543 = vmatpush1.bf16.msra.mxu0 0
      %544 = vmatprep.subr.bf16.mxu0 0
      %545 = vmatpush1.bf16.msra.mxu0 0
      %546 = vmatprep.subr.bf16.mxu0 0
      %547 = vmatpush1.bf16.msra.mxu0 0
      %548 = vmatprep.subr.bf16.mxu0 0
      %549 = vmatpush1.bf16.msra.mxu0 0
      %550 = vmatprep.mubr.bf16.mxu0 0
      %551 = vmatmul.mubr.bf16.gmra.mrb[0].mxu0 %v468
      %v552 = vpop.f32.mrb[0].mxu0
      %v553 = vadd.f32 0.0, %v552
      %v554 = vpop.f32.mrb[0].mxu0
      %v555 = vpop.f32.mrb[0].mxu0
      %v556 = vpop.f32.mrb[0].mxu0
      %557 = vdwg.mxu0
      %v558 = vadd.f32 %v442, %v553
      %v559 = vld [vmem:[%s2] sm:$0x1]
      %v561 = vlaneseq
      %v562 = vshrl.u32 %v561, 7
      %v563 = vsub.s32 0, %v562
      %v564 = vrot.slane %v559, %v563
      %v566 = vmul.f32 %v558, %v564
      %v567 = vld [vmem:[%s3] sm:$0x1]
      %v569 = vlaneseq
      %v570 = vshrl.u32 %v569, 7
      %v571 = vsub.s32 0, %v570
      %v572 = vrot.slane %v567, %v571
      %v574 = vadd.f32 %v566, %v572
      %v575 = vmax.f32 %v574, 0.0
      %v576 = vpack.c.bf16 %v575, %v575
      %577 = vst [vmem:[%s223] sm:$0x3] %v576
      %p578 = scmp.lt.s32.totalorder %s19, 1
      %s579 = scalar_select %p578, %s19, 1
      %p580 = scmp.lt.s32.totalorder %s20, 0
      %s581 = scalar_select %p580, %s20, 0
      %s582 = sadd.s32 %s581, %s579
      %s583 = smul.addr %s582, 2
      %s584 = scalar_lea.vmem %s4, %s583
      // Predicated region
      $region37: #{cnn_1d_forward.17} parent=35 // pred_check
        %p585 = pneg %p138
      $region38: #{cnn_1d_forward.17} parent=35 // pred_check_branch
        %587 = sbr.rel (%p585) target = $region40
      $region39: #{cnn_1d_forward.17} parent=35 // pred_region
        _
      $region40: #{cnn_1d_forward.17} parent=35 // pred_fallthru
        _
    $region36: #{cnn_1d_forward.17} parent=5 // pred_fallthru
      _
    %p588 = scmp.le.s32.totalorder 2, %s10
    // Predicated region
    $region41: #{cnn_1d_forward.17} parent=5 // pred_check
      %p589 = pneg %p588
    $region42: #{cnn_1d_forward.17} parent=5 // pred_check_branch
      %591 = sbr.rel (%p589) target = $region44
    $region43: #{cnn_1d_forward.17} parent=5 // pred_region
      %s592 = ssub.s32 %s10, 2
      // Predicated region
      $region45: #{cnn_1d_forward.17} parent=43 // pred_check
        %p593 = pneg %p144
      $region46: #{cnn_1d_forward.17} parent=43 // pred_check_branch
        %595 = sbr.rel (%p593) target = $region48
      $region47: #{cnn_1d_forward.17} parent=43 // pred_region
        %p596 = scmp.lt.s32.totalorder %s21, 1
        %s597 = scalar_select %p596, %s21, 1
        %p598 = scmp.lt.s32.totalorder %s22, 0
        %s599 = scalar_select %p598, %s22, 0
        %s600 = sadd.s32 %s599, %s597
        %s601 = smul.addr %s600, 2
        %s602 = scalar_lea.vmem %s4, %s601
      $region48: #{cnn_1d_forward.17} parent=43 // pred_fallthru
        _
    $region44: #{cnn_1d_forward.17} parent=5 // pred_fallthru
      _
  $region6: #{cnn_1d_forward.17} parent=0 // loop_footer
    %s14 = sadd.s32 1, %s10
  $region7: #{cnn_1d_forward.17} parent=0 // loop_footer_branch
    %9 = sbr.rel target = $region3
  $region8: #{cnn_1d_forward.17} parent=0 // loop_exit
    _

// kernel: cnn_1d_forward.16
$region0: #{cnn_1d_forward.16}
  #allocation0 [shape = 'u32[]', space=smem, size = 0x4, offset = 0x4, fixed_abs, tag = 'smem constant byte address 0x4 - core index']
  #allocation1 [shape = 'u32[144,128]{1,0:T(1,128)}', space=vmem, size = 0x12000, scoped, tag = 'internal scratch']
  %s0 = inlined_call_operand.vmem [shape: bf16[2,1,6,128], index: 0, kind: input, shape index: {}]
  %s1 = inlined_call_operand.vmem [shape: bf16[3,128,128], index: 1, kind: input, shape index: {}]
  %s2 = inlined_call_operand.vmem [shape: f32[1,128], index: 2, kind: input, shape index: {}]
  %s3 = inlined_call_operand.vmem [shape: f32[1,128], index: 3, kind: input, shape index: {}]
  %s4 = inlined_call_operand.vmem [shape: bf16[2,4,128], index: 4, kind: input, shape index: {}]
  %s5 = inlined_call_operand.vmem [shape: bf16[2,4,128], index: 5, kind: output, shape index: {}]
  %s6 = sld [smem:[#allocation0]]
  $region53: #{cnn_1d_forward.16} parent=0
    _
  %s8 = ssub.s32 1, %s6
  %s9 = scalar_select 0, %s8, %s6
  loop: start=0, step=1, limit=4
  $region2: #{cnn_1d_forward.16} parent=0 // loop_pre_header
    _
  $region3: #{cnn_1d_forward.16} parent=0 // loop_header
    %s11 = sphi 0, %s15
    %p12 = scmp.ge.s32.totalorder %s11, 4
    %s18 = sphi 0, %s30
    %s19 = sphi 0, %s26
    %s20 = sphi 0, %s18
    %s21 = sphi 0, %s19
    %s22 = sphi 0, %s20
    %s23 = sphi 0, %s21
    %s35 = sphi 0, %s37
    %s38 = sphi 0, %s35
    %s39 = sphi 0, %s38
    %s55 = sphi 0, %s39
    %s59 = sphi 0, %s59
    %s61 = sphi 0, %s59
    %s62 = sphi 0, %s61
    %s76 = sphi 0, %s62
    %s80 = sphi 0, %s80
    %s82 = sphi 0, %s80
    %s83 = sphi 0, %s82
    %s97 = sphi 0, %s83
    %s101 = sphi 0, %s101
    %s103 = sphi 0, %s101
    %s104 = sphi 0, %s103
    %s118 = sphi 0, %s104
    %s126 = sphi 0, %s128
    %s129 = sphi 0, %s126
    %s130 = sphi 0, %s129
    %s146 = sphi 0, %s130
    %s154 = sphi 0, %s156
    %s157 = sphi 0, %s154
    %s158 = sphi 0, %s157
    %s174 = sphi 0, %s158
  $region4: #{cnn_1d_forward.16} parent=0 // loop_header_branch
    %14 = sbr.rel (%p12) target = $region8
  $region5: #{cnn_1d_forward.16} parent=0 // loop_body
    %s16 = ssub.s32 %s11, 1
    %s17 = ssub.s32 %s11, 2
    %s24 = sadd.s32 1, %s19
    %p25 = scmp.ge.s32.totalorder %s24, 1
    %s26 = scalar_select %p25, 0, %s24
    %s27 = sadd.s32 1, %s18
    %s28 = scalar_select %p25, %s27, %s18
    %p29 = scmp.ge.s32.totalorder %s28, 2
    %s30 = scalar_select %p29, 0, %s28
    %s31 = ssub.s32 %s18, %s30
    %s32 = ssub.s32 %s19, %s26
    %s33 = sor.u32 %s31, %s32
    %p34 = scmp.eq.s32.totalorder %s33, 0
    %s36 = sadd.s32 %s35, 1
    %s37 = scalar_select %p34, %s35, %s36
    %p40 = pneg %p34
    %p41 = scmp.eq.s32.totalorder %s11, 1
    %p42 = por %p40, %p41
    %p43 = scmp.ne.s32.totalorder %s35, %s38
    %p44 = scmp.eq.s32.totalorder %s11, 0
    %p45 = por %p43, %p44
    %p46 = scmp.ne.s32.totalorder %s35, %s38
    %p47 = scmp.eq.s32.totalorder %s16, 1
    %p48 = por %p46, %p47
    %p49 = scmp.ne.s32.totalorder %s38, %s39
    %p50 = scmp.eq.s32.totalorder %s16, 0
    %p51 = por %p49, %p50
    %p52 = scmp.ne.s32.totalorder %s38, %s39
    %p53 = scmp.eq.s32.totalorder %s17, 1
    %p54 = por %p52, %p53
    %p56 = scmp.ne.s32.totalorder %s39, %s55
    %p57 = scmp.eq.s32.totalorder %s17, 0
    %p58 = por %p56, %p57
    %s60 = sadd.s32 %s59, 1
    %p63 = scmp.eq.s32.totalorder %s11, 1
    %p64 = scmp.ne.s32.totalorder %s59, %s61
    %p65 = scmp.eq.s32.totalorder %s11, 0
    %p66 = por %p64, %p65
    %p67 = scmp.ne.s32.totalorder %s59, %s61
    %p68 = scmp.eq.s32.totalorder %s16, 1
    %p69 = por %p67, %p68
    %p70 = scmp.ne.s32.totalorder %s61, %s62
    %p71 = scmp.eq.s32.totalorder %s16, 0
    %p72 = por %p70, %p71
    %p73 = scmp.ne.s32.totalorder %s61, %s62
    %p74 = scmp.eq.s32.totalorder %s17, 1
    %p75 = por %p73, %p74
    %p77 = scmp.ne.s32.totalorder %s62, %s76
    %p78 = scmp.eq.s32.totalorder %s17, 0
    %p79 = por %p77, %p78
    %s81 = sadd.s32 %s80, 1
    %p84 = scmp.eq.s32.totalorder %s11, 1
    %p85 = scmp.ne.s32.totalorder %s80, %s82
    %p86 = scmp.eq.s32.totalorder %s11, 0
    %p87 = por %p85, %p86
    %p88 = scmp.ne.s32.totalorder %s80, %s82
    %p89 = scmp.eq.s32.totalorder %s16, 1
    %p90 = por %p88, %p89
    %p91 = scmp.ne.s32.totalorder %s82, %s83
    %p92 = scmp.eq.s32.totalorder %s16, 0
    %p93 = por %p91, %p92
    %p94 = scmp.ne.s32.totalorder %s82, %s83
    %p95 = scmp.eq.s32.totalorder %s17, 1
    %p96 = por %p94, %p95
    %p98 = scmp.ne.s32.totalorder %s83, %s97
    %p99 = scmp.eq.s32.totalorder %s17, 0
    %p100 = por %p98, %p99
    %s102 = sadd.s32 %s101, 1
    %p105 = scmp.eq.s32.totalorder %s11, 1
    %p106 = scmp.ne.s32.totalorder %s101, %s103
    %p107 = scmp.eq.s32.totalorder %s11, 0
    %p108 = por %p106, %p107
    %p109 = scmp.ne.s32.totalorder %s101, %s103
    %p110 = scmp.eq.s32.totalorder %s16, 1
    %p111 = por %p109, %p110
    %p112 = scmp.ne.s32.totalorder %s103, %s104
    %p113 = scmp.eq.s32.totalorder %s16, 0
    %p114 = por %p112, %p113
    %p115 = scmp.ne.s32.totalorder %s103, %s104
    %p116 = scmp.eq.s32.totalorder %s17, 1
    %p117 = por %p115, %p116
    %p119 = scmp.ne.s32.totalorder %s104, %s118
    %p120 = scmp.eq.s32.totalorder %s17, 0
    %p121 = por %p119, %p120
    %s122 = ssub.s32 %s18, %s30
    %s123 = ssub.s32 %s19, %s26
    %s124 = sor.u32 %s122, %s123
    %p125 = scmp.eq.s32.totalorder %s124, 0
    %s127 = sadd.s32 %s126, 1
    %s128 = scalar_select %p125, %s126, %s127
    %p131 = pneg %p125
    %p132 = scmp.eq.s32.totalorder %s11, 1
    %p133 = por %p131, %p132
    %p134 = scmp.ne.s32.totalorder %s126, %s129
    %p135 = scmp.eq.s32.totalorder %s11, 0
    %p136 = por %p134, %p135
    %p137 = scmp.ne.s32.totalorder %s126, %s129
    %p138 = scmp.eq.s32.totalorder %s16, 1
    %p139 = por %p137, %p138
    %p140 = scmp.ne.s32.totalorder %s129, %s130
    %p141 = scmp.eq.s32.totalorder %s16, 0
    %p142 = por %p140, %p141
    %p143 = scmp.ne.s32.totalorder %s129, %s130
    %p144 = scmp.eq.s32.totalorder %s17, 1
    %p145 = por %p143, %p144
    %p147 = scmp.ne.s32.totalorder %s130, %s146
    %p148 = scmp.eq.s32.totalorder %s17, 0
    %p149 = por %p147, %p148
    %s150 = ssub.s32 %s18, %s30
    %s151 = ssub.s32 %s19, %s26
    %s152 = sor.u32 %s150, %s151
    %p153 = scmp.eq.s32.totalorder %s152, 0
    %s155 = sadd.s32 %s154, 1
    %s156 = scalar_select %p153, %s154, %s155
    %p159 = pneg %p153
    %p160 = scmp.eq.s32.totalorder %s11, 1
    %p161 = por %p159, %p160
    %p162 = scmp.ne.s32.totalorder %s154, %s157
    %p163 = scmp.eq.s32.totalorder %s11, 0
    %p164 = por %p162, %p163
    %p165 = scmp.ne.s32.totalorder %s154, %s157
    %p166 = scmp.eq.s32.totalorder %s16, 1
    %p167 = por %p165, %p166
    %p168 = scmp.ne.s32.totalorder %s157, %s158
    %p169 = scmp.eq.s32.totalorder %s16, 0
    %p170 = por %p168, %p169
    %p171 = scmp.ne.s32.totalorder %s157, %s158
    %p172 = scmp.eq.s32.totalorder %s17, 1
    %p173 = por %p171, %p172
    %p175 = scmp.ne.s32.totalorder %s158, %s174
    %p176 = scmp.eq.s32.totalorder %s17, 0
    %p177 = por %p175, %p176
    %p178 = scmp.le.s32.totalorder 1, %s11
    %p179 = scmp.lt.s32.totalorder %s11, 3
    %p180 = pnand %p178, %p179
    %p181 = pneg %p180
    // Predicated region
    $region9: #{cnn_1d_forward.16} parent=5 // pred_check
      _
    $region10: #{cnn_1d_forward.16} parent=5 // pred_check_branch
      %183 = sbr.rel (%p180) target = $region12
    $region11: #{cnn_1d_forward.16} parent=5 // pred_region
      %s184 = ssub.s32 %s11, 1
      // Predicated region
      $region13: #{cnn_1d_forward.16} parent=11 // pred_check
        %p185 = pneg %p72
      $region14: #{cnn_1d_forward.16} parent=11 // pred_check_branch
        %187 = sbr.rel (%p185) target = $region16
      $region15: #{cnn_1d_forward.16} parent=11 // pred_region
        _
      $region16: #{cnn_1d_forward.16} parent=11 // pred_fallthru
        _
      // Predicated region
      $region17: #{cnn_1d_forward.16} parent=11 // pred_check
        %p188 = pneg %p93
      $region18: #{cnn_1d_forward.16} parent=11 // pred_check_branch
        %190 = sbr.rel (%p188) target = $region20
      $region19: #{cnn_1d_forward.16} parent=11 // pred_region
        _
      $region20: #{cnn_1d_forward.16} parent=11 // pred_fallthru
        _
      // Predicated region
      $region21: #{cnn_1d_forward.16} parent=11 // pred_check
        %p191 = pneg %p114
      $region22: #{cnn_1d_forward.16} parent=11 // pred_check_branch
        %193 = sbr.rel (%p191) target = $region24
      $region23: #{cnn_1d_forward.16} parent=11 // pred_region
        _
      $region24: #{cnn_1d_forward.16} parent=11 // pred_fallthru
        _
    $region12: #{cnn_1d_forward.16} parent=5 // pred_fallthru
      _
    %p194 = scmp.lt.s32.totalorder %s11, 2
    // Predicated region
    $region25: #{cnn_1d_forward.16} parent=5 // pred_check
      %p195 = pneg %p194
    $region26: #{cnn_1d_forward.16} parent=5 // pred_check_branch
      %197 = sbr.rel (%p195) target = $region28
    $region27: #{cnn_1d_forward.16} parent=5 // pred_region
      // Predicated region
      $region29: #{cnn_1d_forward.16} parent=27 // pred_check
        %p198 = pneg %p45
      $region30: #{cnn_1d_forward.16} parent=27 // pred_check_branch
        %200 = sbr.rel (%p198) target = $region32
      $region31: #{cnn_1d_forward.16} parent=27 // pred_region
        %p201 = scmp.lt.s32.totalorder %s18, 1
        %s202 = scalar_select %p201, %s18, 1
        %p203 = scmp.lt.s32.totalorder %s19, 0
        %s204 = scalar_select %p203, %s19, 0
        %s205 = sadd.s32 %s204, %s202
        %s206 = smul.addr %s205, 4
        %s207 = scalar_lea.vmem %s0, %s206
      $region32: #{cnn_1d_forward.16} parent=27 // pred_fallthru
        _
      // Predicated region
      $region33: #{cnn_1d_forward.16} parent=27 // pred_check
        %p208 = pneg %p136
      $region34: #{cnn_1d_forward.16} parent=27 // pred_check_branch
        %210 = sbr.rel (%p208) target = $region36
      $region35: #{cnn_1d_forward.16} parent=27 // pred_region
        %p211 = scmp.lt.s32.totalorder %s18, 1
        %s212 = scalar_select %p211, %s18, 1
        %p213 = scmp.lt.s32.totalorder %s19, 0
        %s214 = scalar_select %p213, %s19, 0
        %s215 = sadd.s32 %s214, %s212
        %s216 = smul.addr %s215, 2
        %s217 = scalar_lea.vmem %s4, %s216
      $region36: #{cnn_1d_forward.16} parent=27 // pred_fallthru
        _
    $region28: #{cnn_1d_forward.16} parent=5 // pred_fallthru
      _
    %p218 = scmp.le.s32.totalorder 1, %s11
    %p219 = scmp.lt.s32.totalorder %s11, 3
    %p220 = pnand %p218, %p219
    %p221 = pneg %p220
    // Predicated region
    $region37: #{cnn_1d_forward.16} parent=5 // pred_check
      _
    $region38: #{cnn_1d_forward.16} parent=5 // pred_check_branch
      %223 = sbr.rel (%p220) target = $region40
    $region39: #{cnn_1d_forward.16} parent=5 // pred_region
      %s224 = ssub.s32 %s11, 1
      %p225 = scmp.lt.s32.totalorder %s20, 1
      %s226 = scalar_select %p225, %s20, 1
      %p227 = scmp.lt.s32.totalorder %s21, 0
      %s228 = scalar_select %p227, %s21, 0
      %s229 = sadd.s32 %s228, %s226
      %s230 = smul.addr %s229, 4
      %s231 = scalar_lea.vmem %s0, %s230
      %p232 = pneg %p51
      %p233 = pneg %p48
      %p234 = pneg %p72
      %p235 = pneg %p69
      %p236 = pneg %p93
      %p237 = pneg %p90
      %p238 = pneg %p114
      %p239 = pneg %p111
      %p240 = scmp.lt.s32.totalorder %s20, 1
      %s241 = scalar_select %p240, %s20, 1
      %p242 = scmp.lt.s32.totalorder %s21, 0
      %s243 = scalar_select %p242, %s21, 0
      %s244 = sadd.s32 %s243, %s241
      %s245 = smul.addr %s244, 2
      %s246 = scalar_lea.vmem %s4, %s245
      %p247 = pneg %p142
      %p248 = pneg %p139
      %p249 = pneg %p170
      %p250 = pneg %p167
      %p251 = scmp.lt.s32.totalorder %s20, 1
      %s252 = scalar_select %p251, %s20, 1
      %p253 = scmp.lt.s32.totalorder %s21, 0
      %s254 = scalar_select %p253, %s21, 0
      %s255 = sadd.s32 %s254, %s252
      %s256 = smul.addr %s255, 2
      %s257 = scalar_lea.vmem %s5, %s256
      %p258 = scmp.lt.s32.totalorder %s20, 1
      %s259 = scalar_select %p258, %s20, 1
      %p260 = scmp.lt.s32.totalorder %s21, 0
      %s261 = scalar_select %p260, %s21, 0
      %s262 = sadd.s32 %s261, %s259
      %s263 = smul.addr %s262, 4
      %s264 = scalar_lea.vmem %s0, %s263
      %p265 = scmp.lt.s32.totalorder %s20, 1
      %s266 = scalar_select %p265, %s20, 1
      %p267 = scmp.lt.s32.totalorder %s21, 0
      %s268 = scalar_select %p267, %s21, 0
      %s269 = sadd.s32 %s268, %s266
      %s270 = smul.addr %s269, 2
      %s271 = scalar_lea.vmem %s4, %s270
      %p272 = scmp.lt.s32.totalorder %s20, 1
      %s273 = scalar_select %p272, %s20, 1
      %p274 = scmp.lt.s32.totalorder %s21, 0
      %s275 = scalar_select %p274, %s21, 0
      %s276 = sadd.s32 %s275, %s273
      %s277 = smul.addr %s276, 2
      %s278 = scalar_lea.vmem %s5, %s277
      %v280 = vld [vmem:[%s264] sm:$0x3]
      %v281 = vld [vmem:[%s1] sm:$0xf]
      %v282 = vld [vmem:[%s1 + $0x4] sm:$0xf]
      %v283 = vld [vmem:[%s1 + $0x8] sm:$0xf]
      %v284 = vld [vmem:[%s1 + $0xc] sm:$0xf]
      %v285 = vld [vmem:[%s1 + $0x10] sm:$0xf]
      %v286 = vld [vmem:[%s1 + $0x14] sm:$0xf]
      %v287 = vld [vmem:[%s1 + $0x18] sm:$0xf]
      %v288 = vld [vmem:[%s1 + $0x1c] sm:$0xf]
      %v289 = vld [vmem:[%s1 + $0x20] sm:$0xf]
      %v290 = vld [vmem:[%s1 + $0x24] sm:$0xf]
      %v291 = vld [vmem:[%s1 + $0x28] sm:$0xf]
      %v292 = vld [vmem:[%s1 + $0x2c] sm:$0xf]
      %v293 = vld [vmem:[%s1 + $0x30] sm:$0xf]
      %v294 = vld [vmem:[%s1 + $0x34] sm:$0xf]
      %v295 = vld [vmem:[%s1 + $0x38] sm:$0xf]
      %v296 = vld [vmem:[%s1 + $0x3c] sm:$0xf]
      %v297 = vld [vmem:[%s264] sm:$0x7]
      %s298 = scalar_lea.vmem %s1, 64
      %v299 = vld [vmem:[%s298] sm:$0xf]
      %v300 = vld [vmem:[%s298 + $0x4] sm:$0xf]
      %v301 = vld [vmem:[%s298 + $0x8] sm:$0xf]
      %v302 = vld [vmem:[%s298 + $0xc] sm:$0xf]
      %v303 = vld [vmem:[%s298 + $0x10] sm:$0xf]
      %v304 = vld [vmem:[%s298 + $0x14] sm:$0xf]
      %v305 = vld [vmem:[%s298 + $0x18] sm:$0xf]
      %v306 = vld [vmem:[%s298 + $0x1c] sm:$0xf]
      %v307 = vld [vmem:[%s298 + $0x20] sm:$0xf]
      %v308 = vld [vmem:[%s298 + $0x24] sm:$0xf]
      %v309 = vld [vmem:[%s298 + $0x28] sm:$0xf]
      %v310 = vld [vmem:[%s298 + $0x2c] sm:$0xf]
      %v311 = vld [vmem:[%s298 + $0x30] sm:$0xf]
      %v312 = vld [vmem:[%s298 + $0x34] sm:$0xf]
      %v313 = vld [vmem:[%s298 + $0x38] sm:$0xf]
      %v314 = vld [vmem:[%s298 + $0x3c] sm:$0xf]
      %v316 = vunpack.c.l.b16 %v297
      %v317 = vpack.c.b16 %v316, %v316
      %v319 = vshrl.u32 %v317, 16
      %v321 = vshll.u32 %v317, 16
      %v323 = vrot.slane %v321, 1
      %v324 = vor.u32 %v319, %v323
      %v342 = vunpack.c.l.b16 %v299
      %v343 = vunpack.c.l.b16 %v300
      %v344 = vunpack.c.l.b16 %v301
      %v345 = vunpack.c.l.b16 %v302
      %v346 = vunpack.c.l.b16 %v303
      %v347 = vunpack.c.l.b16 %v304
      %v348 = vunpack.c.l.b16 %v305
      %v349 = vunpack.c.l.b16 %v306
      %v350 = vunpack.c.l.b16 %v307
      %v351 = vunpack.c.l.b16 %v308
      %v352 = vunpack.c.l.b16 %v309
      %v353 = vunpack.c.l.b16 %v310
      %v354 = vunpack.c.l.b16 %v311
      %v355 = vunpack.c.l.b16 %v312
      %v356 = vunpack.c.l.b16 %v313
      %v357 = vunpack.c.l.b16 %v314
      %v358 = vpack.c.b16 %v343, %v342
      %v359 = vpack.c.b16 %v345, %v344
      %v360 = vpack.c.b16 %v347, %v346
      %v361 = vpack.c.b16 %v349, %v348
      %v362 = vpack.c.b16 %v351, %v350
      %v363 = vpack.c.b16 %v353, %v352
      %v364 = vpack.c.b16 %v355, %v354
      %v365 = vpack.c.b16 %v357, %v356
      %374 = vmatprep.subr.bf16.mxu0 0
      %375 = vmatpush1.bf16.msra.mxu0 %v358
      %376 = vmatprep.subr.bf16.mxu0 0
      %377 = vmatpush1.bf16.msra.mxu0 %v359
      %378 = vmatprep.subr.bf16.mxu0 0
      %379 = vmatpush1.bf16.msra.mxu0 %v360
      %380 = vmatprep.subr.bf16.mxu0 0
      %381 = vmatpush1.bf16.msra.mxu0 %v361
      %382 = vmatprep.subr.bf16.mxu0 0
      %383 = vmatpush1.bf16.msra.mxu0 %v362
      %384 = vmatprep.subr.bf16.mxu0 0
      %385 = vmatpush1.bf16.msra.mxu0 %v363
      %386 = vmatprep.subr.bf16.mxu0 0
      %387 = vmatpush1.bf16.msra.mxu0 %v364
      %388 = vmatprep.subr.bf16.mxu0 0
      %389 = vmatpush1.bf16.msra.mxu0 %v365
      %390 = vmatprep.subr.bf16.mxu0 0
      %391 = vmatpush1.bf16.msra.mxu0 0
      %392 = vmatprep.subr.bf16.mxu0 0
      %393 = vmatpush1.bf16.msra.mxu0 0
      %394 = vmatprep.subr.bf16.mxu0 0
      %395 = vmatpush1.bf16.msra.mxu0 0
      %396 = vmatprep.subr.bf16.mxu0 0
      %397 = vmatpush1.bf16.msra.mxu0 0
      %398 = vmatprep.subr.bf16.mxu0 0
      %399 = vmatpush1.bf16.msra.mxu0 0
      %400 = vmatprep.subr.bf16.mxu0 0
      %401 = vmatpush1.bf16.msra.mxu0 0
      %402 = vmatprep.subr.bf16.mxu0 0
      %403 = vmatpush1.bf16.msra.mxu0 0
      %404 = vmatprep.subr.bf16.mxu0 0
      %405 = vmatpush1.bf16.msra.mxu0 0
      %406 = vmatprep.mubr.bf16.mxu0 0
      %407 = vmatmul.mubr.bf16.gmra.mrb[0].mxu0 %v324
      %v408 = vpop.f32.mrb[0].mxu0
      %v409 = vadd.f32 0.0, %v408
      %v410 = vpop.f32.mrb[0].mxu0
      %v411 = vpop.f32.mrb[0].mxu0
      %v412 = vpop.f32.mrb[0].mxu0
      %413 = vdwg.mxu0
      %v430 = vunpack.c.l.b16 %v281
      %v431 = vunpack.c.l.b16 %v282
      %v432 = vunpack.c.l.b16 %v283
      %v433 = vunpack.c.l.b16 %v284
      %v434 = vunpack.c.l.b16 %v285
      %v435 = vunpack.c.l.b16 %v286
      %v436 = vunpack.c.l.b16 %v287
      %v437 = vunpack.c.l.b16 %v288
      %v438 = vunpack.c.l.b16 %v289
      %v439 = vunpack.c.l.b16 %v290
      %v440 = vunpack.c.l.b16 %v291
      %v441 = vunpack.c.l.b16 %v292
      %v442 = vunpack.c.l.b16 %v293
      %v443 = vunpack.c.l.b16 %v294
      %v444 = vunpack.c.l.b16 %v295
      %v445 = vunpack.c.l.b16 %v296
      %v446 = vpack.c.b16 %v431, %v430
      %v447 = vpack.c.b16 %v433, %v432
      %v448 = vpack.c.b16 %v435, %v434
      %v449 = vpack.c.b16 %v437, %v436
      %v450 = vpack.c.b16 %v439, %v438
      %v451 = vpack.c.b16 %v441, %v440
      %v452 = vpack.c.b16 %v443, %v442
      %v453 = vpack.c.b16 %v445, %v444
      %462 = vmatprep.subr.bf16.mxu0 0
      %463 = vmatpush1.bf16.msra.mxu0 %v446
      %464 = vmatprep.subr.bf16.mxu0 0
      %465 = vmatpush1.bf16.msra.mxu0 %v447
      %466 = vmatprep.subr.bf16.mxu0 0
      %467 = vmatpush1.bf16.msra.mxu0 %v448
      %468 = vmatprep.subr.bf16.mxu0 0
      %469 = vmatpush1.bf16.msra.mxu0 %v449
      %470 = vmatprep.subr.bf16.mxu0 0
      %471 = vmatpush1.bf16.msra.mxu0 %v450
      %472 = vmatprep.subr.bf16.mxu0 0
      %473 = vmatpush1.bf16.msra.mxu0 %v451
      %474 = vmatprep.subr.bf16.mxu0 0
      %475 = vmatpush1.bf16.msra.mxu0 %v452
      %476 = vmatprep.subr.bf16.mxu0 0
      %477 = vmatpush1.bf16.msra.mxu0 %v453
      %478 = vmatprep.subr.bf16.mxu0 0
      %479 = vmatpush1.bf16.msra.mxu0 0
      %480 = vmatprep.subr.bf16.mxu0 0
      %481 = vmatpush1.bf16.msra.mxu0 0
      %482 = vmatprep.subr.bf16.mxu0 0
      %483 = vmatpush1.bf16.msra.mxu0 0
      %484 = vmatprep.subr.bf16.mxu0 0
      %485 = vmatpush1.bf16.msra.mxu0 0
      %486 = vmatprep.subr.bf16.mxu0 0
      %487 = vmatpush1.bf16.msra.mxu0 0
      %488 = vmatprep.subr.bf16.mxu0 0
      %489 = vmatpush1.bf16.msra.mxu0 0
      %490 = vmatprep.subr.bf16.mxu0 0
      %491 = vmatpush1.bf16.msra.mxu0 0
      %492 = vmatprep.subr.bf16.mxu0 0
      %493 = vmatpush1.bf16.msra.mxu0 0
      %494 = vmatprep.mubr.bf16.mxu0 0
      %495 = vmatmul.mubr.bf16.gmra.mrb[0].mxu0 %v280
      %v496 = vpop.f32.mrb[0].mxu0
      %v497 = vadd.f32 %v409, %v496
      %v498 = vpop.f32.mrb[0].mxu0
      %v499 = vpop.f32.mrb[0].mxu0
      %v500 = vpop.f32.mrb[0].mxu0
      %501 = vdwg.mxu0
      %v502 = vld [vmem:[%s264] sm:$0x6]
      %s503 = scalar_lea.vmem %s1, 128
      %v504 = vld [vmem:[%s503] sm:$0xf]
      %v505 = vld [vmem:[%s503 + $0x4] sm:$0xf]
      %v506 = vld [vmem:[%s503 + $0x8] sm:$0xf]
      %v507 = vld [vmem:[%s503 + $0xc] sm:$0xf]
      %v508 = vld [vmem:[%s503 + $0x10] sm:$0xf]
      %v509 = vld [vmem:[%s503 + $0x14] sm:$0xf]
      %v510 = vld [vmem:[%s503 + $0x18] sm:$0xf]
      %v511 = vld [vmem:[%s503 + $0x1c] sm:$0xf]
      %v512 = vld [vmem:[%s503 + $0x20] sm:$0xf]
      %v513 = vld [vmem:[%s503 + $0x24] sm:$0xf]
      %v514 = vld [vmem:[%s503 + $0x28] sm:$0xf]
      %v515 = vld [vmem:[%s503 + $0x2c] sm:$0xf]
      %v516 = vld [vmem:[%s503 + $0x30] sm:$0xf]
      %v517 = vld [vmem:[%s503 + $0x34] sm:$0xf]
      %v518 = vld [vmem:[%s503 + $0x38] sm:$0xf]
      %v519 = vld [vmem:[%s503 + $0x3c] sm:$0xf]
      %v521 = vunpack.c.l.b16 %v502
      %v522 = vpack.c.b16 %v521, %v521
      %v523 = vrot.slane %v522, 1
      %v541 = vunpack.c.l.b16 %v504
      %v542 = vunpack.c.l.b16 %v505
      %v543 = vunpack.c.l.b16 %v506
      %v544 = vunpack.c.l.b16 %v507
      %v545 = vunpack.c.l.b16 %v508
      %v546 = vunpack.c.l.b16 %v509
      %v547 = vunpack.c.l.b16 %v510
      %v548 = vunpack.c.l.b16 %v511
      %v549 = vunpack.c.l.b16 %v512
      %v550 = vunpack.c.l.b16 %v513
      %v551 = vunpack.c.l.b16 %v514
      %v552 = vunpack.c.l.b16 %v515
      %v553 = vunpack.c.l.b16 %v516
      %v554 = vunpack.c.l.b16 %v517
      %v555 = vunpack.c.l.b16 %v518
      %v556 = vunpack.c.l.b16 %v519
      %v557 = vpack.c.b16 %v542, %v541
      %v558 = vpack.c.b16 %v544, %v543
      %v559 = vpack.c.b16 %v546, %v545
      %v560 = vpack.c.b16 %v548, %v547
      %v561 = vpack.c.b16 %v550, %v549
      %v562 = vpack.c.b16 %v552, %v551
      %v563 = vpack.c.b16 %v554, %v553
      %v564 = vpack.c.b16 %v556, %v555
      %573 = vmatprep.subr.bf16.mxu0 0
      %574 = vmatpush1.bf16.msra.mxu0 %v557
      %575 = vmatprep.subr.bf16.mxu0 0
      %576 = vmatpush1.bf16.msra.mxu0 %v558
      %577 = vmatprep.subr.bf16.mxu0 0
      %578 = vmatpush1.bf16.msra.mxu0 %v559
      %579 = vmatprep.subr.bf16.mxu0 0
      %580 = vmatpush1.bf16.msra.mxu0 %v560
      %581 = vmatprep.subr.bf16.mxu0 0
      %582 = vmatpush1.bf16.msra.mxu0 %v561
      %583 = vmatprep.subr.bf16.mxu0 0
      %584 = vmatpush1.bf16.msra.mxu0 %v562
      %585 = vmatprep.subr.bf16.mxu0 0
      %586 = vmatpush1.bf16.msra.mxu0 %v563
      %587 = vmatprep.subr.bf16.mxu0 0
      %588 = vmatpush1.bf16.msra.mxu0 %v564
      %589 = vmatprep.subr.bf16.mxu0 0
      %590 = vmatpush1.bf16.msra.mxu0 0
      %591 = vmatprep.subr.bf16.mxu0 0
      %592 = vmatpush1.bf16.msra.mxu0 0
      %593 = vmatprep.subr.bf16.mxu0 0
      %594 = vmatpush1.bf16.msra.mxu0 0
      %595 = vmatprep.subr.bf16.mxu0 0
      %596 = vmatpush1.bf16.msra.mxu0 0
      %597 = vmatprep.subr.bf16.mxu0 0
      %598 = vmatpush1.bf16.msra.mxu0 0
      %599 = vmatprep.subr.bf16.mxu0 0
      %600 = vmatpush1.bf16.msra.mxu0 0
      %601 = vmatprep.subr.bf16.mxu0 0
      %602 = vmatpush1.bf16.msra.mxu0 0
      %603 = vmatprep.subr.bf16.mxu0 0
      %604 = vmatpush1.bf16.msra.mxu0 0
      %605 = vmatprep.mubr.bf16.mxu0 0
      %606 = vmatmul.mubr.bf16.gmra.mrb[0].mxu0 %v523
      %v607 = vpop.f32.mrb[0].mxu0
      %v608 = vadd.f32 0.0, %v607
      %v609 = vpop.f32.mrb[0].mxu0
      %v610 = vpop.f32.mrb[0].mxu0
      %v611 = vpop.f32.mrb[0].mxu0
      %612 = vdwg.mxu0
      %v613 = vadd.f32 %v497, %v608
      %v614 = vld [vmem:[%s2] sm:$0x1]
      %v616 = vlaneseq
      %v617 = vshrl.u32 %v616, 7
      %v618 = vsub.s32 0, %v617
      %v619 = vrot.slane %v614, %v618
      %v621 = vmul.f32 %v613, %v619
      %v622 = vld [vmem:[%s3] sm:$0x1]
      %v624 = vlaneseq
      %v625 = vshrl.u32 %v624, 7
      %v626 = vsub.s32 0, %v625
      %v627 = vrot.slane %v622, %v626
      %v629 = vadd.f32 %v621, %v627
      %v630 = vld [vmem:[%s271] sm:$0x3]
      %v631 = vunpack.c.l.bf16 %v630
      %v632 = vadd.f32 %v629, %v631
      %v633 = vmax.f32 %v632, 0.0
      %v634 = vpack.c.bf16 %v633, %v633
      %635 = vst [vmem:[%s278] sm:$0x3] %v634
      %p636 = scmp.lt.s32.totalorder %s20, 1
      %s637 = scalar_select %p636, %s20, 1
      %p638 = scmp.lt.s32.totalorder %s21, 0
      %s639 = scalar_select %p638, %s21, 0
      %s640 = sadd.s32 %s639, %s637
      %s641 = smul.addr %s640, 2
      %s642 = scalar_lea.vmem %s5, %s641
      // Predicated region
      $region41: #{cnn_1d_forward.16} parent=39 // pred_check
        %p643 = pneg %p167
      $region42: #{cnn_1d_forward.16} parent=39 // pred_check_branch
        %645 = sbr.rel (%p643) target = $region44
      $region43: #{cnn_1d_forward.16} parent=39 // pred_region
        _
      $region44: #{cnn_1d_forward.16} parent=39 // pred_fallthru
        _
    $region40: #{cnn_1d_forward.16} parent=5 // pred_fallthru
      _
    %p646 = scmp.le.s32.totalorder 2, %s11
    // Predicated region
    $region45: #{cnn_1d_forward.16} parent=5 // pred_check
      %p647 = pneg %p646
    $region46: #{cnn_1d_forward.16} parent=5 // pred_check_branch
      %649 = sbr.rel (%p647) target = $region48
    $region47: #{cnn_1d_forward.16} parent=5 // pred_region
      %s650 = ssub.s32 %s11, 2
      // Predicated region
      $region49: #{cnn_1d_forward.16} parent=47 // pred_check
        %p651 = pneg %p173
      $region50: #{cnn_1d_forward.16} parent=47 // pred_check_branch
        %653 = sbr.rel (%p651) target = $region52
      $region51: #{cnn_1d_forward.16} parent=47 // pred_region
        %p654 = scmp.lt.s32.totalorder %s22, 1
        %s655 = scalar_select %p654, %s22, 1
        %p656 = scmp.lt.s32.totalorder %s23, 0
        %s657 = scalar_select %p656, %s23, 0
        %s658 = sadd.s32 %s657, %s655
        %s659 = smul.addr %s658, 2
        %s660 = scalar_lea.vmem %s5, %s659
      $region52: #{cnn_1d_forward.16} parent=47 // pred_fallthru
        _
    $region48: #{cnn_1d_forward.16} parent=5 // pred_fallthru
      _
  $region6: #{cnn_1d_forward.16} parent=0 // loop_footer
    %s15 = sadd.s32 1, %s11
  $region7: #{cnn_1d_forward.16} parent=0 // loop_footer_branch
    %10 = sbr.rel target = $region3
  $region8: #{cnn_1d_forward.16} parent=0 // loop_exit
    _

</llo_original>
